<compile_context>
chip_gen: v7x
topology: tpu7x:2x2x1
jax: 0.10.0
libtpu: 0.0.40
codegen_flags: <defaults>
</compile_context>

<pallas_src>
import functools

import jax
import jax.numpy as jnp
import numpy as np
from jax.experimental import pallas as pl
from jax.experimental.pallas import tpu as pltpu


def _round_up(x, m):
    return ((x + m - 1) // m) * m


def _pick_tile_m(m, target=512):
    # Largest tile <= target that evenly divides m (avoids ragged edge blocks).
    for t in (512, 256, 128, 64, 32, 16, 8, 4, 2, 1):
        if t <= target and t <= m and m % t == 0:
            return t
    return m


def _conv_upsample_kernel(xp_ref, w_ref, b_ref, y_ref, st_ref, *, H, W, Cin, Cp, outermost):
    """Per-image fused (nearest x2 upsample along H) + 3x3 conv.

    xp_ref: (1, H+2, W+2, Cin)   spatially padded source image (compute dtype)
    w_ref : (4, 3, Cin, Cp)      row-combined weights [W0, W1+W2, W0+W1, W2] per kw tap
    b_ref : (1, Cp)              conv bias (only used on the sigmoid branch)
    y_ref : (2, 1, H, W, Cp)     f32 conv output; dim0 = even/odd upsampled-row parity
    st_ref: (1, 2, Cp)           f32 per-image (sum, sumsq) partials over this image's rows
    """
    f32 = jnp.float32
    acc_e = jnp.zeros((H * W, Cp), f32)   # even output rows 2h
    acc_o = jnp.zeros((H * W, Cp), f32)   # odd  output rows 2h+1
    for kw in range(3):
        # kw tap: output col w reads padded col w+kw  ->  contiguous slice [kw : kw+W].
        top = xp_ref[0, 0:H,     kw:kw + W, :].reshape(H * W, Cin)  # src row h-1 (zero pad @ h=0)
        ctr = xp_ref[0, 1:H + 1, kw:kw + W, :].reshape(H * W, Cin)  # src row h
        bot = xp_ref[0, 2:H + 2, kw:kw + W, :].reshape(H * W, Cin)  # src row h+1 (zero pad @ h=H-1)
        acc_e = acc_e + jnp.dot(top, w_ref[0, kw], preferred_element_type=f32)
        acc_e = acc_e + jnp.dot(ctr, w_ref[1, kw], preferred_element_type=f32)
        acc_o = acc_o + jnp.dot(ctr, w_ref[2, kw], preferred_element_type=f32)
        acc_o = acc_o + jnp.dot(bot, w_ref[3, kw], preferred_element_type=f32)

    if outermost:
        b = b_ref[...]
        ye = jax.nn.sigmoid(acc_e + b)
        yo = jax.nn.sigmoid(acc_o + b)
        st_ref[...] = jnp.zeros(st_ref.shape, st_ref.dtype)   # stats unused on this branch
    else:
        # Conv bias omitted: a per-channel constant cancels exactly under train-mode BatchNorm.
        ye, yo = acc_e, acc_o
        s_sum = jnp.sum(ye, axis=0, keepdims=True) + jnp.sum(yo, axis=0, keepdims=True)
        s_sq = jnp.sum(ye * ye, axis=0, keepdims=True) + jnp.sum(yo * yo, axis=0, keepdims=True)
        st_ref[0, 0:1, :] = s_sum
        st_ref[0, 1:2, :] = s_sq

    y_ref[0, 0] = ye.reshape(H, W, Cp)
    y_ref[1, 0] = yo.reshape(H, W, Cp)


def _bn_relu_kernel(y_ref, scale_ref, shift_ref, o_ref):
    # Lane-dense (tile_M, Cp) elementwise BN apply + ReLU.
    o_ref[...] = jnp.maximum(y_ref[...] * scale_ref[...] + shift_ref[...], 0.0)


def up_conv_pallas(x_nchw, conv_w, conv_b, bn_gamma, bn_beta, *, outermost=False,
                   eps=1e-5, compute_dtype=jnp.bfloat16):
    """x_nchw: (N, Cin, H, W). conv_w: (Cout, Cin, 3, 3) OIHW. Returns NCHW (N, Cout, 2H, W)."""
    N, Cin, H, W = x_nchw.shape
    Cout = conv_w.shape[0]
    H2 = 2 * H
    Cp = _round_up(Cout, 128)          # lane-dense channel dim inside the kernels
    M = N * H2 * W

    # ---- layout-only glue: NHWC + one spatial pad (no upsample / im2col materialization) ----
    x = jnp.transpose(x_nchw, (0, 2, 3, 1)).astype(compute_dtype)       # NCHW -> NHWC
    xp = jnp.pad(x, ((0, 0), (1, 1), (1, 1), (0, 0)))                    # conv padding=1, once

    # OIHW -> (kh, kw, Cin, Cout); fold the x2-nearest row duplication into the weights:
    #   even output row 2h   = W0 @ src[h-1] + (W1+W2) @ src[h]
    #   odd  output row 2h+1 = (W0+W1) @ src[h] + W2 @ src[h+1]
    w = jnp.transpose(conv_w, (2, 3, 1, 0)).astype(jnp.float32)          # (3, 3, Cin, Cout)
    w_comb = jnp.stack([w[0], w[1] + w[2], w[0] + w[1], w[2]], axis=0)    # (4, 3, Cin, Cout)
    w_comb = jnp.pad(w_comb, ((0, 0), (0, 0), (0, 0), (0, Cp - Cout))).astype(compute_dtype)
    b_p = jnp.pad(conv_b.astype(jnp.float32), (0, Cp - Cout)).reshape(1, Cp)

    # ---- pass 1: fused upsample + conv (+ sigmoid / BN partial stats), tiled over batch ----
    # TODO(synk): for very large images also tile H inside pass 1 (needs a 1-row halo per tile,
    # e.g. via a halo'd input layout or a manual-DMA inner pipeline).
    kernel1 = functools.partial(_conv_upsample_kernel, H=H, W=W, Cin=Cin, Cp=Cp,
                                outermost=outermost)
    y, stats = pl.pallas_call(
        kernel1,
        grid=(N,),
        in_specs=[
            pl.BlockSpec((1, H + 2, W + 2, Cin), lambda n: (n, 0, 0, 0)),
            pl.BlockSpec((4, 3, Cin, Cp), lambda n: (0, 0, 0, 0)),   # weights stay resident
            pl.BlockSpec((1, Cp), lambda n: (0, 0)),
        ],
        out_specs=[
            pl.BlockSpec((2, 1, H, W, Cp), lambda n: (0, n, 0, 0, 0)),
            pl.BlockSpec((1, 2, Cp), lambda n: (n, 0, 0)),
        ],
        out_shape=[
            jax.ShapeDtypeStruct((2, N, H, W, Cp), jnp.float32),
            jax.ShapeDtypeStruct((N, 2, Cp), jnp.float32),
        ],
        compiler_params=pltpu.CompilerParams(
            dimension_semantics=("parallel",),
            vmem_limit_bytes=48 * 1024 * 1024,      # v7x-safe (64 MiB physical VMEM)
        ),
        cost_estimate=pl.CostEstimate(
            flops=2 * M * 9 * Cin * Cout,
            transcendentals=(M * Cout) if outermost else 0,
            bytes_accessed=(xp.size * xp.dtype.itemsize
                            + w_comb.size * w_comb.dtype.itemsize
                            + 2 * N * H * W * Cp * 4),
        ),
    )(xp, w_comb, b_p)

    if outermost:
        out = y                                         # sigmoid already applied in-kernel
    else:
        # ---- tiny per-channel reduction of (N, 2, Cp) partials -> global BN scale/shift ----
        tot = jnp.sum(stats, axis=0)                    # (2, Cp)
        mean = tot[0] / jnp.float32(M)
        var = jnp.maximum(tot[1] / jnp.float32(M) - mean * mean, 0.0)   # biased, as in torch BN
        gamma_p = jnp.pad(bn_gamma.astype(jnp.float32), (0, Cp - Cout))
        beta_p = jnp.pad(bn_beta.astype(jnp.float32), (0, Cp - Cout))
        scale_v = gamma_p * jax.lax.rsqrt(var + eps)
        shift_v = beta_p - mean * scale_v
        scale = scale_v.reshape(1, Cp)
        shift = shift_v.reshape(1, Cp)

        # ---- pass 2: lane-dense BN + ReLU, tiled & pipelined over M rows ----
        y2 = y.reshape(M, Cp)                           # free row-major collapse
        tm = _pick_tile_m(M)
        out2 = pl.pallas_call(
            _bn_relu_kernel,
            grid=(M // tm,),
            in_specs=[
                pl.BlockSpec((tm, Cp), lambda i: (i, 0)),
                pl.BlockSpec((1, Cp), lambda i: (0, 0)),
                pl.BlockSpec((1, Cp), lambda i: (0, 0)),
            ],
            out_specs=pl.BlockSpec((tm, Cp), lambda i: (i, 0)),
            out_shape=jax.ShapeDtypeStruct((M, Cp), jnp.float32),
            compiler_params=pltpu.CompilerParams(
                dimension_semantics=("parallel",),
                vmem_limit_bytes=48 * 1024 * 1024,
            ),
            cost_estimate=pl.CostEstimate(
                flops=2 * M * Cp, transcendentals=0, bytes_accessed=2 * M * Cp * 4),
        )(y2, scale, shift)
        out = out2.reshape(2, N, H, W, Cp)

    # (parity, N, H, W, Cp) -> (N, Cout, 2H, W): interleave parity into H, back to NCHW.
    out = out[..., :Cout]
    out = jnp.transpose(out, (1, 4, 2, 0, 3)).reshape(N, Cout, H2, W)
    return out.astype(x_nchw.dtype)


def up_conv_reference(x_nchw, conv_w, conv_b, bn_gamma, bn_beta, *, outermost=False, eps=1e-5):
    """Plain-JAX f32 reference with the module's forward semantics (train-mode BatchNorm)."""
    xu = jnp.repeat(x_nchw, 2, axis=2)
    y = jax.lax.conv_general_dilated(
        xu, conv_w, window_strides=(1, 1), padding=((1, 1), (1, 1)),
        dimension_numbers=("NCHW", "OIHW", "NCHW"),
    ) + conv_b[None, :, None, None]
    if outermost:
        return jax.nn.sigmoid(y)
    mean = y.mean(axis=(0, 2, 3), keepdims=True)
    var = ((y - mean) ** 2).mean(axis=(0, 2, 3), keepdims=True)
    yhat = (y - mean) / jnp.sqrt(var + eps)
    return jnp.maximum(bn_gamma[None, :, None, None] * yhat + bn_beta[None, :, None, None], 0.0)


if __name__ == "__main__":
    key = jax.random.PRNGKey(0)
    k_x, k_w, k_b, k_g, k_be = jax.random.split(key, 5)

    N, Cin, Cout, H, W = 2, 4, 8, 16, 16
    x = jax.random.normal(k_x, (N, Cin, H, W), dtype=jnp.float32)

    # deterministic synthetic parameters (shapes per nn.Conv2d / nn.BatchNorm2d)
    conv_w = 0.1 * jax.random.normal(k_w, (Cout, Cin, 3, 3), dtype=jnp.float32)
    conv_b = 0.1 * jax.random.normal(k_b, (Cout,), dtype=jnp.float32)
    bn_gamma = 1.0 + 0.1 * jax.random.normal(k_g, (Cout,), dtype=jnp.float32)
    bn_beta = 0.1 * jax.random.normal(k_be, (Cout,), dtype=jnp.float32)

    ref = up_conv_reference(x, conv_w, conv_b, bn_gamma, bn_beta, outermost=False)

    # bf16 MXU path (production default on v6e/v7x); loose tolerance covers bf16 rounding.
    fn_bf16 = jax.jit(functools.partial(up_conv_pallas, outermost=False,
                                        compute_dtype=jnp.bfloat16))
    out_bf16 = jax.block_until_ready(fn_bf16(x, conv_w, conv_b, bn_gamma, bn_beta))
    assert out_bf16.shape == (N, Cout, 2 * H, W)
    np.testing.assert_allclose(np.asarray(out_bf16), np.asarray(ref), rtol=5e-2, atol=5e-2)

    # f32 path: tight numerical check of the kernel structure (upsample folding, taps, BN).
    fn_f32 = jax.jit(functools.partial(up_conv_pallas, outermost=False,
                                       compute_dtype=jnp.float32))
    out_f32 = jax.block_until_ready(fn_f32(x, conv_w, conv_b, bn_gamma, bn_beta))
    np.testing.assert_allclose(np.asarray(out_f32), np.asarray(ref), rtol=1e-3, atol=1e-3)

    # outermost=True branch (upsample -> conv(+bias) -> sigmoid), f32 tight check.
    fn_sig = jax.jit(functools.partial(up_conv_pallas, outermost=True,
                                       compute_dtype=jnp.float32))
    out_sig = jax.block_until_ready(fn_sig(x, conv_w, conv_b, bn_gamma, bn_beta))
    ref_sig = up_conv_reference(x, conv_w, conv_b, bn_gamma, bn_beta, outermost=True)
    np.testing.assert_allclose(np.asarray(out_sig), np.asarray(ref_sig), rtol=1e-4, atol=1e-4)

    print("KERNEL_OK")
</pallas_src>

<mosaic_0001>
module attributes {stable_mosaic.version = 11 : i64} {
  func.func @_conv_upsample_kernel(%arg0: i32, %arg1: memref<1x18x18x4xbf16, #tpu.memory_space<vmem>>, %arg2: memref<4x3x4x128xbf16, #tpu.memory_space<vmem>>, %arg3: memref<1x128xf32, #tpu.memory_space<vmem>>, %arg4: memref<2x1x16x16x128xf32, #tpu.memory_space<vmem>>, %arg5: memref<1x2x128xf32, #tpu.memory_space<vmem>>) attributes {dimension_semantics = [#tpu.dimension_semantics<parallel>], iteration_bounds = array<i64: 2>, scalar_prefetch = 0 : i64, scratch_operands = 0 : i64, tpu.core_type = #tpu.core_type<tc>, window_params = [{transform_indices = @transform_0, window_bounds = array<i64: 1, 18, 18, 4>}, {pipeline_mode = #tpu.pipeline_mode<synchronous>, transform_indices = @transform_1, window_bounds = array<i64: 4, 3, 4, 128>}, {pipeline_mode = #tpu.pipeline_mode<synchronous>, transform_indices = @transform_2, window_bounds = array<i64: 1, 128>}, {transform_indices = @transform_3, window_bounds = array<i64: 2, 1, 16, 16, 128>}, {transform_indices = @transform_4, window_bounds = array<i64: 1, 2, 128>}]} {
    %cst = arith.constant 0.000000e+00 : f32
    %0 = vector.broadcast %cst : f32 to vector<256x128xf32>
    %cst_0 = arith.constant 0.000000e+00 : f32
    %1 = vector.broadcast %cst_0 : f32 to vector<256x128xf32>
    %c0 = arith.constant 0 : index
    %c0_1 = arith.constant 0 : index
    %c0_2 = arith.constant 0 : index
    %c0_3 = arith.constant 0 : index
    %2 = vector.load %arg1[%c0, %c0_1, %c0_2, %c0_3] : memref<1x18x18x4xbf16, #tpu.memory_space<vmem>>, vector<1x16x16x4xbf16>
    %3 = vector.shape_cast %2 : vector<1x16x16x4xbf16> to vector<16x16x4xbf16>
    %4 = vector.shape_cast %3 : vector<16x16x4xbf16> to vector<256x4xbf16>
    %c0_4 = arith.constant 0 : index
    %c1 = arith.constant 1 : index
    %c0_5 = arith.constant 0 : index
    %c0_6 = arith.constant 0 : index
    %5 = vector.load %arg1[%c0_4, %c1, %c0_5, %c0_6] : memref<1x18x18x4xbf16, #tpu.memory_space<vmem>>, vector<1x16x16x4xbf16>
    %6 = vector.shape_cast %5 : vector<1x16x16x4xbf16> to vector<16x16x4xbf16>
    %7 = vector.shape_cast %6 : vector<16x16x4xbf16> to vector<256x4xbf16>
    %c0_7 = arith.constant 0 : index
    %c2 = arith.constant 2 : index
    %c0_8 = arith.constant 0 : index
    %c0_9 = arith.constant 0 : index
    %8 = vector.load %arg1[%c0_7, %c2, %c0_8, %c0_9] : memref<1x18x18x4xbf16, #tpu.memory_space<vmem>>, vector<1x16x16x4xbf16>
    %9 = vector.shape_cast %8 : vector<1x16x16x4xbf16> to vector<16x16x4xbf16>
    %10 = vector.shape_cast %9 : vector<16x16x4xbf16> to vector<256x4xbf16>
    %c0_10 = arith.constant 0 : index
    %c0_11 = arith.constant 0 : index
    %c0_12 = arith.constant 0 : index
    %c0_13 = arith.constant 0 : index
    %11 = vector.load %arg2[%c0_10, %c0_11, %c0_12, %c0_13] : memref<4x3x4x128xbf16, #tpu.memory_space<vmem>>, vector<1x1x4x128xbf16>
    %12 = vector.shape_cast %11 : vector<1x1x4x128xbf16> to vector<4x128xbf16>
    %cst_14 = arith.constant dense<0.000000e+00> : vector<256x128xf32>
    %13 = tpu.matmul %4, %12, %cst_14 {dimension_numbers = #tpu.dot_dimension_numbers<[1], [0], [0], [1], [0, 0, 1, 1], [], []>} : vector<256x4xbf16>, vector<4x128xbf16>, vector<256x128xf32> -> vector<256x128xf32>
    %14 = arith.addf %0, %13 : vector<256x128xf32>
    %c1_15 = arith.constant 1 : index
    %c0_16 = arith.constant 0 : index
    %c0_17 = arith.constant 0 : index
    %c0_18 = arith.constant 0 : index
    %15 = vector.load %arg2[%c1_15, %c0_16, %c0_17, %c0_18] : memref<4x3x4x128xbf16, #tpu.memory_space<vmem>>, vector<1x1x4x128xbf16>
    %16 = vector.shape_cast %15 : vector<1x1x4x128xbf16> to vector<4x128xbf16>
    %cst_19 = arith.constant dense<0.000000e+00> : vector<256x128xf32>
    %17 = tpu.matmul %7, %16, %cst_19 {dimension_numbers = #tpu.dot_dimension_numbers<[1], [0], [0], [1], [0, 0, 1, 1], [], []>} : vector<256x4xbf16>, vector<4x128xbf16>, vector<256x128xf32> -> vector<256x128xf32>
    %18 = arith.addf %14, %17 : vector<256x128xf32>
    %c2_20 = arith.constant 2 : index
    %c0_21 = arith.constant 0 : index
    %c0_22 = arith.constant 0 : index
    %c0_23 = arith.constant 0 : index
    %19 = vector.load %arg2[%c2_20, %c0_21, %c0_22, %c0_23] : memref<4x3x4x128xbf16, #tpu.memory_space<vmem>>, vector<1x1x4x128xbf16>
    %20 = vector.shape_cast %19 : vector<1x1x4x128xbf16> to vector<4x128xbf16>
    %cst_24 = arith.constant dense<0.000000e+00> : vector<256x128xf32>
    %21 = tpu.matmul %7, %20, %cst_24 {dimension_numbers = #tpu.dot_dimension_numbers<[1], [0], [0], [1], [0, 0, 1, 1], [], []>} : vector<256x4xbf16>, vector<4x128xbf16>, vector<256x128xf32> -> vector<256x128xf32>
    %22 = arith.addf %1, %21 : vector<256x128xf32>
    %c3 = arith.constant 3 : index
    %c0_25 = arith.constant 0 : index
    %c0_26 = arith.constant 0 : index
    %c0_27 = arith.constant 0 : index
    %23 = vector.load %arg2[%c3, %c0_25, %c0_26, %c0_27] : memref<4x3x4x128xbf16, #tpu.memory_space<vmem>>, vector<1x1x4x128xbf16>
    %24 = vector.shape_cast %23 : vector<1x1x4x128xbf16> to vector<4x128xbf16>
    %cst_28 = arith.constant dense<0.000000e+00> : vector<256x128xf32>
    %25 = tpu.matmul %10, %24, %cst_28 {dimension_numbers = #tpu.dot_dimension_numbers<[1], [0], [0], [1], [0, 0, 1, 1], [], []>} : vector<256x4xbf16>, vector<4x128xbf16>, vector<256x128xf32> -> vector<256x128xf32>
    %26 = arith.addf %22, %25 : vector<256x128xf32>
    %c0_29 = arith.constant 0 : index
    %c0_30 = arith.constant 0 : index
    %c1_31 = arith.constant 1 : index
    %c0_32 = arith.constant 0 : index
    %27 = vector.load %arg1[%c0_29, %c0_30, %c1_31, %c0_32] : memref<1x18x18x4xbf16, #tpu.memory_space<vmem>>, vector<1x16x16x4xbf16>
    %28 = vector.shape_cast %27 : vector<1x16x16x4xbf16> to vector<16x16x4xbf16>
    %29 = vector.shape_cast %28 : vector<16x16x4xbf16> to vector<256x4xbf16>
    %c0_33 = arith.constant 0 : index
    %c1_34 = arith.constant 1 : index
    %c1_35 = arith.constant 1 : index
    %c0_36 = arith.constant 0 : index
    %30 = vector.load %arg1[%c0_33, %c1_34, %c1_35, %c0_36] : memref<1x18x18x4xbf16, #tpu.memory_space<vmem>>, vector<1x16x16x4xbf16>
    %31 = vector.shape_cast %30 : vector<1x16x16x4xbf16> to vector<16x16x4xbf16>
    %32 = vector.shape_cast %31 : vector<16x16x4xbf16> to vector<256x4xbf16>
    %c0_37 = arith.constant 0 : index
    %c2_38 = arith.constant 2 : index
    %c1_39 = arith.constant 1 : index
    %c0_40 = arith.constant 0 : index
    %33 = vector.load %arg1[%c0_37, %c2_38, %c1_39, %c0_40] : memref<1x18x18x4xbf16, #tpu.memory_space<vmem>>, vector<1x16x16x4xbf16>
    %34 = vector.shape_cast %33 : vector<1x16x16x4xbf16> to vector<16x16x4xbf16>
    %35 = vector.shape_cast %34 : vector<16x16x4xbf16> to vector<256x4xbf16>
    %c0_41 = arith.constant 0 : index
    %c1_42 = arith.constant 1 : index
    %c0_43 = arith.constant 0 : index
    %c0_44 = arith.constant 0 : index
    %36 = vector.load %arg2[%c0_41, %c1_42, %c0_43, %c0_44] : memref<4x3x4x128xbf16, #tpu.memory_space<vmem>>, vector<1x1x4x128xbf16>
    %37 = vector.shape_cast %36 : vector<1x1x4x128xbf16> to vector<4x128xbf16>
    %cst_45 = arith.constant dense<0.000000e+00> : vector<256x128xf32>
    %38 = tpu.matmul %29, %37, %cst_45 {dimension_numbers = #tpu.dot_dimension_numbers<[1], [0], [0], [1], [0, 0, 1, 1], [], []>} : vector<256x4xbf16>, vector<4x128xbf16>, vector<256x128xf32> -> vector<256x128xf32>
    %39 = arith.addf %18, %38 : vector<256x128xf32>
    %c1_46 = arith.constant 1 : index
    %c1_47 = arith.constant 1 : index
    %c0_48 = arith.constant 0 : index
    %c0_49 = arith.constant 0 : index
    %40 = vector.load %arg2[%c1_46, %c1_47, %c0_48, %c0_49] : memref<4x3x4x128xbf16, #tpu.memory_space<vmem>>, vector<1x1x4x128xbf16>
    %41 = vector.shape_cast %40 : vector<1x1x4x128xbf16> to vector<4x128xbf16>
    %cst_50 = arith.constant dense<0.000000e+00> : vector<256x128xf32>
    %42 = tpu.matmul %32, %41, %cst_50 {dimension_numbers = #tpu.dot_dimension_numbers<[1], [0], [0], [1], [0, 0, 1, 1], [], []>} : vector<256x4xbf16>, vector<4x128xbf16>, vector<256x128xf32> -> vector<256x128xf32>
    %43 = arith.addf %39, %42 : vector<256x128xf32>
    %c2_51 = arith.constant 2 : index
    %c1_52 = arith.constant 1 : index
    %c0_53 = arith.constant 0 : index
    %c0_54 = arith.constant 0 : index
    %44 = vector.load %arg2[%c2_51, %c1_52, %c0_53, %c0_54] : memref<4x3x4x128xbf16, #tpu.memory_space<vmem>>, vector<1x1x4x128xbf16>
    %45 = vector.shape_cast %44 : vector<1x1x4x128xbf16> to vector<4x128xbf16>
    %cst_55 = arith.constant dense<0.000000e+00> : vector<256x128xf32>
    %46 = tpu.matmul %32, %45, %cst_55 {dimension_numbers = #tpu.dot_dimension_numbers<[1], [0], [0], [1], [0, 0, 1, 1], [], []>} : vector<256x4xbf16>, vector<4x128xbf16>, vector<256x128xf32> -> vector<256x128xf32>
    %47 = arith.addf %26, %46 : vector<256x128xf32>
    %c3_56 = arith.constant 3 : index
    %c1_57 = arith.constant 1 : index
    %c0_58 = arith.constant 0 : index
    %c0_59 = arith.constant 0 : index
    %48 = vector.load %arg2[%c3_56, %c1_57, %c0_58, %c0_59] : memref<4x3x4x128xbf16, #tpu.memory_space<vmem>>, vector<1x1x4x128xbf16>
    %49 = vector.shape_cast %48 : vector<1x1x4x128xbf16> to vector<4x128xbf16>
    %cst_60 = arith.constant dense<0.000000e+00> : vector<256x128xf32>
    %50 = tpu.matmul %35, %49, %cst_60 {dimension_numbers = #tpu.dot_dimension_numbers<[1], [0], [0], [1], [0, 0, 1, 1], [], []>} : vector<256x4xbf16>, vector<4x128xbf16>, vector<256x128xf32> -> vector<256x128xf32>
    %51 = arith.addf %47, %50 : vector<256x128xf32>
    %c0_61 = arith.constant 0 : index
    %c0_62 = arith.constant 0 : index
    %c2_63 = arith.constant 2 : index
    %c0_64 = arith.constant 0 : index
    %52 = vector.load %arg1[%c0_61, %c0_62, %c2_63, %c0_64] : memref<1x18x18x4xbf16, #tpu.memory_space<vmem>>, vector<1x16x16x4xbf16>
    %53 = vector.shape_cast %52 : vector<1x16x16x4xbf16> to vector<16x16x4xbf16>
    %54 = vector.shape_cast %53 : vector<16x16x4xbf16> to vector<256x4xbf16>
    %c0_65 = arith.constant 0 : index
    %c1_66 = arith.constant 1 : index
    %c2_67 = arith.constant 2 : index
    %c0_68 = arith.constant 0 : index
    %55 = vector.load %arg1[%c0_65, %c1_66, %c2_67, %c0_68] : memref<1x18x18x4xbf16, #tpu.memory_space<vmem>>, vector<1x16x16x4xbf16>
    %56 = vector.shape_cast %55 : vector<1x16x16x4xbf16> to vector<16x16x4xbf16>
    %57 = vector.shape_cast %56 : vector<16x16x4xbf16> to vector<256x4xbf16>
    %c0_69 = arith.constant 0 : index
    %c2_70 = arith.constant 2 : index
    %c2_71 = arith.constant 2 : index
    %c0_72 = arith.constant 0 : index
    %58 = vector.load %arg1[%c0_69, %c2_70, %c2_71, %c0_72] : memref<1x18x18x4xbf16, #tpu.memory_space<vmem>>, vector<1x16x16x4xbf16>
    %59 = vector.shape_cast %58 : vector<1x16x16x4xbf16> to vector<16x16x4xbf16>
    %60 = vector.shape_cast %59 : vector<16x16x4xbf16> to vector<256x4xbf16>
    %c0_73 = arith.constant 0 : index
    %c2_74 = arith.constant 2 : index
    %c0_75 = arith.constant 0 : index
    %c0_76 = arith.constant 0 : index
    %61 = vector.load %arg2[%c0_73, %c2_74, %c0_75, %c0_76] : memref<4x3x4x128xbf16, #tpu.memory_space<vmem>>, vector<1x1x4x128xbf16>
    %62 = vector.shape_cast %61 : vector<1x1x4x128xbf16> to vector<4x128xbf16>
    %cst_77 = arith.constant dense<0.000000e+00> : vector<256x128xf32>
    %63 = tpu.matmul %54, %62, %cst_77 {dimension_numbers = #tpu.dot_dimension_numbers<[1], [0], [0], [1], [0, 0, 1, 1], [], []>} : vector<256x4xbf16>, vector<4x128xbf16>, vector<256x128xf32> -> vector<256x128xf32>
    %64 = arith.addf %43, %63 : vector<256x128xf32>
    %c1_78 = arith.constant 1 : index
    %c2_79 = arith.constant 2 : index
    %c0_80 = arith.constant 0 : index
    %c0_81 = arith.constant 0 : index
    %65 = vector.load %arg2[%c1_78, %c2_79, %c0_80, %c0_81] : memref<4x3x4x128xbf16, #tpu.memory_space<vmem>>, vector<1x1x4x128xbf16>
    %66 = vector.shape_cast %65 : vector<1x1x4x128xbf16> to vector<4x128xbf16>
    %cst_82 = arith.constant dense<0.000000e+00> : vector<256x128xf32>
    %67 = tpu.matmul %57, %66, %cst_82 {dimension_numbers = #tpu.dot_dimension_numbers<[1], [0], [0], [1], [0, 0, 1, 1], [], []>} : vector<256x4xbf16>, vector<4x128xbf16>, vector<256x128xf32> -> vector<256x128xf32>
    %68 = arith.addf %64, %67 : vector<256x128xf32>
    %c2_83 = arith.constant 2 : index
    %c2_84 = arith.constant 2 : index
    %c0_85 = arith.constant 0 : index
    %c0_86 = arith.constant 0 : index
    %69 = vector.load %arg2[%c2_83, %c2_84, %c0_85, %c0_86] : memref<4x3x4x128xbf16, #tpu.memory_space<vmem>>, vector<1x1x4x128xbf16>
    %70 = vector.shape_cast %69 : vector<1x1x4x128xbf16> to vector<4x128xbf16>
    %cst_87 = arith.constant dense<0.000000e+00> : vector<256x128xf32>
    %71 = tpu.matmul %57, %70, %cst_87 {dimension_numbers = #tpu.dot_dimension_numbers<[1], [0], [0], [1], [0, 0, 1, 1], [], []>} : vector<256x4xbf16>, vector<4x128xbf16>, vector<256x128xf32> -> vector<256x128xf32>
    %72 = arith.addf %51, %71 : vector<256x128xf32>
    %c3_88 = arith.constant 3 : index
    %c2_89 = arith.constant 2 : index
    %c0_90 = arith.constant 0 : index
    %c0_91 = arith.constant 0 : index
    %73 = vector.load %arg2[%c3_88, %c2_89, %c0_90, %c0_91] : memref<4x3x4x128xbf16, #tpu.memory_space<vmem>>, vector<1x1x4x128xbf16>
    %74 = vector.shape_cast %73 : vector<1x1x4x128xbf16> to vector<4x128xbf16>
    %cst_92 = arith.constant dense<0.000000e+00> : vector<256x128xf32>
    %75 = tpu.matmul %60, %74, %cst_92 {dimension_numbers = #tpu.dot_dimension_numbers<[1], [0], [0], [1], [0, 0, 1, 1], [], []>} : vector<256x4xbf16>, vector<4x128xbf16>, vector<256x128xf32> -> vector<256x128xf32>
    %76 = arith.addf %72, %75 : vector<256x128xf32>
    %cst_93 = arith.constant dense<0.000000e+00> : vector<128xf32>
    %77 = vector.multi_reduction <add>, %68, %cst_93 [0] : vector<256x128xf32> to vector<128xf32>
    %78 = vector.shape_cast %77 : vector<128xf32> to vector<1x128xf32>
    %cst_94 = arith.constant dense<0.000000e+00> : vector<128xf32>
    %79 = vector.multi_reduction <add>, %76, %cst_94 [0] : vector<256x128xf32> to vector<128xf32>
    %80 = vector.shape_cast %79 : vector<128xf32> to vector<1x128xf32>
    %81 = arith.addf %78, %80 : vector<1x128xf32>
    %82 = arith.mulf %68, %68 : vector<256x128xf32>
    %cst_95 = arith.constant dense<0.000000e+00> : vector<128xf32>
    %83 = vector.multi_reduction <add>, %82, %cst_95 [0] : vector<256x128xf32> to vector<128xf32>
    %84 = vector.shape_cast %83 : vector<128xf32> to vector<1x128xf32>
    %85 = arith.mulf %76, %76 : vector<256x128xf32>
    %cst_96 = arith.constant dense<0.000000e+00> : vector<128xf32>
    %86 = vector.multi_reduction <add>, %85, %cst_96 [0] : vector<256x128xf32> to vector<128xf32>
    %87 = vector.shape_cast %86 : vector<128xf32> to vector<1x128xf32>
    %88 = arith.addf %84, %87 : vector<1x128xf32>
    %c0_97 = arith.constant 0 : index
    %c0_98 = arith.constant 0 : index
    %c0_99 = arith.constant 0 : index
    %89 = vector.load %arg5[%c0_97, %c0_98, %c0_99] : memref<1x2x128xf32, #tpu.memory_space<vmem>>, vector<1x1x128xf32>
    %90 = vector.shape_cast %89 : vector<1x1x128xf32> to vector<1x128xf32>
    %91 = vector.shape_cast %81 : vector<1x128xf32> to vector<1x1x128xf32>
    tpu.vector_store %arg5[%c0_97, %c0_98, %c0_99], %91 {strides = array<i32>} : memref<1x2x128xf32, #tpu.memory_space<vmem>>, vector<1x1x128xf32>,
    %c0_100 = arith.constant 0 : index
    %c1_101 = arith.constant 1 : index
    %c0_102 = arith.constant 0 : index
    %92 = vector.load %arg5[%c0_100, %c1_101, %c0_102] : memref<1x2x128xf32, #tpu.memory_space<vmem>>, vector<1x1x128xf32>
    %93 = vector.shape_cast %92 : vector<1x1x128xf32> to vector<1x128xf32>
    %94 = vector.shape_cast %88 : vector<1x128xf32> to vector<1x1x128xf32>
    tpu.vector_store %arg5[%c0_100, %c1_101, %c0_102], %94 {strides = array<i32>} : memref<1x2x128xf32, #tpu.memory_space<vmem>>, vector<1x1x128xf32>,
    %95 = vector.shape_cast %68 : vector<256x128xf32> to vector<16x16x128xf32>
    %c0_103 = arith.constant 0 : index
    %c0_104 = arith.constant 0 : index
    %c0_105 = arith.constant 0 : index
    %c0_106 = arith.constant 0 : index
    %c0_107 = arith.constant 0 : index
    %96 = vector.load %arg4[%c0_103, %c0_104, %c0_105, %c0_106, %c0_107] : memref<2x1x16x16x128xf32, #tpu.memory_space<vmem>>, vector<1x1x16x16x128xf32>
    %97 = vector.shape_cast %96 : vector<1x1x16x16x128xf32> to vector<16x16x128xf32>
    %98 = vector.shape_cast %95 : vector<16x16x128xf32> to vector<1x1x16x16x128xf32>
    tpu.vector_store %arg4[%c0_103, %c0_104, %c0_105, %c0_106, %c0_107], %98 {strides = array<i32>} : memref<2x1x16x16x128xf32, #tpu.memory_space<vmem>>, vector<1x1x16x16x128xf32>,
    %99 = vector.shape_cast %76 : vector<256x128xf32> to vector<16x16x128xf32>
    %c1_108 = arith.constant 1 : index
    %c0_109 = arith.constant 0 : index
    %c0_110 = arith.constant 0 : index
    %c0_111 = arith.constant 0 : index
    %c0_112 = arith.constant 0 : index
    %100 = vector.load %arg4[%c1_108, %c0_109, %c0_110, %c0_111, %c0_112] : memref<2x1x16x16x128xf32, #tpu.memory_space<vmem>>, vector<1x1x16x16x128xf32>
    %101 = vector.shape_cast %100 : vector<1x1x16x16x128xf32> to vector<16x16x128xf32>
    %102 = vector.shape_cast %99 : vector<16x16x128xf32> to vector<1x1x16x16x128xf32>
    tpu.vector_store %arg4[%c1_108, %c0_109, %c0_110, %c0_111, %c0_112], %102 {strides = array<i32>} : memref<2x1x16x16x128xf32, #tpu.memory_space<vmem>>, vector<1x1x16x16x128xf32>,
    return
  }
  func.func @transform_0(%arg0: i32) -> (i32, i32, i32, i32) {
    %c0_i32 = arith.constant 0 : i32
    %c0_i32_0 = arith.constant 0 : i32
    %c0_i32_1 = arith.constant 0 : i32
    %c0_i32_2 = arith.constant 0 : i32
    return %arg0, %c0_i32, %c0_i32_0, %c0_i32_1 : i32, i32, i32, i32
  }
  func.func @transform_1(%arg0: i32) -> (i32, i32, i32, i32) {
    %c0_i32 = arith.constant 0 : i32
    %c0_i32_0 = arith.constant 0 : i32
    %c0_i32_1 = arith.constant 0 : i32
    %c0_i32_2 = arith.constant 0 : i32
    %c0_i32_3 = arith.constant 0 : i32
    return %c0_i32, %c0_i32_0, %c0_i32_1, %c0_i32_2 : i32, i32, i32, i32
  }
  func.func @transform_2(%arg0: i32) -> (i32, i32) {
    %c0_i32 = arith.constant 0 : i32
    %c0_i32_0 = arith.constant 0 : i32
    %c0_i32_1 = arith.constant 0 : i32
    return %c0_i32, %c0_i32_0 : i32, i32
  }
  func.func @transform_3(%arg0: i32) -> (i32, i32, i32, i32, i32) {
    %c0_i32 = arith.constant 0 : i32
    %c0_i32_0 = arith.constant 0 : i32
    %c0_i32_1 = arith.constant 0 : i32
    %c0_i32_2 = arith.constant 0 : i32
    %c0_i32_3 = arith.constant 0 : i32
    return %c0_i32, %arg0, %c0_i32_0, %c0_i32_1, %c0_i32_2 : i32, i32, i32, i32, i32
  }
  func.func @transform_4(%arg0: i32) -> (i32, i32, i32) {
    %c0_i32 = arith.constant 0 : i32
    %c0_i32_0 = arith.constant 0 : i32
    %c0_i32_1 = arith.constant 0 : i32
    return %arg0, %c0_i32, %c0_i32_0 : i32, i32, i32
  }
}

module attributes {stable_mosaic.version = 11 : i64} {
  func.func @_bn_relu_kernel(%arg0: i32, %arg1: memref<512x128xf32, #tpu.memory_space<vmem>>, %arg2: memref<1x128xf32, #tpu.memory_space<vmem>>, %arg3: memref<1x128xf32, #tpu.memory_space<vmem>>, %arg4: memref<512x128xf32, #tpu.memory_space<vmem>>) attributes {dimension_semantics = [#tpu.dimension_semantics<parallel>], iteration_bounds = array<i64: 2>, scalar_prefetch = 0 : i64, scratch_operands = 0 : i64, tpu.core_type = #tpu.core_type<tc>, window_params = [{transform_indices = @transform_0, window_bounds = array<i64: 512, 128>}, {pipeline_mode = #tpu.pipeline_mode<synchronous>, transform_indices = @transform_1, window_bounds = array<i64: 1, 128>}, {pipeline_mode = #tpu.pipeline_mode<synchronous>, transform_indices = @transform_2, window_bounds = array<i64: 1, 128>}, {transform_indices = @transform_3, window_bounds = array<i64: 512, 128>}]} {
    %c0 = arith.constant 0 : index
    %c0_0 = arith.constant 0 : index
    %0 = vector.load %arg1[%c0, %c0_0] : memref<512x128xf32, #tpu.memory_space<vmem>>, vector<512x128xf32>
    %c0_1 = arith.constant 0 : index
    %c0_2 = arith.constant 0 : index
    %1 = vector.load %arg2[%c0_1, %c0_2] : memref<1x128xf32, #tpu.memory_space<vmem>>, vector<1x128xf32>
    %2 = vector.broadcast %1 : vector<1x128xf32> to vector<512x128xf32>
    %3 = arith.mulf %0, %2 : vector<512x128xf32>
    %c0_3 = arith.constant 0 : index
    %c0_4 = arith.constant 0 : index
    %4 = vector.load %arg3[%c0_3, %c0_4] : memref<1x128xf32, #tpu.memory_space<vmem>>, vector<1x128xf32>
    %5 = vector.broadcast %4 : vector<1x128xf32> to vector<512x128xf32>
    %6 = arith.addf %3, %5 : vector<512x128xf32>
    %cst = arith.constant 0.000000e+00 : f32
    %7 = vector.broadcast %cst : f32 to vector<512x128xf32>
    %8 = arith.maximumf %6, %7 : vector<512x128xf32>
    %c0_5 = arith.constant 0 : index
    %c0_6 = arith.constant 0 : index
    %9 = vector.load %arg4[%c0_5, %c0_6] : memref<512x128xf32, #tpu.memory_space<vmem>>, vector<512x128xf32>
    tpu.vector_store %arg4[%c0_5, %c0_6], %8 {strides = array<i32>} : memref<512x128xf32, #tpu.memory_space<vmem>>, vector<512x128xf32>,
    return
  }
  func.func @transform_0(%arg0: i32) -> (i32, i32) {
    %c0_i32 = arith.constant 0 : i32
    %c0_i32_0 = arith.constant 0 : i32
    return %arg0, %c0_i32 : i32, i32
  }
  func.func @transform_1(%arg0: i32) -> (i32, i32) {
    %c0_i32 = arith.constant 0 : i32
    %c0_i32_0 = arith.constant 0 : i32
    %c0_i32_1 = arith.constant 0 : i32
    return %c0_i32, %c0_i32_0 : i32, i32
  }
  func.func @transform_2(%arg0: i32) -> (i32, i32) {
    %c0_i32 = arith.constant 0 : i32
    %c0_i32_0 = arith.constant 0 : i32
    %c0_i32_1 = arith.constant 0 : i32
    return %c0_i32, %c0_i32_0 : i32, i32
  }
  func.func @transform_3(%arg0: i32) -> (i32, i32) {
    %c0_i32 = arith.constant 0 : i32
    %c0_i32_0 = arith.constant 0 : i32
    return %arg0, %c0_i32 : i32, i32
  }
}

</mosaic_0001>

<llo_original>
// kernel: up_conv_pallas.3
$region0: #{up_conv_pallas.3}
  #allocation0 [shape = 'u32[]', space=smem, size = 0x4, offset = 0x4, fixed_abs, tag = 'smem constant byte address 0x4 - core index']
  #allocation1 [shape = 'u32[144,128]{1,0:T(1,128)}', space=vmem, size = 0x12000, scoped, tag = 'internal scratch']
  %s0 = inlined_call_operand.vmem [shape: f32[1024,128], index: 0, kind: input, shape index: {}]
  %s1 = inlined_call_operand.vmem [shape: f32[1,128], index: 1, kind: input, shape index: {}]
  %s2 = inlined_call_operand.vmem [shape: f32[1,128], index: 2, kind: input, shape index: {}]
  %s3 = inlined_call_operand.vmem [shape: f32[1024,128], index: 3, kind: output, shape index: {}]
  %s4 = sld [smem:[#allocation0]]
  $region45: #{up_conv_pallas.3} parent=0
    _
  %s6 = ssub.s32 1, %s4
  %s7 = scalar_select 0, %s6, %s4
  loop: start=0, step=1, limit=4
  $region2: #{up_conv_pallas.3} parent=0 // loop_pre_header
    _
  $region3: #{up_conv_pallas.3} parent=0 // loop_header
    %s9 = sphi 0, %s13
    %p10 = scmp.ge.s32.totalorder %s9, 4
    %s19 = sphi 0, %s21
    %s22 = sphi 0, %s19
    %s23 = sphi 0, %s22
    %s39 = sphi 0, %s23
    %s43 = sphi 0, %s43
    %s45 = sphi 0, %s43
    %s46 = sphi 0, %s45
    %s60 = sphi 0, %s46
    %s64 = sphi 0, %s64
    %s66 = sphi 0, %s64
    %s67 = sphi 0, %s66
    %s81 = sphi 0, %s67
    %s87 = sphi 0, %s89
    %s90 = sphi 0, %s87
    %s91 = sphi 0, %s90
    %s107 = sphi 0, %s91
  $region4: #{up_conv_pallas.3} parent=0 // loop_header_branch
    %12 = sbr.rel (%p10) target = $region8
  $region5: #{up_conv_pallas.3} parent=0 // loop_body
    %s14 = ssub.s32 %s9, 1
    %s15 = ssub.s32 %s9, 2
    %s16 = sadd.s32 %s9, 1
    %s17 = ssub.s32 %s9, %s16
    %p18 = scmp.eq.s32.totalorder %s17, 0
    %s20 = sadd.s32 %s19, 1
    %s21 = scalar_select %p18, %s19, %s20
    %p24 = pneg %p18
    %p25 = scmp.eq.s32.totalorder %s9, 1
    %p26 = por %p24, %p25
    %p27 = scmp.ne.s32.totalorder %s19, %s22
    %p28 = scmp.eq.s32.totalorder %s9, 0
    %p29 = por %p27, %p28
    %p30 = scmp.ne.s32.totalorder %s19, %s22
    %p31 = scmp.eq.s32.totalorder %s14, 1
    %p32 = por %p30, %p31
    %p33 = scmp.ne.s32.totalorder %s22, %s23
    %p34 = scmp.eq.s32.totalorder %s14, 0
    %p35 = por %p33, %p34
    %p36 = scmp.ne.s32.totalorder %s22, %s23
    %p37 = scmp.eq.s32.totalorder %s15, 1
    %p38 = por %p36, %p37
    %p40 = scmp.ne.s32.totalorder %s23, %s39
    %p41 = scmp.eq.s32.totalorder %s15, 0
    %p42 = por %p40, %p41
    %s44 = sadd.s32 %s43, 1
    %p47 = scmp.eq.s32.totalorder %s9, 1
    %p48 = scmp.ne.s32.totalorder %s43, %s45
    %p49 = scmp.eq.s32.totalorder %s9, 0
    %p50 = por %p48, %p49
    %p51 = scmp.ne.s32.totalorder %s43, %s45
    %p52 = scmp.eq.s32.totalorder %s14, 1
    %p53 = por %p51, %p52
    %p54 = scmp.ne.s32.totalorder %s45, %s46
    %p55 = scmp.eq.s32.totalorder %s14, 0
    %p56 = por %p54, %p55
    %p57 = scmp.ne.s32.totalorder %s45, %s46
    %p58 = scmp.eq.s32.totalorder %s15, 1
    %p59 = por %p57, %p58
    %p61 = scmp.ne.s32.totalorder %s46, %s60
    %p62 = scmp.eq.s32.totalorder %s15, 0
    %p63 = por %p61, %p62
    %s65 = sadd.s32 %s64, 1
    %p68 = scmp.eq.s32.totalorder %s9, 1
    %p69 = scmp.ne.s32.totalorder %s64, %s66
    %p70 = scmp.eq.s32.totalorder %s9, 0
    %p71 = por %p69, %p70
    %p72 = scmp.ne.s32.totalorder %s64, %s66
    %p73 = scmp.eq.s32.totalorder %s14, 1
    %p74 = por %p72, %p73
    %p75 = scmp.ne.s32.totalorder %s66, %s67
    %p76 = scmp.eq.s32.totalorder %s14, 0
    %p77 = por %p75, %p76
    %p78 = scmp.ne.s32.totalorder %s66, %s67
    %p79 = scmp.eq.s32.totalorder %s15, 1
    %p80 = por %p78, %p79
    %p82 = scmp.ne.s32.totalorder %s67, %s81
    %p83 = scmp.eq.s32.totalorder %s15, 0
    %p84 = por %p82, %p83
    %s85 = ssub.s32 %s9, %s16
    %p86 = scmp.eq.s32.totalorder %s85, 0
    %s88 = sadd.s32 %s87, 1
    %s89 = scalar_select %p86, %s87, %s88
    %p92 = pneg %p86
    %p93 = scmp.eq.s32.totalorder %s9, 1
    %p94 = por %p92, %p93
    %p95 = scmp.ne.s32.totalorder %s87, %s90
    %p96 = scmp.eq.s32.totalorder %s9, 0
    %p97 = por %p95, %p96
    %p98 = scmp.ne.s32.totalorder %s87, %s90
    %p99 = scmp.eq.s32.totalorder %s14, 1
    %p100 = por %p98, %p99
    %p101 = scmp.ne.s32.totalorder %s90, %s91
    %p102 = scmp.eq.s32.totalorder %s14, 0
    %p103 = por %p101, %p102
    %p104 = scmp.ne.s32.totalorder %s90, %s91
    %p105 = scmp.eq.s32.totalorder %s15, 1
    %p106 = por %p104, %p105
    %p108 = scmp.ne.s32.totalorder %s91, %s107
    %p109 = scmp.eq.s32.totalorder %s15, 0
    %p110 = por %p108, %p109
    %p111 = scmp.le.s32.totalorder 1, %s9
    %p112 = scmp.lt.s32.totalorder %s9, 3
    %p113 = pnand %p111, %p112
    %p114 = pneg %p113
    // Predicated region
    $region9: #{up_conv_pallas.3} parent=5 // pred_check
      _
    $region10: #{up_conv_pallas.3} parent=5 // pred_check_branch
      %116 = sbr.rel (%p113) target = $region12
    $region11: #{up_conv_pallas.3} parent=5 // pred_region
      %s117 = ssub.s32 %s9, 1
      // Predicated region
      $region13: #{up_conv_pallas.3} parent=11 // pred_check
        %p118 = pneg %p56
      $region14: #{up_conv_pallas.3} parent=11 // pred_check_branch
        %120 = sbr.rel (%p118) target = $region16
      $region15: #{up_conv_pallas.3} parent=11 // pred_region
        _
      $region16: #{up_conv_pallas.3} parent=11 // pred_fallthru
        _
      // Predicated region
      $region17: #{up_conv_pallas.3} parent=11 // pred_check
        %p121 = pneg %p77
      $region18: #{up_conv_pallas.3} parent=11 // pred_check_branch
        %123 = sbr.rel (%p121) target = $region20
      $region19: #{up_conv_pallas.3} parent=11 // pred_region
        _
      $region20: #{up_conv_pallas.3} parent=11 // pred_fallthru
        _
    $region12: #{up_conv_pallas.3} parent=5 // pred_fallthru
      _
    %p124 = scmp.lt.s32.totalorder %s9, 2
    // Predicated region
    $region21: #{up_conv_pallas.3} parent=5 // pred_check
      %p125 = pneg %p124
    $region22: #{up_conv_pallas.3} parent=5 // pred_check_branch
      %127 = sbr.rel (%p125) target = $region24
    $region23: #{up_conv_pallas.3} parent=5 // pred_region
      // Predicated region
      $region25: #{up_conv_pallas.3} parent=23 // pred_check
        %p128 = pneg %p29
      $region26: #{up_conv_pallas.3} parent=23 // pred_check_branch
        %130 = sbr.rel (%p128) target = $region28
      $region27: #{up_conv_pallas.3} parent=23 // pred_region
        %s131 = smul.u32 64, %s9
        %p132 = scmp.lt.s32.totalorder %s131, 127
        %s133 = scalar_select %p132, %s131, 127
        %s134 = smul.addr %s133, 8
        %s135 = scalar_lea.vmem %s0, %s134
        %s136 = smul.u32 64, %s9
      $region28: #{up_conv_pallas.3} parent=23 // pred_fallthru
        _
    $region24: #{up_conv_pallas.3} parent=5 // pred_fallthru
      _
    %p137 = scmp.le.s32.totalorder 1, %s9
    %p138 = scmp.lt.s32.totalorder %s9, 3
    %p139 = pnand %p137, %p138
    %p140 = pneg %p139
    // Predicated region
    $region29: #{up_conv_pallas.3} parent=5 // pred_check
      _
    $region30: #{up_conv_pallas.3} parent=5 // pred_check_branch
      %142 = sbr.rel (%p139) target = $region32
    $region31: #{up_conv_pallas.3} parent=5 // pred_region
      %s143 = ssub.s32 %s9, 1
      %s144 = smul.u32 64, %s14
      %p145 = scmp.lt.s32.totalorder %s144, 127
      %s146 = scalar_select %p145, %s144, 127
      %s147 = smul.addr %s146, 8
      %s148 = scalar_lea.vmem %s0, %s147
      %p149 = pneg %p35
      %p150 = pneg %p32
      %p151 = pneg %p56
      %p152 = pneg %p53
      %p153 = pneg %p77
      %p154 = pneg %p74
      %p155 = pneg %p103
      %p156 = pneg %p100
      %s157 = smul.u32 64, %s14
      %p158 = scmp.lt.s32.totalorder %s157, 127
      %s159 = scalar_select %p158, %s157, 127
      %s160 = smul.addr %s159, 8
      %s161 = scalar_lea.vmem %s3, %s160
      %s162 = smul.u32 64, %s14
      %p163 = scmp.lt.s32.totalorder %s162, 127
      %s164 = scalar_select %p163, %s162, 127
      %s165 = smul.addr %s164, 8
      %s166 = scalar_lea.vmem %s0, %s165
      %s167 = smul.u32 64, %s14
      %s168 = smul.u32 64, %s14
      %p169 = scmp.lt.s32.totalorder %s168, 127
      %s170 = scalar_select %p169, %s168, 127
      %s171 = smul.addr %s170, 8
      %s172 = scalar_lea.vmem %s3, %s171
      %s173 = smul.u32 64, %s14
      %v174 = vld [vmem:[%s166] sm:$0xff]
      %v175 = vld [vmem:[%s166 + $0x8] sm:$0xff]
      %v176 = vld [vmem:[%s166 + $0x10] sm:$0xff]
      %v177 = vld [vmem:[%s166 + $0x18] sm:$0xff]
      %v178 = vld [vmem:[%s166 + $0x20] sm:$0xff]
      %v179 = vld [vmem:[%s166 + $0x28] sm:$0xff]
      %v180 = vld [vmem:[%s166 + $0x30] sm:$0xff]
      %v181 = vld [vmem:[%s166 + $0x38] sm:$0xff]
      %v182 = vld [vmem:[%s166 + $0x40] sm:$0xff]
      %v183 = vld [vmem:[%s166 + $0x48] sm:$0xff]
      %v184 = vld [vmem:[%s166 + $0x50] sm:$0xff]
      %v185 = vld [vmem:[%s166 + $0x58] sm:$0xff]
      %v186 = vld [vmem:[%s166 + $0x60] sm:$0xff]
      %v187 = vld [vmem:[%s166 + $0x68] sm:$0xff]
      %v188 = vld [vmem:[%s166 + $0x70] sm:$0xff]
      %v189 = vld [vmem:[%s166 + $0x78] sm:$0xff]
      %v190 = vld [vmem:[%s166 + $0x80] sm:$0xff]
      %v191 = vld [vmem:[%s166 + $0x88] sm:$0xff]
      %v192 = vld [vmem:[%s166 + $0x90] sm:$0xff]
      %v193 = vld [vmem:[%s166 + $0x98] sm:$0xff]
      %v194 = vld [vmem:[%s166 + $0xa0] sm:$0xff]
      %v195 = vld [vmem:[%s166 + $0xa8] sm:$0xff]
      %v196 = vld [vmem:[%s166 + $0xb0] sm:$0xff]
      %v197 = vld [vmem:[%s166 + $0xb8] sm:$0xff]
      %v198 = vld [vmem:[%s166 + $0xc0] sm:$0xff]
      %v199 = vld [vmem:[%s166 + $0xc8] sm:$0xff]
      %v200 = vld [vmem:[%s166 + $0xd0] sm:$0xff]
      %v201 = vld [vmem:[%s166 + $0xd8] sm:$0xff]
      %v202 = vld [vmem:[%s166 + $0xe0] sm:$0xff]
      %v203 = vld [vmem:[%s166 + $0xe8] sm:$0xff]
      %v204 = vld [vmem:[%s166 + $0xf0] sm:$0xff]
      %v205 = vld [vmem:[%s166 + $0xf8] sm:$0xff]
      %v206 = vld [vmem:[%s166 + $0x100] sm:$0xff]
      %v207 = vld [vmem:[%s166 + $0x108] sm:$0xff]
      %v208 = vld [vmem:[%s166 + $0x110] sm:$0xff]
      %v209 = vld [vmem:[%s166 + $0x118] sm:$0xff]
      %v210 = vld [vmem:[%s166 + $0x120] sm:$0xff]
      %v211 = vld [vmem:[%s166 + $0x128] sm:$0xff]
      %v212 = vld [vmem:[%s166 + $0x130] sm:$0xff]
      %v213 = vld [vmem:[%s166 + $0x138] sm:$0xff]
      %v214 = vld [vmem:[%s166 + $0x140] sm:$0xff]
      %v215 = vld [vmem:[%s166 + $0x148] sm:$0xff]
      %v216 = vld [vmem:[%s166 + $0x150] sm:$0xff]
      %v217 = vld [vmem:[%s166 + $0x158] sm:$0xff]
      %v218 = vld [vmem:[%s166 + $0x160] sm:$0xff]
      %v219 = vld [vmem:[%s166 + $0x168] sm:$0xff]
      %v220 = vld [vmem:[%s166 + $0x170] sm:$0xff]
      %v221 = vld [vmem:[%s166 + $0x178] sm:$0xff]
      %v222 = vld [vmem:[%s166 + $0x180] sm:$0xff]
      %v223 = vld [vmem:[%s166 + $0x188] sm:$0xff]
      %v224 = vld [vmem:[%s166 + $0x190] sm:$0xff]
      %v225 = vld [vmem:[%s166 + $0x198] sm:$0xff]
      %v226 = vld [vmem:[%s166 + $0x1a0] sm:$0xff]
      %v227 = vld [vmem:[%s166 + $0x1a8] sm:$0xff]
      %v228 = vld [vmem:[%s166 + $0x1b0] sm:$0xff]
      %v229 = vld [vmem:[%s166 + $0x1b8] sm:$0xff]
      %v230 = vld [vmem:[%s166 + $0x1c0] sm:$0xff]
      %v231 = vld [vmem:[%s166 + $0x1c8] sm:$0xff]
      %v232 = vld [vmem:[%s166 + $0x1d0] sm:$0xff]
      %v233 = vld [vmem:[%s166 + $0x1d8] sm:$0xff]
      %v234 = vld [vmem:[%s166 + $0x1e0] sm:$0xff]
      %v235 = vld [vmem:[%s166 + $0x1e8] sm:$0xff]
      %v236 = vld [vmem:[%s166 + $0x1f0] sm:$0xff]
      %v237 = vld [vmem:[%s166 + $0x1f8] sm:$0xff]
      %v238 = vld [vmem:[%s1] sm:$0x1]
      %v240 = vlaneseq
      %v241 = vshrl.u32 %v240, 7
      %v242 = vsub.s32 0, %v241
      %v243 = vrot.slane %v238, %v242
      %v245 = vmul.f32 %v174, %v243
      %v246 = vmul.f32 %v175, %v243
      %v247 = vmul.f32 %v176, %v243
      %v248 = vmul.f32 %v177, %v243
      %v249 = vmul.f32 %v178, %v243
      %v250 = vmul.f32 %v179, %v243
      %v251 = vmul.f32 %v180, %v243
      %v252 = vmul.f32 %v181, %v243
      %v253 = vmul.f32 %v182, %v243
      %v254 = vmul.f32 %v183, %v243
      %v255 = vmul.f32 %v184, %v243
      %v256 = vmul.f32 %v185, %v243
      %v257 = vmul.f32 %v186, %v243
      %v258 = vmul.f32 %v187, %v243
      %v259 = vmul.f32 %v188, %v243
      %v260 = vmul.f32 %v189, %v243
      %v261 = vmul.f32 %v190, %v243
      %v262 = vmul.f32 %v191, %v243
      %v263 = vmul.f32 %v192, %v243
      %v264 = vmul.f32 %v193, %v243
      %v265 = vmul.f32 %v194, %v243
      %v266 = vmul.f32 %v195, %v243
      %v267 = vmul.f32 %v196, %v243
      %v268 = vmul.f32 %v197, %v243
      %v269 = vmul.f32 %v198, %v243
      %v270 = vmul.f32 %v199, %v243
      %v271 = vmul.f32 %v200, %v243
      %v272 = vmul.f32 %v201, %v243
      %v273 = vmul.f32 %v202, %v243
      %v274 = vmul.f32 %v203, %v243
      %v275 = vmul.f32 %v204, %v243
      %v276 = vmul.f32 %v205, %v243
      %v277 = vmul.f32 %v206, %v243
      %v278 = vmul.f32 %v207, %v243
      %v279 = vmul.f32 %v208, %v243
      %v280 = vmul.f32 %v209, %v243
      %v281 = vmul.f32 %v210, %v243
      %v282 = vmul.f32 %v211, %v243
      %v283 = vmul.f32 %v212, %v243
      %v284 = vmul.f32 %v213, %v243
      %v285 = vmul.f32 %v214, %v243
      %v286 = vmul.f32 %v215, %v243
      %v287 = vmul.f32 %v216, %v243
      %v288 = vmul.f32 %v217, %v243
      %v289 = vmul.f32 %v218, %v243
      %v290 = vmul.f32 %v219, %v243
      %v291 = vmul.f32 %v220, %v243
      %v292 = vmul.f32 %v221, %v243
      %v293 = vmul.f32 %v222, %v243
      %v294 = vmul.f32 %v223, %v243
      %v295 = vmul.f32 %v224, %v243
      %v296 = vmul.f32 %v225, %v243
      %v297 = vmul.f32 %v226, %v243
      %v298 = vmul.f32 %v227, %v243
      %v299 = vmul.f32 %v228, %v243
      %v300 = vmul.f32 %v229, %v243
      %v301 = vmul.f32 %v230, %v243
      %v302 = vmul.f32 %v231, %v243
      %v303 = vmul.f32 %v232, %v243
      %v304 = vmul.f32 %v233, %v243
      %v305 = vmul.f32 %v234, %v243
      %v306 = vmul.f32 %v235, %v243
      %v307 = vmul.f32 %v236, %v243
      %v308 = vmul.f32 %v237, %v243
      %v309 = vld [vmem:[%s2] sm:$0x1]
      %v311 = vlaneseq
      %v312 = vshrl.u32 %v311, 7
      %v313 = vsub.s32 0, %v312
      %v314 = vrot.slane %v309, %v313
      %v316 = vadd.f32 %v245, %v314
      %v317 = vadd.f32 %v246, %v314
      %v318 = vadd.f32 %v247, %v314
      %v319 = vadd.f32 %v248, %v314
      %v320 = vadd.f32 %v249, %v314
      %v321 = vadd.f32 %v250, %v314
      %v322 = vadd.f32 %v251, %v314
      %v323 = vadd.f32 %v252, %v314
      %v324 = vadd.f32 %v253, %v314
      %v325 = vadd.f32 %v254, %v314
      %v326 = vadd.f32 %v255, %v314
      %v327 = vadd.f32 %v256, %v314
      %v328 = vadd.f32 %v257, %v314
      %v329 = vadd.f32 %v258, %v314
      %v330 = vadd.f32 %v259, %v314
      %v331 = vadd.f32 %v260, %v314
      %v332 = vadd.f32 %v261, %v314
      %v333 = vadd.f32 %v262, %v314
      %v334 = vadd.f32 %v263, %v314
      %v335 = vadd.f32 %v264, %v314
      %v336 = vadd.f32 %v265, %v314
      %v337 = vadd.f32 %v266, %v314
      %v338 = vadd.f32 %v267, %v314
      %v339 = vadd.f32 %v268, %v314
      %v340 = vadd.f32 %v269, %v314
      %v341 = vadd.f32 %v270, %v314
      %v342 = vadd.f32 %v271, %v314
      %v343 = vadd.f32 %v272, %v314
      %v344 = vadd.f32 %v273, %v314
      %v345 = vadd.f32 %v274, %v314
      %v346 = vadd.f32 %v275, %v314
      %v347 = vadd.f32 %v276, %v314
      %v348 = vadd.f32 %v277, %v314
      %v349 = vadd.f32 %v278, %v314
      %v350 = vadd.f32 %v279, %v314
      %v351 = vadd.f32 %v280, %v314
      %v352 = vadd.f32 %v281, %v314
      %v353 = vadd.f32 %v282, %v314
      %v354 = vadd.f32 %v283, %v314
      %v355 = vadd.f32 %v284, %v314
      %v356 = vadd.f32 %v285, %v314
      %v357 = vadd.f32 %v286, %v314
      %v358 = vadd.f32 %v287, %v314
      %v359 = vadd.f32 %v288, %v314
      %v360 = vadd.f32 %v289, %v314
      %v361 = vadd.f32 %v290, %v314
      %v362 = vadd.f32 %v291, %v314
      %v363 = vadd.f32 %v292, %v314
      %v364 = vadd.f32 %v293, %v314
      %v365 = vadd.f32 %v294, %v314
      %v366 = vadd.f32 %v295, %v314
      %v367 = vadd.f32 %v296, %v314
      %v368 = vadd.f32 %v297, %v314
      %v369 = vadd.f32 %v298, %v314
      %v370 = vadd.f32 %v299, %v314
      %v371 = vadd.f32 %v300, %v314
      %v372 = vadd.f32 %v301, %v314
      %v373 = vadd.f32 %v302, %v314
      %v374 = vadd.f32 %v303, %v314
      %v375 = vadd.f32 %v304, %v314
      %v376 = vadd.f32 %v305, %v314
      %v377 = vadd.f32 %v306, %v314
      %v378 = vadd.f32 %v307, %v314
      %v379 = vadd.f32 %v308, %v314
      %v380 = vmax.f32 %v316, 0.0
      %v381 = vmax.f32 %v317, 0.0
      %v382 = vmax.f32 %v318, 0.0
      %v383 = vmax.f32 %v319, 0.0
      %v384 = vmax.f32 %v320, 0.0
      %v385 = vmax.f32 %v321, 0.0
      %v386 = vmax.f32 %v322, 0.0
      %v387 = vmax.f32 %v323, 0.0
      %v388 = vmax.f32 %v324, 0.0
      %v389 = vmax.f32 %v325, 0.0
      %v390 = vmax.f32 %v326, 0.0
      %v391 = vmax.f32 %v327, 0.0
      %v392 = vmax.f32 %v328, 0.0
      %v393 = vmax.f32 %v329, 0.0
      %v394 = vmax.f32 %v330, 0.0
      %v395 = vmax.f32 %v331, 0.0
      %v396 = vmax.f32 %v332, 0.0
      %v397 = vmax.f32 %v333, 0.0
      %v398 = vmax.f32 %v334, 0.0
      %v399 = vmax.f32 %v335, 0.0
      %v400 = vmax.f32 %v336, 0.0
      %v401 = vmax.f32 %v337, 0.0
      %v402 = vmax.f32 %v338, 0.0
      %v403 = vmax.f32 %v339, 0.0
      %v404 = vmax.f32 %v340, 0.0
      %v405 = vmax.f32 %v341, 0.0
      %v406 = vmax.f32 %v342, 0.0
      %v407 = vmax.f32 %v343, 0.0
      %v408 = vmax.f32 %v344, 0.0
      %v409 = vmax.f32 %v345, 0.0
      %v410 = vmax.f32 %v346, 0.0
      %v411 = vmax.f32 %v347, 0.0
      %v412 = vmax.f32 %v348, 0.0
      %v413 = vmax.f32 %v349, 0.0
      %v414 = vmax.f32 %v350, 0.0
      %v415 = vmax.f32 %v351, 0.0
      %v416 = vmax.f32 %v352, 0.0
      %v417 = vmax.f32 %v353, 0.0
      %v418 = vmax.f32 %v354, 0.0
      %v419 = vmax.f32 %v355, 0.0
      %v420 = vmax.f32 %v356, 0.0
      %v421 = vmax.f32 %v357, 0.0
      %v422 = vmax.f32 %v358, 0.0
      %v423 = vmax.f32 %v359, 0.0
      %v424 = vmax.f32 %v360, 0.0
      %v425 = vmax.f32 %v361, 0.0
      %v426 = vmax.f32 %v362, 0.0
      %v427 = vmax.f32 %v363, 0.0
      %v428 = vmax.f32 %v364, 0.0
      %v429 = vmax.f32 %v365, 0.0
      %v430 = vmax.f32 %v366, 0.0
      %v431 = vmax.f32 %v367, 0.0
      %v432 = vmax.f32 %v368, 0.0
      %v433 = vmax.f32 %v369, 0.0
      %v434 = vmax.f32 %v370, 0.0
      %v435 = vmax.f32 %v371, 0.0
      %v436 = vmax.f32 %v372, 0.0
      %v437 = vmax.f32 %v373, 0.0
      %v438 = vmax.f32 %v374, 0.0
      %v439 = vmax.f32 %v375, 0.0
      %v440 = vmax.f32 %v376, 0.0
      %v441 = vmax.f32 %v377, 0.0
      %v442 = vmax.f32 %v378, 0.0
      %v443 = vmax.f32 %v379, 0.0
      %444 = vst [vmem:[%s172] sm:$0xff] %v380
      %445 = vst [vmem:[%s172 + $0x8] sm:$0xff] %v381
      %446 = vst [vmem:[%s172 + $0x10] sm:$0xff] %v382
      %447 = vst [vmem:[%s172 + $0x18] sm:$0xff] %v383
      %448 = vst [vmem:[%s172 + $0x20] sm:$0xff] %v384
      %449 = vst [vmem:[%s172 + $0x28] sm:$0xff] %v385
      %450 = vst [vmem:[%s172 + $0x30] sm:$0xff] %v386
      %451 = vst [vmem:[%s172 + $0x38] sm:$0xff] %v387
      %452 = vst [vmem:[%s172 + $0x40] sm:$0xff] %v388
      %453 = vst [vmem:[%s172 + $0x48] sm:$0xff] %v389
      %454 = vst [vmem:[%s172 + $0x50] sm:$0xff] %v390
      %455 = vst [vmem:[%s172 + $0x58] sm:$0xff] %v391
      %456 = vst [vmem:[%s172 + $0x60] sm:$0xff] %v392
      %457 = vst [vmem:[%s172 + $0x68] sm:$0xff] %v393
      %458 = vst [vmem:[%s172 + $0x70] sm:$0xff] %v394
      %459 = vst [vmem:[%s172 + $0x78] sm:$0xff] %v395
      %460 = vst [vmem:[%s172 + $0x80] sm:$0xff] %v396
      %461 = vst [vmem:[%s172 + $0x88] sm:$0xff] %v397
      %462 = vst [vmem:[%s172 + $0x90] sm:$0xff] %v398
      %463 = vst [vmem:[%s172 + $0x98] sm:$0xff] %v399
      %464 = vst [vmem:[%s172 + $0xa0] sm:$0xff] %v400
      %465 = vst [vmem:[%s172 + $0xa8] sm:$0xff] %v401
      %466 = vst [vmem:[%s172 + $0xb0] sm:$0xff] %v402
      %467 = vst [vmem:[%s172 + $0xb8] sm:$0xff] %v403
      %468 = vst [vmem:[%s172 + $0xc0] sm:$0xff] %v404
      %469 = vst [vmem:[%s172 + $0xc8] sm:$0xff] %v405
      %470 = vst [vmem:[%s172 + $0xd0] sm:$0xff] %v406
      %471 = vst [vmem:[%s172 + $0xd8] sm:$0xff] %v407
      %472 = vst [vmem:[%s172 + $0xe0] sm:$0xff] %v408
      %473 = vst [vmem:[%s172 + $0xe8] sm:$0xff] %v409
      %474 = vst [vmem:[%s172 + $0xf0] sm:$0xff] %v410
      %475 = vst [vmem:[%s172 + $0xf8] sm:$0xff] %v411
      %476 = vst [vmem:[%s172 + $0x100] sm:$0xff] %v412
      %477 = vst [vmem:[%s172 + $0x108] sm:$0xff] %v413
      %478 = vst [vmem:[%s172 + $0x110] sm:$0xff] %v414
      %479 = vst [vmem:[%s172 + $0x118] sm:$0xff] %v415
      %480 = vst [vmem:[%s172 + $0x120] sm:$0xff] %v416
      %481 = vst [vmem:[%s172 + $0x128] sm:$0xff] %v417
      %482 = vst [vmem:[%s172 + $0x130] sm:$0xff] %v418
      %483 = vst [vmem:[%s172 + $0x138] sm:$0xff] %v419
      %484 = vst [vmem:[%s172 + $0x140] sm:$0xff] %v420
      %485 = vst [vmem:[%s172 + $0x148] sm:$0xff] %v421
      %486 = vst [vmem:[%s172 + $0x150] sm:$0xff] %v422
      %487 = vst [vmem:[%s172 + $0x158] sm:$0xff] %v423
      %488 = vst [vmem:[%s172 + $0x160] sm:$0xff] %v424
      %489 = vst [vmem:[%s172 + $0x168] sm:$0xff] %v425
      %490 = vst [vmem:[%s172 + $0x170] sm:$0xff] %v426
      %491 = vst [vmem:[%s172 + $0x178] sm:$0xff] %v427
      %492 = vst [vmem:[%s172 + $0x180] sm:$0xff] %v428
      %493 = vst [vmem:[%s172 + $0x188] sm:$0xff] %v429
      %494 = vst [vmem:[%s172 + $0x190] sm:$0xff] %v430
      %495 = vst [vmem:[%s172 + $0x198] sm:$0xff] %v431
      %496 = vst [vmem:[%s172 + $0x1a0] sm:$0xff] %v432
      %497 = vst [vmem:[%s172 + $0x1a8] sm:$0xff] %v433
      %498 = vst [vmem:[%s172 + $0x1b0] sm:$0xff] %v434
      %499 = vst [vmem:[%s172 + $0x1b8] sm:$0xff] %v435
      %500 = vst [vmem:[%s172 + $0x1c0] sm:$0xff] %v436
      %501 = vst [vmem:[%s172 + $0x1c8] sm:$0xff] %v437
      %502 = vst [vmem:[%s172 + $0x1d0] sm:$0xff] %v438
      %503 = vst [vmem:[%s172 + $0x1d8] sm:$0xff] %v439
      %504 = vst [vmem:[%s172 + $0x1e0] sm:$0xff] %v440
      %505 = vst [vmem:[%s172 + $0x1e8] sm:$0xff] %v441
      %506 = vst [vmem:[%s172 + $0x1f0] sm:$0xff] %v442
      %507 = vst [vmem:[%s172 + $0x1f8] sm:$0xff] %v443
      %s508 = smul.u32 64, %s14
      %p509 = scmp.lt.s32.totalorder %s508, 127
      %s510 = scalar_select %p509, %s508, 127
      %s511 = smul.addr %s510, 8
      %s512 = scalar_lea.vmem %s3, %s511
      // Predicated region
      $region33: #{up_conv_pallas.3} parent=31 // pred_check
        %p513 = pneg %p100
      $region34: #{up_conv_pallas.3} parent=31 // pred_check_branch
        %515 = sbr.rel (%p513) target = $region36
      $region35: #{up_conv_pallas.3} parent=31 // pred_region
        %s516 = smul.u32 64, %s14
      $region36: #{up_conv_pallas.3} parent=31 // pred_fallthru
        _
    $region32: #{up_conv_pallas.3} parent=5 // pred_fallthru
      _
    %p517 = scmp.le.s32.totalorder 2, %s9
    // Predicated region
    $region37: #{up_conv_pallas.3} parent=5 // pred_check
      %p518 = pneg %p517
    $region38: #{up_conv_pallas.3} parent=5 // pred_check_branch
      %520 = sbr.rel (%p518) target = $region40
    $region39: #{up_conv_pallas.3} parent=5 // pred_region
      %s521 = ssub.s32 %s9, 2
      // Predicated region
      $region41: #{up_conv_pallas.3} parent=39 // pred_check
        %p522 = pneg %p106
      $region42: #{up_conv_pallas.3} parent=39 // pred_check_branch
        %524 = sbr.rel (%p522) target = $region44
      $region43: #{up_conv_pallas.3} parent=39 // pred_region
        %s525 = smul.u32 64, %s15
        %p526 = scmp.lt.s32.totalorder %s525, 127
        %s527 = scalar_select %p526, %s525, 127
        %s528 = smul.addr %s527, 8
        %s529 = scalar_lea.vmem %s3, %s528
      $region44: #{up_conv_pallas.3} parent=39 // pred_fallthru
        _
    $region40: #{up_conv_pallas.3} parent=5 // pred_fallthru
      _
  $region6: #{up_conv_pallas.3} parent=0 // loop_footer
    %s13 = sadd.s32 1, %s9
  $region7: #{up_conv_pallas.3} parent=0 // loop_footer_branch
    %8 = sbr.rel target = $region3
  $region8: #{up_conv_pallas.3} parent=0 // loop_exit
    _

// kernel: up_conv_pallas.2
$region0: #{up_conv_pallas.2}
  #allocation0 [shape = 'u32[]', space=smem, size = 0x4, offset = 0x4, fixed_abs, tag = 'smem constant byte address 0x4 - core index']
  #allocation1 [shape = 'u32[144,128]{1,0:T(1,128)}', space=vmem, size = 0x12000, scoped, tag = 'internal scratch']
  %s0 = inlined_call_operand.vmem [shape: bf16[2,18,18,4], index: 0, kind: input, shape index: {}]
  %s1 = inlined_call_operand.vmem [shape: bf16[4,3,4,128], index: 1, kind: input, shape index: {}]
  %s2 = inlined_call_operand.vmem [shape: f32[1,128], index: 2, kind: input, shape index: {}]
  %s3 = inlined_call_operand.vmem [shape: f32[2,2,16,16,128], index: 3, kind: output, shape index: {0}]
  %s4 = inlined_call_operand.vmem [shape: f32[2,2,128], index: 4, kind: output, shape index: {1}]
  %5 = xla_tuple %s3, %s4
  %s6 = sld [smem:[#allocation0]]
  $region87: #{up_conv_pallas.2} parent=0
    _
  %s8 = ssub.s32 1, %s6
  %s9 = scalar_select 0, %s8, %s6
  $region1: #{up_conv_pallas.2} parent=0
    #allocation2 [shape = 'u8[524288]{0}', space=vmem, size = 0x80000, scoped, tag = 'output window, operand 0']
    loop: start=0, step=1, limit=4
    $region2: #{up_conv_pallas.2} parent=1 // loop_pre_header
      _
    $region3: #{up_conv_pallas.2} parent=1 // loop_header
      %s11 = sphi 0, %s15
      %p12 = scmp.ge.s32.totalorder %s11, 4
      %s21 = sphi 0, %s23
      %s24 = sphi 0, %s21
      %s25 = sphi 0, %s24
      %s41 = sphi 0, %s25
      %s45 = sphi 0, %s45
      %s47 = sphi 0, %s45
      %s48 = sphi 0, %s47
      %s62 = sphi 0, %s48
      %s66 = sphi 0, %s66
      %s68 = sphi 0, %s66
      %s69 = sphi 0, %s68
      %s83 = sphi 0, %s69
      %s89 = sphi 0, %s91
      %s92 = sphi 0, %s89
      %s93 = sphi 0, %s92
      %s109 = sphi 0, %s93
      %s115 = sphi 0, %s117
      %s118 = sphi 0, %s115
      %s119 = sphi 0, %s118
      %s135 = sphi 0, %s119
    $region4: #{up_conv_pallas.2} parent=1 // loop_header_branch
      %14 = sbr.rel (%p12) target = $region8
    $region5: #{up_conv_pallas.2} parent=1 // loop_body
      %s16 = ssub.s32 %s11, 1
      %s17 = ssub.s32 %s11, 2
      %s18 = sadd.s32 %s11, 1
      %s19 = ssub.s32 %s11, %s18
      %p20 = scmp.eq.s32.totalorder %s19, 0
      %s22 = sadd.s32 %s21, 1
      %s23 = scalar_select %p20, %s21, %s22
      %p26 = pneg %p20
      %p27 = scmp.eq.s32.totalorder %s11, 1
      %p28 = por %p26, %p27
      %p29 = scmp.ne.s32.totalorder %s21, %s24
      %p30 = scmp.eq.s32.totalorder %s11, 0
      %p31 = por %p29, %p30
      %p32 = scmp.ne.s32.totalorder %s21, %s24
      %p33 = scmp.eq.s32.totalorder %s16, 1
      %p34 = por %p32, %p33
      %p35 = scmp.ne.s32.totalorder %s24, %s25
      %p36 = scmp.eq.s32.totalorder %s16, 0
      %p37 = por %p35, %p36
      %p38 = scmp.ne.s32.totalorder %s24, %s25
      %p39 = scmp.eq.s32.totalorder %s17, 1
      %p40 = por %p38, %p39
      %p42 = scmp.ne.s32.totalorder %s25, %s41
      %p43 = scmp.eq.s32.totalorder %s17, 0
      %p44 = por %p42, %p43
      %s46 = sadd.s32 %s45, 1
      %p49 = scmp.eq.s32.totalorder %s11, 1
      %p50 = scmp.ne.s32.totalorder %s45, %s47
      %p51 = scmp.eq.s32.totalorder %s11, 0
      %p52 = por %p50, %p51
      %p53 = scmp.ne.s32.totalorder %s45, %s47
      %p54 = scmp.eq.s32.totalorder %s16, 1
      %p55 = por %p53, %p54
      %p56 = scmp.ne.s32.totalorder %s47, %s48
      %p57 = scmp.eq.s32.totalorder %s16, 0
      %p58 = por %p56, %p57
      %p59 = scmp.ne.s32.totalorder %s47, %s48
      %p60 = scmp.eq.s32.totalorder %s17, 1
      %p61 = por %p59, %p60
      %p63 = scmp.ne.s32.totalorder %s48, %s62
      %p64 = scmp.eq.s32.totalorder %s17, 0
      %p65 = por %p63, %p64
      %s67 = sadd.s32 %s66, 1
      %p70 = scmp.eq.s32.totalorder %s11, 1
      %p71 = scmp.ne.s32.totalorder %s66, %s68
      %p72 = scmp.eq.s32.totalorder %s11, 0
      %p73 = por %p71, %p72
      %p74 = scmp.ne.s32.totalorder %s66, %s68
      %p75 = scmp.eq.s32.totalorder %s16, 1
      %p76 = por %p74, %p75
      %p77 = scmp.ne.s32.totalorder %s68, %s69
      %p78 = scmp.eq.s32.totalorder %s16, 0
      %p79 = por %p77, %p78
      %p80 = scmp.ne.s32.totalorder %s68, %s69
      %p81 = scmp.eq.s32.totalorder %s17, 1
      %p82 = por %p80, %p81
      %p84 = scmp.ne.s32.totalorder %s69, %s83
      %p85 = scmp.eq.s32.totalorder %s17, 0
      %p86 = por %p84, %p85
      %s87 = ssub.s32 %s11, %s18
      %p88 = scmp.eq.s32.totalorder %s87, 0
      %s90 = sadd.s32 %s89, 1
      %s91 = scalar_select %p88, %s89, %s90
      %p94 = pneg %p88
      %p95 = scmp.eq.s32.totalorder %s11, 1
      %p96 = por %p94, %p95
      %p97 = scmp.ne.s32.totalorder %s89, %s92
      %p98 = scmp.eq.s32.totalorder %s11, 0
      %p99 = por %p97, %p98
      %p100 = scmp.ne.s32.totalorder %s89, %s92
      %p101 = scmp.eq.s32.totalorder %s16, 1
      %p102 = por %p100, %p101
      %p103 = scmp.ne.s32.totalorder %s92, %s93
      %p104 = scmp.eq.s32.totalorder %s16, 0
      %p105 = por %p103, %p104
      %p106 = scmp.ne.s32.totalorder %s92, %s93
      %p107 = scmp.eq.s32.totalorder %s17, 1
      %p108 = por %p106, %p107
      %p110 = scmp.ne.s32.totalorder %s93, %s109
      %p111 = scmp.eq.s32.totalorder %s17, 0
      %p112 = por %p110, %p111
      %s113 = ssub.s32 %s11, %s18
      %p114 = scmp.eq.s32.totalorder %s113, 0
      %s116 = sadd.s32 %s115, 1
      %s117 = scalar_select %p114, %s115, %s116
      %p120 = pneg %p114
      %p121 = scmp.eq.s32.totalorder %s11, 1
      %p122 = por %p120, %p121
      %p123 = scmp.ne.s32.totalorder %s115, %s118
      %p124 = scmp.eq.s32.totalorder %s11, 0
      %p125 = por %p123, %p124
      %p126 = scmp.ne.s32.totalorder %s115, %s118
      %p127 = scmp.eq.s32.totalorder %s16, 1
      %p128 = por %p126, %p127
      %p129 = scmp.ne.s32.totalorder %s118, %s119
      %p130 = scmp.eq.s32.totalorder %s16, 0
      %p131 = por %p129, %p130
      %p132 = scmp.ne.s32.totalorder %s118, %s119
      %p133 = scmp.eq.s32.totalorder %s17, 1
      %p134 = por %p132, %p133
      %p136 = scmp.ne.s32.totalorder %s119, %s135
      %p137 = scmp.eq.s32.totalorder %s17, 0
      %p138 = por %p136, %p137
      %p139 = scmp.le.s32.totalorder 1, %s11
      %p140 = scmp.lt.s32.totalorder %s11, 3
      %p141 = pnand %p139, %p140
      %p142 = pneg %p141
      // Predicated region
      $region9: #{up_conv_pallas.2} parent=5 // pred_check
        _
      $region10: #{up_conv_pallas.2} parent=5 // pred_check_branch
        %144 = sbr.rel (%p141) target = $region12
      $region11: #{up_conv_pallas.2} parent=5 // pred_region
        %s145 = ssub.s32 %s11, 1
        // Predicated region
        $region13: #{up_conv_pallas.2} parent=11 // pred_check
          %p146 = pneg %p58
        $region14: #{up_conv_pallas.2} parent=11 // pred_check_branch
          %148 = sbr.rel (%p146) target = $region16
        $region15: #{up_conv_pallas.2} parent=11 // pred_region
          _
        $region16: #{up_conv_pallas.2} parent=11 // pred_fallthru
          _
        // Predicated region
        $region17: #{up_conv_pallas.2} parent=11 // pred_check
          %p149 = pneg %p79
        $region18: #{up_conv_pallas.2} parent=11 // pred_check_branch
          %151 = sbr.rel (%p149) target = $region20
        $region19: #{up_conv_pallas.2} parent=11 // pred_region
          _
        $region20: #{up_conv_pallas.2} parent=11 // pred_fallthru
          _
      $region12: #{up_conv_pallas.2} parent=5 // pred_fallthru
        _
      %p152 = scmp.lt.s32.totalorder %s11, 2
      // Predicated region
      $region21: #{up_conv_pallas.2} parent=5 // pred_check
        %p153 = pneg %p152
      $region22: #{up_conv_pallas.2} parent=5 // pred_check_branch
        %155 = sbr.rel (%p153) target = $region24
      $region23: #{up_conv_pallas.2} parent=5 // pred_region
        // Predicated region
        $region25: #{up_conv_pallas.2} parent=23 // pred_check
          %p156 = pneg %p31
        $region26: #{up_conv_pallas.2} parent=23 // pred_check_branch
          %158 = sbr.rel (%p156) target = $region28
        $region27: #{up_conv_pallas.2} parent=23 // pred_region
          %p159 = scmp.lt.s32.totalorder %s11, 1
          %s160 = scalar_select %p159, %s11, 1
          %s161 = smul.addr %s160, 54
          %s162 = smul.addr %s161, 4
          %s163 = scalar_lea.vmem %s0, %s162
        $region28: #{up_conv_pallas.2} parent=23 // pred_fallthru
          _
      $region24: #{up_conv_pallas.2} parent=5 // pred_fallthru
        _
      %p164 = scmp.le.s32.totalorder 1, %s11
      %p165 = scmp.lt.s32.totalorder %s11, 3
      %p166 = pnand %p164, %p165
      %p167 = pneg %p166
      // Predicated region
      $region29: #{up_conv_pallas.2} parent=5 // pred_check
        _
      $region30: #{up_conv_pallas.2} parent=5 // pred_check_branch
        %169 = sbr.rel (%p166) target = $region32
      $region31: #{up_conv_pallas.2} parent=5 // pred_region
        %s170 = ssub.s32 %s11, 1
        %p171 = scmp.lt.s32.totalorder %s16, 1
        %s172 = scalar_select %p171, %s16, 1
        %s173 = smul.addr %s172, 54
        %s174 = smul.addr %s173, 4
        %s175 = scalar_lea.vmem %s0, %s174
        %p176 = pneg %p37
        %p177 = pneg %p34
        %p178 = pneg %p58
        %p179 = pneg %p55
        %p180 = pneg %p79
        %p181 = pneg %p76
        %p182 = pneg %p105
        %p183 = pneg %p102
        %s184 = sand.u32 %s92, 1
        %s185 = sand.u32 %s92, 1
        %s186 = smul.addr %s185, 512
        %s187 = scalar_lea.vmem [#allocation2], %s186
        %p188 = pneg %p131
        %p189 = pneg %p128
        %p190 = scmp.lt.s32.totalorder %s16, 1
        %s191 = scalar_select %p190, %s16, 1
        %s192 = smul.addr %s191, 2
        %s193 = scalar_lea.vmem %s4, %s192
        %p194 = scmp.lt.s32.totalorder %s16, 1
        %s195 = scalar_select %p194, %s16, 1
        %s196 = smul.addr %s195, 54
        %s197 = smul.addr %s196, 4
        %s198 = scalar_lea.vmem %s0, %s197
        %p199 = scmp.lt.s32.totalorder %s16, 1
        %s200 = scalar_select %p199, %s16, 1
        %s201 = smul.addr %s200, 2
        %s202 = scalar_lea.vmem %s4, %s201
        %v204 = vld [vmem:[%s198] sm:$0xf]
        %v205 = vld [vmem:[%s198 + $0x4] sm:$0xf]
        %v206 = vld [vmem:[%s198 + $0xc] sm:$0xf]
        %v207 = vld [vmem:[%s198 + $0x10] sm:$0xf]
        %v208 = vld [vmem:[%s198 + $0x18] sm:$0xf]
        %v209 = vld [vmem:[%s198 + $0x1c] sm:$0xf]
        %v210 = vld [vmem:[%s198 + $0x24] sm:$0xf]
        %v211 = vld [vmem:[%s198 + $0x28] sm:$0xf]
        %v212 = vld [vmem:[%s198 + $0x30] sm:$0xf]
        %v213 = vld [vmem:[%s198 + $0x34] sm:$0xf]
        %v214 = vld [vmem:[%s198 + $0x3c] sm:$0xf]
        %v215 = vld [vmem:[%s198 + $0x40] sm:$0xf]
        %v216 = vld [vmem:[%s198 + $0x48] sm:$0xf]
        %v217 = vld [vmem:[%s198 + $0x4c] sm:$0xf]
        %v218 = vld [vmem:[%s198 + $0x54] sm:$0xf]
        %v219 = vld [vmem:[%s198 + $0x58] sm:$0xf]
        %v220 = vld [vmem:[%s198 + $0x60] sm:$0xf]
        %v221 = vld [vmem:[%s198 + $0x64] sm:$0xf]
        %v222 = vld [vmem:[%s198 + $0x6c] sm:$0xf]
        %v223 = vld [vmem:[%s198 + $0x70] sm:$0xf]
        %v224 = vld [vmem:[%s198 + $0x78] sm:$0xf]
        %v225 = vld [vmem:[%s198 + $0x7c] sm:$0xf]
        %v226 = vld [vmem:[%s198 + $0x84] sm:$0xf]
        %v227 = vld [vmem:[%s198 + $0x88] sm:$0xf]
        %v228 = vld [vmem:[%s198 + $0x90] sm:$0xf]
        %v229 = vld [vmem:[%s198 + $0x94] sm:$0xf]
        %v230 = vld [vmem:[%s198 + $0x9c] sm:$0xf]
        %v231 = vld [vmem:[%s198 + $0xa0] sm:$0xf]
        %v232 = vld [vmem:[%s198 + $0xa8] sm:$0xf]
        %v233 = vld [vmem:[%s198 + $0xac] sm:$0xf]
        %v234 = vld [vmem:[%s198 + $0xb4] sm:$0xf]
        %v235 = vld [vmem:[%s198 + $0xb8] sm:$0xf]
        %s236 = scalar_lea.vmem %s198, 12
        %v237 = vld [vmem:[%s236] sm:$0xf]
        %v238 = vld [vmem:[%s236 + $0x4] sm:$0xf]
        %v239 = vld [vmem:[%s236 + $0xc] sm:$0xf]
        %v240 = vld [vmem:[%s236 + $0x10] sm:$0xf]
        %v241 = vld [vmem:[%s236 + $0x18] sm:$0xf]
        %v242 = vld [vmem:[%s236 + $0x1c] sm:$0xf]
        %v243 = vld [vmem:[%s236 + $0x24] sm:$0xf]
        %v244 = vld [vmem:[%s236 + $0x28] sm:$0xf]
        %v245 = vld [vmem:[%s236 + $0x30] sm:$0xf]
        %v246 = vld [vmem:[%s236 + $0x34] sm:$0xf]
        %v247 = vld [vmem:[%s236 + $0x3c] sm:$0xf]
        %v248 = vld [vmem:[%s236 + $0x40] sm:$0xf]
        %v249 = vld [vmem:[%s236 + $0x48] sm:$0xf]
        %v250 = vld [vmem:[%s236 + $0x4c] sm:$0xf]
        %v251 = vld [vmem:[%s236 + $0x54] sm:$0xf]
        %v252 = vld [vmem:[%s236 + $0x58] sm:$0xf]
        %v253 = vld [vmem:[%s236 + $0x60] sm:$0xf]
        %v254 = vld [vmem:[%s236 + $0x64] sm:$0xf]
        %v255 = vld [vmem:[%s236 + $0x6c] sm:$0xf]
        %v256 = vld [vmem:[%s236 + $0x70] sm:$0xf]
        %v257 = vld [vmem:[%s236 + $0x78] sm:$0xf]
        %v258 = vld [vmem:[%s236 + $0x7c] sm:$0xf]
        %v259 = vld [vmem:[%s236 + $0x84] sm:$0xf]
        %v260 = vld [vmem:[%s236 + $0x88] sm:$0xf]
        %v261 = vld [vmem:[%s236 + $0x90] sm:$0xf]
        %v262 = vld [vmem:[%s236 + $0x94] sm:$0xf]
        %v263 = vld [vmem:[%s236 + $0x9c] sm:$0xf]
        %v264 = vld [vmem:[%s236 + $0xa0] sm:$0xf]
        %v265 = vld [vmem:[%s236 + $0xa8] sm:$0xf]
        %v266 = vld [vmem:[%s236 + $0xac] sm:$0xf]
        %v267 = vld [vmem:[%s236 + $0xb4] sm:$0xf]
        %v268 = vld [vmem:[%s236 + $0xb8] sm:$0xf]
        %s269 = scalar_lea.vmem %s198, 24
        %v270 = vld [vmem:[%s269] sm:$0xf]
        %v271 = vld [vmem:[%s269 + $0x4] sm:$0xf]
        %v272 = vld [vmem:[%s269 + $0xc] sm:$0xf]
        %v273 = vld [vmem:[%s269 + $0x10] sm:$0xf]
        %v274 = vld [vmem:[%s269 + $0x18] sm:$0xf]
        %v275 = vld [vmem:[%s269 + $0x1c] sm:$0xf]
        %v276 = vld [vmem:[%s269 + $0x24] sm:$0xf]
        %v277 = vld [vmem:[%s269 + $0x28] sm:$0xf]
        %v278 = vld [vmem:[%s269 + $0x30] sm:$0xf]
        %v279 = vld [vmem:[%s269 + $0x34] sm:$0xf]
        %v280 = vld [vmem:[%s269 + $0x3c] sm:$0xf]
        %v281 = vld [vmem:[%s269 + $0x40] sm:$0xf]
        %v282 = vld [vmem:[%s269 + $0x48] sm:$0xf]
        %v283 = vld [vmem:[%s269 + $0x4c] sm:$0xf]
        %v284 = vld [vmem:[%s269 + $0x54] sm:$0xf]
        %v285 = vld [vmem:[%s269 + $0x58] sm:$0xf]
        %v286 = vld [vmem:[%s269 + $0x60] sm:$0xf]
        %v287 = vld [vmem:[%s269 + $0x64] sm:$0xf]
        %v288 = vld [vmem:[%s269 + $0x6c] sm:$0xf]
        %v289 = vld [vmem:[%s269 + $0x70] sm:$0xf]
        %v290 = vld [vmem:[%s269 + $0x78] sm:$0xf]
        %v291 = vld [vmem:[%s269 + $0x7c] sm:$0xf]
        %v292 = vld [vmem:[%s269 + $0x84] sm:$0xf]
        %v293 = vld [vmem:[%s269 + $0x88] sm:$0xf]
        %v294 = vld [vmem:[%s269 + $0x90] sm:$0xf]
        %v295 = vld [vmem:[%s269 + $0x94] sm:$0xf]
        %v296 = vld [vmem:[%s269 + $0x9c] sm:$0xf]
        %v297 = vld [vmem:[%s269 + $0xa0] sm:$0xf]
        %v298 = vld [vmem:[%s269 + $0xa8] sm:$0xf]
        %v299 = vld [vmem:[%s269 + $0xac] sm:$0xf]
        %v300 = vld [vmem:[%s269 + $0xb4] sm:$0xf]
        %v301 = vld [vmem:[%s269 + $0xb8] sm:$0xf]
        %v302 = vld [vmem:[%s1] sm:$0x3]
        %s303 = scalar_lea.vmem %s1, 6
        %v304 = vld [vmem:[%s303] sm:$0x3]
        %v337 = vunpack.c.l.b16 %v237
        %v338 = vunpack.c.l.b16 %v238
        %v339 = vunpack.c.l.b16 %v239
        %v340 = vunpack.c.l.b16 %v240
        %v341 = vunpack.c.l.b16 %v241
        %v342 = vunpack.c.l.b16 %v242
        %v343 = vunpack.c.l.b16 %v243
        %v344 = vunpack.c.l.b16 %v244
        %v345 = vunpack.c.l.b16 %v245
        %v346 = vunpack.c.l.b16 %v246
        %v347 = vunpack.c.l.b16 %v247
        %v348 = vunpack.c.l.b16 %v248
        %v349 = vunpack.c.l.b16 %v249
        %v350 = vunpack.c.l.b16 %v250
        %v351 = vunpack.c.l.b16 %v251
        %v352 = vunpack.c.l.b16 %v252
        %v353 = vunpack.c.l.b16 %v253
        %v354 = vunpack.c.l.b16 %v254
        %v355 = vunpack.c.l.b16 %v255
        %v356 = vunpack.c.l.b16 %v256
        %v357 = vunpack.c.l.b16 %v257
        %v358 = vunpack.c.l.b16 %v258
        %v359 = vunpack.c.l.b16 %v259
        %v360 = vunpack.c.l.b16 %v260
        %v361 = vunpack.c.l.b16 %v261
        %v362 = vunpack.c.l.b16 %v262
        %v363 = vunpack.c.l.b16 %v263
        %v364 = vunpack.c.l.b16 %v264
        %v365 = vunpack.c.l.b16 %v265
        %v366 = vunpack.c.l.b16 %v266
        %v367 = vunpack.c.l.b16 %v267
        %v368 = vunpack.c.l.b16 %v268
        %v369 = vpack.c.b16 %v338, %v337
        %v370 = vpack.c.b16 %v340, %v339
        %v371 = vpack.c.b16 %v342, %v341
        %v372 = vpack.c.b16 %v344, %v343
        %v373 = vpack.c.b16 %v346, %v345
        %v374 = vpack.c.b16 %v348, %v347
        %v375 = vpack.c.b16 %v350, %v349
        %v376 = vpack.c.b16 %v352, %v351
        %v377 = vpack.c.b16 %v354, %v353
        %v378 = vpack.c.b16 %v356, %v355
        %v379 = vpack.c.b16 %v358, %v357
        %v380 = vpack.c.b16 %v360, %v359
        %v381 = vpack.c.b16 %v362, %v361
        %v382 = vpack.c.b16 %v364, %v363
        %v383 = vpack.c.b16 %v366, %v365
        %v384 = vpack.c.b16 %v368, %v367
        %vm385 = vcmask 31744
        %v387 = vsel %vm385, %v369, 0
        %v390 = vsel %vm385, %v370, 0
        %v393 = vsel %vm385, %v371, 0
        %v396 = vsel %vm385, %v372, 0
        %v399 = vsel %vm385, %v373, 0
        %v402 = vsel %vm385, %v374, 0
        %v405 = vsel %vm385, %v375, 0
        %v408 = vsel %vm385, %v376, 0
        %v411 = vsel %vm385, %v377, 0
        %v414 = vsel %vm385, %v378, 0
        %v417 = vsel %vm385, %v379, 0
        %v420 = vsel %vm385, %v380, 0
        %v423 = vsel %vm385, %v381, 0
        %v426 = vsel %vm385, %v382, 0
        %v429 = vsel %vm385, %v383, 0
        %v432 = vsel %vm385, %v384, 0
        %vm434 = vcmask 1041408
        %v436 = vsel %vm434, %v304, 0
        %438 = vmatprep.subr.bf16.mxu0 0
        %439 = vmatpush1.bf16.msra.mxu0 %v436
        %440 = vmatprep.subr.bf16.mxu0 0
        %441 = vmatpush1.bf16.msra.mxu0 0
        %442 = vmatprep.subr.bf16.mxu0 0
        %443 = vmatpush1.bf16.msra.mxu0 0
        %444 = vmatprep.subr.bf16.mxu0 0
        %445 = vmatpush1.bf16.msra.mxu0 0
        %446 = vmatprep.subr.bf16.mxu0 0
        %447 = vmatpush1.bf16.msra.mxu0 0
        %448 = vmatprep.subr.bf16.mxu0 0
        %449 = vmatpush1.bf16.msra.mxu0 0
        %450 = vmatprep.subr.bf16.mxu0 0
        %451 = vmatpush1.bf16.msra.mxu0 0
        %452 = vmatprep.subr.bf16.mxu0 0
        %453 = vmatpush1.bf16.msra.mxu0 0
        %454 = vmatprep.subr.bf16.mxu0 0
        %455 = vmatpush1.bf16.msra.mxu0 0
        %456 = vmatprep.subr.bf16.mxu0 0
        %457 = vmatpush1.bf16.msra.mxu0 0
        %458 = vmatprep.subr.bf16.mxu0 0
        %459 = vmatpush1.bf16.msra.mxu0 0
        %460 = vmatprep.subr.bf16.mxu0 0
        %461 = vmatpush1.bf16.msra.mxu0 0
        %462 = vmatprep.subr.bf16.mxu0 0
        %463 = vmatpush1.bf16.msra.mxu0 0
        %464 = vmatprep.subr.bf16.mxu0 0
        %465 = vmatpush1.bf16.msra.mxu0 0
        %466 = vmatprep.subr.bf16.mxu0 0
        %467 = vmatpush1.bf16.msra.mxu0 0
        %468 = vmatprep.subr.bf16.mxu0 0
        %469 = vmatpush1.bf16.msra.mxu0 0
        %470 = vmatprep.mubr.bf16.mxu0 0
        %471 = vmatmul.mubr.bf16.gmra.mrb[0].mxu0 %v387
        %v472 = vpop.f32.mrb[0].mxu0
        %v473 = vadd.f32 0.0, %v472
        %v474 = vpop.f32.mrb[0].mxu0
        %v475 = vpop.f32.mrb[0].mxu0
        %v476 = vadd.f32 0.0, %v475
        %v477 = vpop.f32.mrb[0].mxu0
        %478 = vmatprep.mubr.bf16.mxu0 0
        %479 = vmatmul.mubr.bf16.gmra.mrb[0].mxu0 %v390
        %v480 = vpop.f32.mrb[0].mxu0
        %v481 = vadd.f32 0.0, %v480
        %v482 = vpop.f32.mrb[0].mxu0
        %v483 = vpop.f32.mrb[0].mxu0
        %v484 = vadd.f32 0.0, %v483
        %v485 = vpop.f32.mrb[0].mxu0
        %486 = vmatprep.mubr.bf16.mxu0 0
        %487 = vmatmul.mubr.bf16.gmra.mrb[0].mxu0 %v393
        %v488 = vpop.f32.mrb[0].mxu0
        %v489 = vadd.f32 0.0, %v488
        %v490 = vpop.f32.mrb[0].mxu0
        %v491 = vpop.f32.mrb[0].mxu0
        %v492 = vadd.f32 0.0, %v491
        %v493 = vpop.f32.mrb[0].mxu0
        %494 = vmatprep.mubr.bf16.mxu0 0
        %495 = vmatmul.mubr.bf16.gmra.mrb[0].mxu0 %v396
        %v496 = vpop.f32.mrb[0].mxu0
        %v497 = vadd.f32 0.0, %v496
        %v498 = vpop.f32.mrb[0].mxu0
        %v499 = vpop.f32.mrb[0].mxu0
        %v500 = vadd.f32 0.0, %v499
        %v501 = vpop.f32.mrb[0].mxu0
        %502 = vmatprep.mubr.bf16.mxu0 0
        %503 = vmatmul.mubr.bf16.gmra.mrb[0].mxu0 %v399
        %v504 = vpop.f32.mrb[0].mxu0
        %v505 = vadd.f32 0.0, %v504
        %v506 = vpop.f32.mrb[0].mxu0
        %v507 = vpop.f32.mrb[0].mxu0
        %v508 = vadd.f32 0.0, %v507
        %v509 = vpop.f32.mrb[0].mxu0
        %510 = vmatprep.mubr.bf16.mxu0 0
        %511 = vmatmul.mubr.bf16.gmra.mrb[0].mxu0 %v402
        %v512 = vpop.f32.mrb[0].mxu0
        %v513 = vadd.f32 0.0, %v512
        %v514 = vpop.f32.mrb[0].mxu0
        %v515 = vpop.f32.mrb[0].mxu0
        %v516 = vadd.f32 0.0, %v515
        %v517 = vpop.f32.mrb[0].mxu0
        %518 = vmatprep.mubr.bf16.mxu0 0
        %519 = vmatmul.mubr.bf16.gmra.mrb[0].mxu0 %v405
        %v520 = vpop.f32.mrb[0].mxu0
        %v521 = vadd.f32 0.0, %v520
        %v522 = vpop.f32.mrb[0].mxu0
        %v523 = vpop.f32.mrb[0].mxu0
        %v524 = vadd.f32 0.0, %v523
        %v525 = vpop.f32.mrb[0].mxu0
        %526 = vmatprep.mubr.bf16.mxu0 0
        %527 = vmatmul.mubr.bf16.gmra.mrb[0].mxu0 %v408
        %v528 = vpop.f32.mrb[0].mxu0
        %v529 = vadd.f32 0.0, %v528
        %v530 = vpop.f32.mrb[0].mxu0
        %v531 = vpop.f32.mrb[0].mxu0
        %v532 = vadd.f32 0.0, %v531
        %v533 = vpop.f32.mrb[0].mxu0
        %534 = vmatprep.mubr.bf16.mxu0 0
        %535 = vmatmul.mubr.bf16.gmra.mrb[0].mxu0 %v411
        %v536 = vpop.f32.mrb[0].mxu0
        %v537 = vadd.f32 0.0, %v536
        %v538 = vpop.f32.mrb[0].mxu0
        %v539 = vpop.f32.mrb[0].mxu0
        %v540 = vadd.f32 0.0, %v539
        %v541 = vpop.f32.mrb[0].mxu0
        %542 = vmatprep.mubr.bf16.mxu0 0
        %543 = vmatmul.mubr.bf16.gmra.mrb[0].mxu0 %v414
        %v544 = vpop.f32.mrb[0].mxu0
        %v545 = vadd.f32 0.0, %v544
        %v546 = vpop.f32.mrb[0].mxu0
        %v547 = vpop.f32.mrb[0].mxu0
        %v548 = vadd.f32 0.0, %v547
        %v549 = vpop.f32.mrb[0].mxu0
        %550 = vmatprep.mubr.bf16.mxu0 0
        %551 = vmatmul.mubr.bf16.gmra.mrb[0].mxu0 %v417
        %v552 = vpop.f32.mrb[0].mxu0
        %v553 = vadd.f32 0.0, %v552
        %v554 = vpop.f32.mrb[0].mxu0
        %v555 = vpop.f32.mrb[0].mxu0
        %v556 = vadd.f32 0.0, %v555
        %v557 = vpop.f32.mrb[0].mxu0
        %558 = vmatprep.mubr.bf16.mxu0 0
        %559 = vmatmul.mubr.bf16.gmra.mrb[0].mxu0 %v420
        %v560 = vpop.f32.mrb[0].mxu0
        %v561 = vadd.f32 0.0, %v560
        %v562 = vpop.f32.mrb[0].mxu0
        %v563 = vpop.f32.mrb[0].mxu0
        %v564 = vadd.f32 0.0, %v563
        %v565 = vpop.f32.mrb[0].mxu0
        %566 = vmatprep.mubr.bf16.mxu0 0
        %567 = vmatmul.mubr.bf16.gmra.mrb[0].mxu0 %v423
        %v568 = vpop.f32.mrb[0].mxu0
        %v569 = vadd.f32 0.0, %v568
        %v570 = vpop.f32.mrb[0].mxu0
        %v571 = vpop.f32.mrb[0].mxu0
        %v572 = vadd.f32 0.0, %v571
        %v573 = vpop.f32.mrb[0].mxu0
        %574 = vmatprep.mubr.bf16.mxu0 0
        %575 = vmatmul.mubr.bf16.gmra.mrb[0].mxu0 %v426
        %v576 = vpop.f32.mrb[0].mxu0
        %v577 = vadd.f32 0.0, %v576
        %v578 = vpop.f32.mrb[0].mxu0
        %v579 = vpop.f32.mrb[0].mxu0
        %v580 = vadd.f32 0.0, %v579
        %v581 = vpop.f32.mrb[0].mxu0
        %582 = vmatprep.mubr.bf16.mxu0 0
        %583 = vmatmul.mubr.bf16.gmra.mrb[0].mxu0 %v429
        %v584 = vpop.f32.mrb[0].mxu0
        %v585 = vadd.f32 0.0, %v584
        %v586 = vpop.f32.mrb[0].mxu0
        %v587 = vpop.f32.mrb[0].mxu0
        %v588 = vadd.f32 0.0, %v587
        %v589 = vpop.f32.mrb[0].mxu0
        %590 = vmatprep.mubr.bf16.mxu0 0
        %591 = vmatmul.mubr.bf16.gmra.mrb[0].mxu0 %v432
        %v592 = vpop.f32.mrb[0].mxu0
        %v593 = vadd.f32 0.0, %v592
        %v594 = vpop.f32.mrb[0].mxu0
        %v595 = vpop.f32.mrb[0].mxu0
        %v596 = vadd.f32 0.0, %v595
        %v597 = vpop.f32.mrb[0].mxu0
        %598 = vdwg.mxu0
        %v631 = vunpack.c.l.b16 %v204
        %v632 = vunpack.c.l.b16 %v205
        %v633 = vunpack.c.l.b16 %v206
        %v634 = vunpack.c.l.b16 %v207
        %v635 = vunpack.c.l.b16 %v208
        %v636 = vunpack.c.l.b16 %v209
        %v637 = vunpack.c.l.b16 %v210
        %v638 = vunpack.c.l.b16 %v211
        %v639 = vunpack.c.l.b16 %v212
        %v640 = vunpack.c.l.b16 %v213
        %v641 = vunpack.c.l.b16 %v214
        %v642 = vunpack.c.l.b16 %v215
        %v643 = vunpack.c.l.b16 %v216
        %v644 = vunpack.c.l.b16 %v217
        %v645 = vunpack.c.l.b16 %v218
        %v646 = vunpack.c.l.b16 %v219
        %v647 = vunpack.c.l.b16 %v220
        %v648 = vunpack.c.l.b16 %v221
        %v649 = vunpack.c.l.b16 %v222
        %v650 = vunpack.c.l.b16 %v223
        %v651 = vunpack.c.l.b16 %v224
        %v652 = vunpack.c.l.b16 %v225
        %v653 = vunpack.c.l.b16 %v226
        %v654 = vunpack.c.l.b16 %v227
        %v655 = vunpack.c.l.b16 %v228
        %v656 = vunpack.c.l.b16 %v229
        %v657 = vunpack.c.l.b16 %v230
        %v658 = vunpack.c.l.b16 %v231
        %v659 = vunpack.c.l.b16 %v232
        %v660 = vunpack.c.l.b16 %v233
        %v661 = vunpack.c.l.b16 %v234
        %v662 = vunpack.c.l.b16 %v235
        %v663 = vpack.c.b16 %v632, %v631
        %v664 = vpack.c.b16 %v634, %v633
        %v665 = vpack.c.b16 %v636, %v635
        %v666 = vpack.c.b16 %v638, %v637
        %v667 = vpack.c.b16 %v640, %v639
        %v668 = vpack.c.b16 %v642, %v641
        %v669 = vpack.c.b16 %v644, %v643
        %v670 = vpack.c.b16 %v646, %v645
        %v671 = vpack.c.b16 %v648, %v647
        %v672 = vpack.c.b16 %v650, %v649
        %v673 = vpack.c.b16 %v652, %v651
        %v674 = vpack.c.b16 %v654, %v653
        %v675 = vpack.c.b16 %v656, %v655
        %v676 = vpack.c.b16 %v658, %v657
        %v677 = vpack.c.b16 %v660, %v659
        %v678 = vpack.c.b16 %v662, %v661
        %v680 = vsel %vm385, %v663, 0
        %v683 = vsel %vm385, %v664, 0
        %v686 = vsel %vm385, %v665, 0
        %v689 = vsel %vm385, %v666, 0
        %v692 = vsel %vm385, %v667, 0
        %v695 = vsel %vm385, %v668, 0
        %v698 = vsel %vm385, %v669, 0
        %v701 = vsel %vm385, %v670, 0
        %v704 = vsel %vm385, %v671, 0
        %v707 = vsel %vm385, %v672, 0
        %v710 = vsel %vm385, %v673, 0
        %v713 = vsel %vm385, %v674, 0
        %v716 = vsel %vm385, %v675, 0
        %v719 = vsel %vm385, %v676, 0
        %v722 = vsel %vm385, %v677, 0
        %v725 = vsel %vm385, %v678, 0
        %v728 = vsel %vm434, %v302, 0
        %730 = vmatprep.subr.bf16.mxu0 0
        %731 = vmatpush1.bf16.msra.mxu0 %v728
        %732 = vmatprep.subr.bf16.mxu0 0
        %733 = vmatpush1.bf16.msra.mxu0 0
        %734 = vmatprep.subr.bf16.mxu0 0
        %735 = vmatpush1.bf16.msra.mxu0 0
        %736 = vmatprep.subr.bf16.mxu0 0
        %737 = vmatpush1.bf16.msra.mxu0 0
        %738 = vmatprep.subr.bf16.mxu0 0
        %739 = vmatpush1.bf16.msra.mxu0 0
        %740 = vmatprep.subr.bf16.mxu0 0
        %741 = vmatpush1.bf16.msra.mxu0 0
        %742 = vmatprep.subr.bf16.mxu0 0
        %743 = vmatpush1.bf16.msra.mxu0 0
        %744 = vmatprep.subr.bf16.mxu0 0
        %745 = vmatpush1.bf16.msra.mxu0 0
        %746 = vmatprep.subr.bf16.mxu0 0
        %747 = vmatpush1.bf16.msra.mxu0 0
        %748 = vmatprep.subr.bf16.mxu0 0
        %749 = vmatpush1.bf16.msra.mxu0 0
        %750 = vmatprep.subr.bf16.mxu0 0
        %751 = vmatpush1.bf16.msra.mxu0 0
        %752 = vmatprep.subr.bf16.mxu0 0
        %753 = vmatpush1.bf16.msra.mxu0 0
        %754 = vmatprep.subr.bf16.mxu0 0
        %755 = vmatpush1.bf16.msra.mxu0 0
        %756 = vmatprep.subr.bf16.mxu0 0
        %757 = vmatpush1.bf16.msra.mxu0 0
        %758 = vmatprep.subr.bf16.mxu0 0
        %759 = vmatpush1.bf16.msra.mxu0 0
        %760 = vmatprep.subr.bf16.mxu0 0
        %761 = vmatpush1.bf16.msra.mxu0 0
        %762 = vmatprep.mubr.bf16.mxu0 0
        %763 = vmatmul.mubr.bf16.gmra.mrb[0].mxu0 %v680
        %v764 = vpop.f32.mrb[0].mxu0
        %v765 = vadd.f32 %v473, %v764
        %v766 = vpop.f32.mrb[0].mxu0
        %v767 = vpop.f32.mrb[0].mxu0
        %v768 = vadd.f32 %v476, %v767
        %v769 = vpop.f32.mrb[0].mxu0
        %770 = vmatprep.mubr.bf16.mxu0 0
        %771 = vmatmul.mubr.bf16.gmra.mrb[0].mxu0 %v683
        %v772 = vpop.f32.mrb[0].mxu0
        %v773 = vadd.f32 %v481, %v772
        %v774 = vpop.f32.mrb[0].mxu0
        %v775 = vpop.f32.mrb[0].mxu0
        %v776 = vadd.f32 %v484, %v775
        %v777 = vpop.f32.mrb[0].mxu0
        %778 = vmatprep.mubr.bf16.mxu0 0
        %779 = vmatmul.mubr.bf16.gmra.mrb[0].mxu0 %v686
        %v780 = vpop.f32.mrb[0].mxu0
        %v781 = vadd.f32 %v489, %v780
        %v782 = vpop.f32.mrb[0].mxu0
        %v783 = vpop.f32.mrb[0].mxu0
        %v784 = vadd.f32 %v492, %v783
        %v785 = vpop.f32.mrb[0].mxu0
        %786 = vmatprep.mubr.bf16.mxu0 0
        %787 = vmatmul.mubr.bf16.gmra.mrb[0].mxu0 %v689
        %v788 = vpop.f32.mrb[0].mxu0
        %v789 = vadd.f32 %v497, %v788
        %v790 = vpop.f32.mrb[0].mxu0
        %v791 = vpop.f32.mrb[0].mxu0
        %v792 = vadd.f32 %v500, %v791
        %v793 = vpop.f32.mrb[0].mxu0
        %794 = vmatprep.mubr.bf16.mxu0 0
        %795 = vmatmul.mubr.bf16.gmra.mrb[0].mxu0 %v692
        %v796 = vpop.f32.mrb[0].mxu0
        %v797 = vadd.f32 %v505, %v796
        %v798 = vpop.f32.mrb[0].mxu0
        %v799 = vpop.f32.mrb[0].mxu0
        %v800 = vadd.f32 %v508, %v799
        %v801 = vpop.f32.mrb[0].mxu0
        %802 = vmatprep.mubr.bf16.mxu0 0
        %803 = vmatmul.mubr.bf16.gmra.mrb[0].mxu0 %v695
        %v804 = vpop.f32.mrb[0].mxu0
        %v805 = vadd.f32 %v513, %v804
        %v806 = vpop.f32.mrb[0].mxu0
        %v807 = vpop.f32.mrb[0].mxu0
        %v808 = vadd.f32 %v516, %v807
        %v809 = vpop.f32.mrb[0].mxu0
        %810 = vmatprep.mubr.bf16.mxu0 0
        %811 = vmatmul.mubr.bf16.gmra.mrb[0].mxu0 %v698
        %v812 = vpop.f32.mrb[0].mxu0
        %v813 = vadd.f32 %v521, %v812
        %v814 = vpop.f32.mrb[0].mxu0
        %v815 = vpop.f32.mrb[0].mxu0
        %v816 = vadd.f32 %v524, %v815
        %v817 = vpop.f32.mrb[0].mxu0
        %818 = vmatprep.mubr.bf16.mxu0 0
        %819 = vmatmul.mubr.bf16.gmra.mrb[0].mxu0 %v701
        %v820 = vpop.f32.mrb[0].mxu0
        %v821 = vadd.f32 %v529, %v820
        %v822 = vpop.f32.mrb[0].mxu0
        %v823 = vpop.f32.mrb[0].mxu0
        %v824 = vadd.f32 %v532, %v823
        %v825 = vpop.f32.mrb[0].mxu0
        %826 = vmatprep.mubr.bf16.mxu0 0
        %827 = vmatmul.mubr.bf16.gmra.mrb[0].mxu0 %v704
        %v828 = vpop.f32.mrb[0].mxu0
        %v829 = vadd.f32 %v537, %v828
        %v830 = vpop.f32.mrb[0].mxu0
        %v831 = vpop.f32.mrb[0].mxu0
        %v832 = vadd.f32 %v540, %v831
        %v833 = vpop.f32.mrb[0].mxu0
        %834 = vmatprep.mubr.bf16.mxu0 0
        %835 = vmatmul.mubr.bf16.gmra.mrb[0].mxu0 %v707
        %v836 = vpop.f32.mrb[0].mxu0
        %v837 = vadd.f32 %v545, %v836
        %v838 = vpop.f32.mrb[0].mxu0
        %v839 = vpop.f32.mrb[0].mxu0
        %v840 = vadd.f32 %v548, %v839
        %v841 = vpop.f32.mrb[0].mxu0
        %842 = vmatprep.mubr.bf16.mxu0 0
        %843 = vmatmul.mubr.bf16.gmra.mrb[0].mxu0 %v710
        %v844 = vpop.f32.mrb[0].mxu0
        %v845 = vadd.f32 %v553, %v844
        %v846 = vpop.f32.mrb[0].mxu0
        %v847 = vpop.f32.mrb[0].mxu0
        %v848 = vadd.f32 %v556, %v847
        %v849 = vpop.f32.mrb[0].mxu0
        %850 = vmatprep.mubr.bf16.mxu0 0
        %851 = vmatmul.mubr.bf16.gmra.mrb[0].mxu0 %v713
        %v852 = vpop.f32.mrb[0].mxu0
        %v853 = vadd.f32 %v561, %v852
        %v854 = vpop.f32.mrb[0].mxu0
        %v855 = vpop.f32.mrb[0].mxu0
        %v856 = vadd.f32 %v564, %v855
        %v857 = vpop.f32.mrb[0].mxu0
        %858 = vmatprep.mubr.bf16.mxu0 0
        %859 = vmatmul.mubr.bf16.gmra.mrb[0].mxu0 %v716
        %v860 = vpop.f32.mrb[0].mxu0
        %v861 = vadd.f32 %v569, %v860
        %v862 = vpop.f32.mrb[0].mxu0
        %v863 = vpop.f32.mrb[0].mxu0
        %v864 = vadd.f32 %v572, %v863
        %v865 = vpop.f32.mrb[0].mxu0
        %866 = vmatprep.mubr.bf16.mxu0 0
        %867 = vmatmul.mubr.bf16.gmra.mrb[0].mxu0 %v719
        %v868 = vpop.f32.mrb[0].mxu0
        %v869 = vadd.f32 %v577, %v868
        %v870 = vpop.f32.mrb[0].mxu0
        %v871 = vpop.f32.mrb[0].mxu0
        %v872 = vadd.f32 %v580, %v871
        %v873 = vpop.f32.mrb[0].mxu0
        %874 = vmatprep.mubr.bf16.mxu0 0
        %875 = vmatmul.mubr.bf16.gmra.mrb[0].mxu0 %v722
        %v876 = vpop.f32.mrb[0].mxu0
        %v877 = vadd.f32 %v585, %v876
        %v878 = vpop.f32.mrb[0].mxu0
        %v879 = vpop.f32.mrb[0].mxu0
        %v880 = vadd.f32 %v588, %v879
        %v881 = vpop.f32.mrb[0].mxu0
        %882 = vmatprep.mubr.bf16.mxu0 0
        %883 = vmatmul.mubr.bf16.gmra.mrb[0].mxu0 %v725
        %v884 = vpop.f32.mrb[0].mxu0
        %v885 = vadd.f32 %v593, %v884
        %v886 = vpop.f32.mrb[0].mxu0
        %v887 = vpop.f32.mrb[0].mxu0
        %v888 = vadd.f32 %v596, %v887
        %v889 = vpop.f32.mrb[0].mxu0
        %890 = vdwg.mxu0
        %s891 = scalar_lea.vmem %s1, 12
        %v892 = vld [vmem:[%s891] sm:$0x3]
        %s893 = scalar_lea.vmem %s1, 18
        %v894 = vld [vmem:[%s893] sm:$0x3]
        %v927 = vunpack.c.l.b16 %v270
        %v928 = vunpack.c.l.b16 %v271
        %v929 = vunpack.c.l.b16 %v272
        %v930 = vunpack.c.l.b16 %v273
        %v931 = vunpack.c.l.b16 %v274
        %v932 = vunpack.c.l.b16 %v275
        %v933 = vunpack.c.l.b16 %v276
        %v934 = vunpack.c.l.b16 %v277
        %v935 = vunpack.c.l.b16 %v278
        %v936 = vunpack.c.l.b16 %v279
        %v937 = vunpack.c.l.b16 %v280
        %v938 = vunpack.c.l.b16 %v281
        %v939 = vunpack.c.l.b16 %v282
        %v940 = vunpack.c.l.b16 %v283
        %v941 = vunpack.c.l.b16 %v284
        %v942 = vunpack.c.l.b16 %v285
        %v943 = vunpack.c.l.b16 %v286
        %v944 = vunpack.c.l.b16 %v287
        %v945 = vunpack.c.l.b16 %v288
        %v946 = vunpack.c.l.b16 %v289
        %v947 = vunpack.c.l.b16 %v290
        %v948 = vunpack.c.l.b16 %v291
        %v949 = vunpack.c.l.b16 %v292
        %v950 = vunpack.c.l.b16 %v293
        %v951 = vunpack.c.l.b16 %v294
        %v952 = vunpack.c.l.b16 %v295
        %v953 = vunpack.c.l.b16 %v296
        %v954 = vunpack.c.l.b16 %v297
        %v955 = vunpack.c.l.b16 %v298
        %v956 = vunpack.c.l.b16 %v299
        %v957 = vunpack.c.l.b16 %v300
        %v958 = vunpack.c.l.b16 %v301
        %v959 = vpack.c.b16 %v928, %v927
        %v960 = vpack.c.b16 %v930, %v929
        %v961 = vpack.c.b16 %v932, %v931
        %v962 = vpack.c.b16 %v934, %v933
        %v963 = vpack.c.b16 %v936, %v935
        %v964 = vpack.c.b16 %v938, %v937
        %v965 = vpack.c.b16 %v940, %v939
        %v966 = vpack.c.b16 %v942, %v941
        %v967 = vpack.c.b16 %v944, %v943
        %v968 = vpack.c.b16 %v946, %v945
        %v969 = vpack.c.b16 %v948, %v947
        %v970 = vpack.c.b16 %v950, %v949
        %v971 = vpack.c.b16 %v952, %v951
        %v972 = vpack.c.b16 %v954, %v953
        %v973 = vpack.c.b16 %v956, %v955
        %v974 = vpack.c.b16 %v958, %v957
        %v976 = vsel %vm385, %v959, 0
        %v979 = vsel %vm385, %v960, 0
        %v982 = vsel %vm385, %v961, 0
        %v985 = vsel %vm385, %v962, 0
        %v988 = vsel %vm385, %v963, 0
        %v991 = vsel %vm385, %v964, 0
        %v994 = vsel %vm385, %v965, 0
        %v997 = vsel %vm385, %v966, 0
        %v1000 = vsel %vm385, %v967, 0
        %v1003 = vsel %vm385, %v968, 0
        %v1006 = vsel %vm385, %v969, 0
        %v1009 = vsel %vm385, %v970, 0
        %v1012 = vsel %vm385, %v971, 0
        %v1015 = vsel %vm385, %v972, 0
        %v1018 = vsel %vm385, %v973, 0
        %v1021 = vsel %vm385, %v974, 0
        %v1024 = vsel %vm434, %v894, 0
        %1026 = vmatprep.subr.bf16.mxu0 0
        %1027 = vmatpush1.bf16.msra.mxu0 %v1024
        %1028 = vmatprep.subr.bf16.mxu0 0
        %1029 = vmatpush1.bf16.msra.mxu0 0
        %1030 = vmatprep.subr.bf16.mxu0 0
        %1031 = vmatpush1.bf16.msra.mxu0 0
        %1032 = vmatprep.subr.bf16.mxu0 0
        %1033 = vmatpush1.bf16.msra.mxu0 0
        %1034 = vmatprep.subr.bf16.mxu0 0
        %1035 = vmatpush1.bf16.msra.mxu0 0
        %1036 = vmatprep.subr.bf16.mxu0 0
        %1037 = vmatpush1.bf16.msra.mxu0 0
        %1038 = vmatprep.subr.bf16.mxu0 0
        %1039 = vmatpush1.bf16.msra.mxu0 0
        %1040 = vmatprep.subr.bf16.mxu0 0
        %1041 = vmatpush1.bf16.msra.mxu0 0
        %1042 = vmatprep.subr.bf16.mxu0 0
        %1043 = vmatpush1.bf16.msra.mxu0 0
        %1044 = vmatprep.subr.bf16.mxu0 0
        %1045 = vmatpush1.bf16.msra.mxu0 0
        %1046 = vmatprep.subr.bf16.mxu0 0
        %1047 = vmatpush1.bf16.msra.mxu0 0
        %1048 = vmatprep.subr.bf16.mxu0 0
        %1049 = vmatpush1.bf16.msra.mxu0 0
        %1050 = vmatprep.subr.bf16.mxu0 0
        %1051 = vmatpush1.bf16.msra.mxu0 0
        %1052 = vmatprep.subr.bf16.mxu0 0
        %1053 = vmatpush1.bf16.msra.mxu0 0
        %1054 = vmatprep.subr.bf16.mxu0 0
        %1055 = vmatpush1.bf16.msra.mxu0 0
        %1056 = vmatprep.subr.bf16.mxu0 0
        %1057 = vmatpush1.bf16.msra.mxu0 0
        %1058 = vmatprep.mubr.bf16.mxu0 0
        %1059 = vmatmul.mubr.bf16.gmra.mrb[0].mxu0 %v976
        %v1060 = vpop.f32.mrb[0].mxu0
        %v1061 = vadd.f32 0.0, %v1060
        %v1062 = vpop.f32.mrb[0].mxu0
        %v1063 = vpop.f32.mrb[0].mxu0
        %v1064 = vadd.f32 0.0, %v1063
        %v1065 = vpop.f32.mrb[0].mxu0
        %1066 = vmatprep.mubr.bf16.mxu0 0
        %1067 = vmatmul.mubr.bf16.gmra.mrb[0].mxu0 %v979
        %v1068 = vpop.f32.mrb[0].mxu0
        %v1069 = vadd.f32 0.0, %v1068
        %v1070 = vpop.f32.mrb[0].mxu0
        %v1071 = vpop.f32.mrb[0].mxu0
        %v1072 = vadd.f32 0.0, %v1071
        %v1073 = vpop.f32.mrb[0].mxu0
        %1074 = vmatprep.mubr.bf16.mxu0 0
        %1075 = vmatmul.mubr.bf16.gmra.mrb[0].mxu0 %v982
        %v1076 = vpop.f32.mrb[0].mxu0
        %v1077 = vadd.f32 0.0, %v1076
        %v1078 = vpop.f32.mrb[0].mxu0
        %v1079 = vpop.f32.mrb[0].mxu0
        %v1080 = vadd.f32 0.0, %v1079
        %v1081 = vpop.f32.mrb[0].mxu0
        %1082 = vmatprep.mubr.bf16.mxu0 0
        %1083 = vmatmul.mubr.bf16.gmra.mrb[0].mxu0 %v985
        %v1084 = vpop.f32.mrb[0].mxu0
        %v1085 = vadd.f32 0.0, %v1084
        %v1086 = vpop.f32.mrb[0].mxu0
        %v1087 = vpop.f32.mrb[0].mxu0
        %v1088 = vadd.f32 0.0, %v1087
        %v1089 = vpop.f32.mrb[0].mxu0
        %1090 = vmatprep.mubr.bf16.mxu0 0
        %1091 = vmatmul.mubr.bf16.gmra.mrb[0].mxu0 %v988
        %v1092 = vpop.f32.mrb[0].mxu0
        %v1093 = vadd.f32 0.0, %v1092
        %v1094 = vpop.f32.mrb[0].mxu0
        %v1095 = vpop.f32.mrb[0].mxu0
        %v1096 = vadd.f32 0.0, %v1095
        %v1097 = vpop.f32.mrb[0].mxu0
        %1098 = vmatprep.mubr.bf16.mxu0 0
        %1099 = vmatmul.mubr.bf16.gmra.mrb[0].mxu0 %v991
        %v1100 = vpop.f32.mrb[0].mxu0
        %v1101 = vadd.f32 0.0, %v1100
        %v1102 = vpop.f32.mrb[0].mxu0
        %v1103 = vpop.f32.mrb[0].mxu0
        %v1104 = vadd.f32 0.0, %v1103
        %v1105 = vpop.f32.mrb[0].mxu0
        %1106 = vmatprep.mubr.bf16.mxu0 0
        %1107 = vmatmul.mubr.bf16.gmra.mrb[0].mxu0 %v994
        %v1108 = vpop.f32.mrb[0].mxu0
        %v1109 = vadd.f32 0.0, %v1108
        %v1110 = vpop.f32.mrb[0].mxu0
        %v1111 = vpop.f32.mrb[0].mxu0
        %v1112 = vadd.f32 0.0, %v1111
        %v1113 = vpop.f32.mrb[0].mxu0
        %1114 = vmatprep.mubr.bf16.mxu0 0
        %1115 = vmatmul.mubr.bf16.gmra.mrb[0].mxu0 %v997
        %v1116 = vpop.f32.mrb[0].mxu0
        %v1117 = vadd.f32 0.0, %v1116
        %v1118 = vpop.f32.mrb[0].mxu0
        %v1119 = vpop.f32.mrb[0].mxu0
        %v1120 = vadd.f32 0.0, %v1119
        %v1121 = vpop.f32.mrb[0].mxu0
        %1122 = vmatprep.mubr.bf16.mxu0 0
        %1123 = vmatmul.mubr.bf16.gmra.mrb[0].mxu0 %v1000
        %v1124 = vpop.f32.mrb[0].mxu0
        %v1125 = vadd.f32 0.0, %v1124
        %v1126 = vpop.f32.mrb[0].mxu0
        %v1127 = vpop.f32.mrb[0].mxu0
        %v1128 = vadd.f32 0.0, %v1127
        %v1129 = vpop.f32.mrb[0].mxu0
        %1130 = vmatprep.mubr.bf16.mxu0 0
        %1131 = vmatmul.mubr.bf16.gmra.mrb[0].mxu0 %v1003
        %v1132 = vpop.f32.mrb[0].mxu0
        %v1133 = vadd.f32 0.0, %v1132
        %v1134 = vpop.f32.mrb[0].mxu0
        %v1135 = vpop.f32.mrb[0].mxu0
        %v1136 = vadd.f32 0.0, %v1135
        %v1137 = vpop.f32.mrb[0].mxu0
        %1138 = vmatprep.mubr.bf16.mxu0 0
        %1139 = vmatmul.mubr.bf16.gmra.mrb[0].mxu0 %v1006
        %v1140 = vpop.f32.mrb[0].mxu0
        %v1141 = vadd.f32 0.0, %v1140
        %v1142 = vpop.f32.mrb[0].mxu0
        %v1143 = vpop.f32.mrb[0].mxu0
        %v1144 = vadd.f32 0.0, %v1143
        %v1145 = vpop.f32.mrb[0].mxu0
        %1146 = vmatprep.mubr.bf16.mxu0 0
        %1147 = vmatmul.mubr.bf16.gmra.mrb[0].mxu0 %v1009
        %v1148 = vpop.f32.mrb[0].mxu0
        %v1149 = vadd.f32 0.0, %v1148
        %v1150 = vpop.f32.mrb[0].mxu0
        %v1151 = vpop.f32.mrb[0].mxu0
        %v1152 = vadd.f32 0.0, %v1151
        %v1153 = vpop.f32.mrb[0].mxu0
        %1154 = vmatprep.mubr.bf16.mxu0 0
        %1155 = vmatmul.mubr.bf16.gmra.mrb[0].mxu0 %v1012
        %v1156 = vpop.f32.mrb[0].mxu0
        %v1157 = vadd.f32 0.0, %v1156
        %v1158 = vpop.f32.mrb[0].mxu0
        %v1159 = vpop.f32.mrb[0].mxu0
        %v1160 = vadd.f32 0.0, %v1159
        %v1161 = vpop.f32.mrb[0].mxu0
        %1162 = vmatprep.mubr.bf16.mxu0 0
        %1163 = vmatmul.mubr.bf16.gmra.mrb[0].mxu0 %v1015
        %v1164 = vpop.f32.mrb[0].mxu0
        %v1165 = vadd.f32 0.0, %v1164
        %v1166 = vpop.f32.mrb[0].mxu0
        %v1167 = vpop.f32.mrb[0].mxu0
        %v1168 = vadd.f32 0.0, %v1167
        %v1169 = vpop.f32.mrb[0].mxu0
        %1170 = vmatprep.mubr.bf16.mxu0 0
        %1171 = vmatmul.mubr.bf16.gmra.mrb[0].mxu0 %v1018
        %v1172 = vpop.f32.mrb[0].mxu0
        %v1173 = vadd.f32 0.0, %v1172
        %v1174 = vpop.f32.mrb[0].mxu0
        %v1175 = vpop.f32.mrb[0].mxu0
        %v1176 = vadd.f32 0.0, %v1175
        %v1177 = vpop.f32.mrb[0].mxu0
        %1178 = vmatprep.mubr.bf16.mxu0 0
        %1179 = vmatmul.mubr.bf16.gmra.mrb[0].mxu0 %v1021
        %v1180 = vpop.f32.mrb[0].mxu0
        %v1181 = vadd.f32 0.0, %v1180
        %v1182 = vpop.f32.mrb[0].mxu0
        %v1183 = vpop.f32.mrb[0].mxu0
        %v1184 = vadd.f32 0.0, %v1183
        %v1185 = vpop.f32.mrb[0].mxu0
        %1186 = vdwg.mxu0
        %v1188 = vsel %vm434, %v892, 0
        %1190 = vmatprep.subr.bf16.mxu0 0
        %1191 = vmatpush1.bf16.msra.mxu0 %v1188
        %1192 = vmatprep.subr.bf16.mxu0 0
        %1193 = vmatpush1.bf16.msra.mxu0 0
        %1194 = vmatprep.subr.bf16.mxu0 0
        %1195 = vmatpush1.bf16.msra.mxu0 0
        %1196 = vmatprep.subr.bf16.mxu0 0
        %1197 = vmatpush1.bf16.msra.mxu0 0
        %1198 = vmatprep.subr.bf16.mxu0 0
        %1199 = vmatpush1.bf16.msra.mxu0 0
        %1200 = vmatprep.subr.bf16.mxu0 0
        %1201 = vmatpush1.bf16.msra.mxu0 0
        %1202 = vmatprep.subr.bf16.mxu0 0
        %1203 = vmatpush1.bf16.msra.mxu0 0
        %1204 = vmatprep.subr.bf16.mxu0 0
        %1205 = vmatpush1.bf16.msra.mxu0 0
        %1206 = vmatprep.subr.bf16.mxu0 0
        %1207 = vmatpush1.bf16.msra.mxu0 0
        %1208 = vmatprep.subr.bf16.mxu0 0
        %1209 = vmatpush1.bf16.msra.mxu0 0
        %1210 = vmatprep.subr.bf16.mxu0 0
        %1211 = vmatpush1.bf16.msra.mxu0 0
        %1212 = vmatprep.subr.bf16.mxu0 0
        %1213 = vmatpush1.bf16.msra.mxu0 0
        %1214 = vmatprep.subr.bf16.mxu0 0
        %1215 = vmatpush1.bf16.msra.mxu0 0
        %1216 = vmatprep.subr.bf16.mxu0 0
        %1217 = vmatpush1.bf16.msra.mxu0 0
        %1218 = vmatprep.subr.bf16.mxu0 0
        %1219 = vmatpush1.bf16.msra.mxu0 0
        %1220 = vmatprep.subr.bf16.mxu0 0
        %1221 = vmatpush1.bf16.msra.mxu0 0
        %1222 = vmatprep.mubr.bf16.mxu0 0
        %1223 = vmatmul.mubr.bf16.gmra.mrb[0].mxu0 %v387
        %v1224 = vpop.f32.mrb[0].mxu0
        %v1225 = vadd.f32 %v1061, %v1224
        %v1226 = vpop.f32.mrb[0].mxu0
        %v1227 = vpop.f32.mrb[0].mxu0
        %v1228 = vadd.f32 %v1064, %v1227
        %v1229 = vpop.f32.mrb[0].mxu0
        %1230 = vmatprep.mubr.bf16.mxu0 0
        %1231 = vmatmul.mubr.bf16.gmra.mrb[0].mxu0 %v390
        %v1232 = vpop.f32.mrb[0].mxu0
        %v1233 = vadd.f32 %v1069, %v1232
        %v1234 = vpop.f32.mrb[0].mxu0
        %v1235 = vpop.f32.mrb[0].mxu0
        %v1236 = vadd.f32 %v1072, %v1235
        %v1237 = vpop.f32.mrb[0].mxu0
        %1238 = vmatprep.mubr.bf16.mxu0 0
        %1239 = vmatmul.mubr.bf16.gmra.mrb[0].mxu0 %v393
        %v1240 = vpop.f32.mrb[0].mxu0
        %v1241 = vadd.f32 %v1077, %v1240
        %v1242 = vpop.f32.mrb[0].mxu0
        %v1243 = vpop.f32.mrb[0].mxu0
        %v1244 = vadd.f32 %v1080, %v1243
        %v1245 = vpop.f32.mrb[0].mxu0
        %1246 = vmatprep.mubr.bf16.mxu0 0
        %1247 = vmatmul.mubr.bf16.gmra.mrb[0].mxu0 %v396
        %v1248 = vpop.f32.mrb[0].mxu0
        %v1249 = vadd.f32 %v1085, %v1248
        %v1250 = vpop.f32.mrb[0].mxu0
        %v1251 = vpop.f32.mrb[0].mxu0
        %v1252 = vadd.f32 %v1088, %v1251
        %v1253 = vpop.f32.mrb[0].mxu0
        %1254 = vmatprep.mubr.bf16.mxu0 0
        %1255 = vmatmul.mubr.bf16.gmra.mrb[0].mxu0 %v399
        %v1256 = vpop.f32.mrb[0].mxu0
        %v1257 = vadd.f32 %v1093, %v1256
        %v1258 = vpop.f32.mrb[0].mxu0
        %v1259 = vpop.f32.mrb[0].mxu0
        %v1260 = vadd.f32 %v1096, %v1259
        %v1261 = vpop.f32.mrb[0].mxu0
        %1262 = vmatprep.mubr.bf16.mxu0 0
        %1263 = vmatmul.mubr.bf16.gmra.mrb[0].mxu0 %v402
        %v1264 = vpop.f32.mrb[0].mxu0
        %v1265 = vadd.f32 %v1101, %v1264
        %v1266 = vpop.f32.mrb[0].mxu0
        %v1267 = vpop.f32.mrb[0].mxu0
        %v1268 = vadd.f32 %v1104, %v1267
        %v1269 = vpop.f32.mrb[0].mxu0
        %1270 = vmatprep.mubr.bf16.mxu0 0
        %1271 = vmatmul.mubr.bf16.gmra.mrb[0].mxu0 %v405
        %v1272 = vpop.f32.mrb[0].mxu0
        %v1273 = vadd.f32 %v1109, %v1272
        %v1274 = vpop.f32.mrb[0].mxu0
        %v1275 = vpop.f32.mrb[0].mxu0
        %v1276 = vadd.f32 %v1112, %v1275
        %v1277 = vpop.f32.mrb[0].mxu0
        %1278 = vmatprep.mubr.bf16.mxu0 0
        %1279 = vmatmul.mubr.bf16.gmra.mrb[0].mxu0 %v408
        %v1280 = vpop.f32.mrb[0].mxu0
        %v1281 = vadd.f32 %v1117, %v1280
        %v1282 = vpop.f32.mrb[0].mxu0
        %v1283 = vpop.f32.mrb[0].mxu0
        %v1284 = vadd.f32 %v1120, %v1283
        %v1285 = vpop.f32.mrb[0].mxu0
        %1286 = vmatprep.mubr.bf16.mxu0 0
        %1287 = vmatmul.mubr.bf16.gmra.mrb[0].mxu0 %v411
        %v1288 = vpop.f32.mrb[0].mxu0
        %v1289 = vadd.f32 %v1125, %v1288
        %v1290 = vpop.f32.mrb[0].mxu0
        %v1291 = vpop.f32.mrb[0].mxu0
        %v1292 = vadd.f32 %v1128, %v1291
        %v1293 = vpop.f32.mrb[0].mxu0
        %1294 = vmatprep.mubr.bf16.mxu0 0
        %1295 = vmatmul.mubr.bf16.gmra.mrb[0].mxu0 %v414
        %v1296 = vpop.f32.mrb[0].mxu0
        %v1297 = vadd.f32 %v1133, %v1296
        %v1298 = vpop.f32.mrb[0].mxu0
        %v1299 = vpop.f32.mrb[0].mxu0
        %v1300 = vadd.f32 %v1136, %v1299
        %v1301 = vpop.f32.mrb[0].mxu0
        %1302 = vmatprep.mubr.bf16.mxu0 0
        %1303 = vmatmul.mubr.bf16.gmra.mrb[0].mxu0 %v417
        %v1304 = vpop.f32.mrb[0].mxu0
        %v1305 = vadd.f32 %v1141, %v1304
        %v1306 = vpop.f32.mrb[0].mxu0
        %v1307 = vpop.f32.mrb[0].mxu0
        %v1308 = vadd.f32 %v1144, %v1307
        %v1309 = vpop.f32.mrb[0].mxu0
        %1310 = vmatprep.mubr.bf16.mxu0 0
        %1311 = vmatmul.mubr.bf16.gmra.mrb[0].mxu0 %v420
        %v1312 = vpop.f32.mrb[0].mxu0
        %v1313 = vadd.f32 %v1149, %v1312
        %v1314 = vpop.f32.mrb[0].mxu0
        %v1315 = vpop.f32.mrb[0].mxu0
        %v1316 = vadd.f32 %v1152, %v1315
        %v1317 = vpop.f32.mrb[0].mxu0
        %1318 = vmatprep.mubr.bf16.mxu0 0
        %1319 = vmatmul.mubr.bf16.gmra.mrb[0].mxu0 %v423
        %v1320 = vpop.f32.mrb[0].mxu0
        %v1321 = vadd.f32 %v1157, %v1320
        %v1322 = vpop.f32.mrb[0].mxu0
        %v1323 = vpop.f32.mrb[0].mxu0
        %v1324 = vadd.f32 %v1160, %v1323
        %v1325 = vpop.f32.mrb[0].mxu0
        %1326 = vmatprep.mubr.bf16.mxu0 0
        %1327 = vmatmul.mubr.bf16.gmra.mrb[0].mxu0 %v426
        %v1328 = vpop.f32.mrb[0].mxu0
        %v1329 = vadd.f32 %v1165, %v1328
        %v1330 = vpop.f32.mrb[0].mxu0
        %v1331 = vpop.f32.mrb[0].mxu0
        %v1332 = vadd.f32 %v1168, %v1331
        %v1333 = vpop.f32.mrb[0].mxu0
        %1334 = vmatprep.mubr.bf16.mxu0 0
        %1335 = vmatmul.mubr.bf16.gmra.mrb[0].mxu0 %v429
        %v1336 = vpop.f32.mrb[0].mxu0
        %v1337 = vadd.f32 %v1173, %v1336
        %v1338 = vpop.f32.mrb[0].mxu0
        %v1339 = vpop.f32.mrb[0].mxu0
        %v1340 = vadd.f32 %v1176, %v1339
        %v1341 = vpop.f32.mrb[0].mxu0
        %1342 = vmatprep.mubr.bf16.mxu0 0
        %1343 = vmatmul.mubr.bf16.gmra.mrb[0].mxu0 %v432
        %v1344 = vpop.f32.mrb[0].mxu0
        %v1345 = vadd.f32 %v1181, %v1344
        %v1346 = vpop.f32.mrb[0].mxu0
        %v1347 = vpop.f32.mrb[0].mxu0
        %v1348 = vadd.f32 %v1184, %v1347
        %v1349 = vpop.f32.mrb[0].mxu0
        %1350 = vdwg.mxu0
        %v1351 = vld [vmem:[%s198] sm:$0xf]
        %v1352 = vld [vmem:[%s198 + $0x4] sm:$0xf]
        %v1353 = vld [vmem:[%s198 + $0x8] sm:$0x1]
        %v1354 = vld [vmem:[%s198 + $0xc] sm:$0xf]
        %v1355 = vld [vmem:[%s198 + $0x10] sm:$0xf]
        %v1356 = vld [vmem:[%s198 + $0x14] sm:$0x1]
        %v1357 = vld [vmem:[%s198 + $0x18] sm:$0xf]
        %v1358 = vld [vmem:[%s198 + $0x1c] sm:$0xf]
        %v1359 = vld [vmem:[%s198 + $0x20] sm:$0x1]
        %v1360 = vld [vmem:[%s198 + $0x24] sm:$0xf]
        %v1361 = vld [vmem:[%s198 + $0x28] sm:$0xf]
        %v1362 = vld [vmem:[%s198 + $0x2c] sm:$0x1]
        %v1363 = vld [vmem:[%s198 + $0x30] sm:$0xf]
        %v1364 = vld [vmem:[%s198 + $0x34] sm:$0xf]
        %v1365 = vld [vmem:[%s198 + $0x38] sm:$0x1]
        %v1366 = vld [vmem:[%s198 + $0x3c] sm:$0xf]
        %v1367 = vld [vmem:[%s198 + $0x40] sm:$0xf]
        %v1368 = vld [vmem:[%s198 + $0x44] sm:$0x1]
        %v1369 = vld [vmem:[%s198 + $0x48] sm:$0xf]
        %v1370 = vld [vmem:[%s198 + $0x4c] sm:$0xf]
        %v1371 = vld [vmem:[%s198 + $0x50] sm:$0x1]
        %v1372 = vld [vmem:[%s198 + $0x54] sm:$0xf]
        %v1373 = vld [vmem:[%s198 + $0x58] sm:$0xf]
        %v1374 = vld [vmem:[%s198 + $0x5c] sm:$0x1]
        %v1375 = vld [vmem:[%s198 + $0x60] sm:$0xf]
        %v1376 = vld [vmem:[%s198 + $0x64] sm:$0xf]
        %v1377 = vld [vmem:[%s198 + $0x68] sm:$0x1]
        %v1378 = vld [vmem:[%s198 + $0x6c] sm:$0xf]
        %v1379 = vld [vmem:[%s198 + $0x70] sm:$0xf]
        %v1380 = vld [vmem:[%s198 + $0x74] sm:$0x1]
        %v1381 = vld [vmem:[%s198 + $0x78] sm:$0xf]
        %v1382 = vld [vmem:[%s198 + $0x7c] sm:$0xf]
        %v1383 = vld [vmem:[%s198 + $0x80] sm:$0x1]
        %v1384 = vld [vmem:[%s198 + $0x84] sm:$0xf]
        %v1385 = vld [vmem:[%s198 + $0x88] sm:$0xf]
        %v1386 = vld [vmem:[%s198 + $0x8c] sm:$0x1]
        %v1387 = vld [vmem:[%s198 + $0x90] sm:$0xf]
        %v1388 = vld [vmem:[%s198 + $0x94] sm:$0xf]
        %v1389 = vld [vmem:[%s198 + $0x98] sm:$0x1]
        %v1390 = vld [vmem:[%s198 + $0x9c] sm:$0xf]
        %v1391 = vld [vmem:[%s198 + $0xa0] sm:$0xf]
        %v1392 = vld [vmem:[%s198 + $0xa4] sm:$0x1]
        %v1393 = vld [vmem:[%s198 + $0xa8] sm:$0xf]
        %v1394 = vld [vmem:[%s198 + $0xac] sm:$0xf]
        %v1395 = vld [vmem:[%s198 + $0xb0] sm:$0x1]
        %v1396 = vld [vmem:[%s198 + $0xb4] sm:$0xf]
        %v1397 = vld [vmem:[%s198 + $0xb8] sm:$0xf]
        %v1398 = vld [vmem:[%s198 + $0xbc] sm:$0x1]
        %vm1399 = vsmask.f32 3328
        %vm1400 = vsmask.f32 7440
        %vm1401 = vmor %vm1399, %vm1400
        %v1403 = vshrl.u32 %v1351, 16
        %v1405 = vrot.slane %v1403, 4
        %v1406 = vshll.u32 %v1351, 16
        %v1408 = vrot.slane %v1406, 5
        %v1409 = vor.u32 %v1405, %v1408
        %v1410 = vrot.slane %v1409, 4
        %v1412 = vshll.u32 %v1352, 16
        %v1414 = vrot.slane %v1412, 5
        %v1415 = vsel %vm1401, %v1410, %v1414
        %v1416 = vshrl.u32 %v1352, 16
        %v1418 = vrot.slane %v1416, 4
        %v1419 = vor.u32 %v1418, %v1414
        %v1420 = vrot.slane %v1419, 4
        %v1422 = vshll.u32 %v1353, 16
        %v1424 = vrot.slane %v1422, 5
        %v1425 = vsel %vm1401, %v1420, %v1424
        %v1427 = vshrl.u32 %v1354, 16
        %v1429 = vrot.slane %v1427, 4
        %v1430 = vshll.u32 %v1354, 16
        %v1432 = vrot.slane %v1430, 5
        %v1433 = vor.u32 %v1429, %v1432
        %v1434 = vrot.slane %v1433, 4
        %v1436 = vshll.u32 %v1355, 16
        %v1438 = vrot.slane %v1436, 5
        %v1439 = vsel %vm1401, %v1434, %v1438
        %v1440 = vshrl.u32 %v1355, 16
        %v1442 = vrot.slane %v1440, 4
        %v1443 = vor.u32 %v1442, %v1438
        %v1444 = vrot.slane %v1443, 4
        %v1446 = vshll.u32 %v1356, 16
        %v1448 = vrot.slane %v1446, 5
        %v1449 = vsel %vm1401, %v1444, %v1448
        %v1451 = vshrl.u32 %v1357, 16
        %v1453 = vrot.slane %v1451, 4
        %v1454 = vshll.u32 %v1357, 16
        %v1456 = vrot.slane %v1454, 5
        %v1457 = vor.u32 %v1453, %v1456
        %v1458 = vrot.slane %v1457, 4
        %v1460 = vshll.u32 %v1358, 16
        %v1462 = vrot.slane %v1460, 5
        %v1463 = vsel %vm1401, %v1458, %v1462
        %v1464 = vshrl.u32 %v1358, 16
        %v1466 = vrot.slane %v1464, 4
        %v1467 = vor.u32 %v1466, %v1462
        %v1468 = vrot.slane %v1467, 4
        %v1470 = vshll.u32 %v1359, 16
        %v1472 = vrot.slane %v1470, 5
        %v1473 = vsel %vm1401, %v1468, %v1472
        %v1475 = vshrl.u32 %v1360, 16
        %v1477 = vrot.slane %v1475, 4
        %v1478 = vshll.u32 %v1360, 16
        %v1480 = vrot.slane %v1478, 5
        %v1481 = vor.u32 %v1477, %v1480
        %v1482 = vrot.slane %v1481, 4
        %v1484 = vshll.u32 %v1361, 16
        %v1486 = vrot.slane %v1484, 5
        %v1487 = vsel %vm1401, %v1482, %v1486
        %v1488 = vshrl.u32 %v1361, 16
        %v1490 = vrot.slane %v1488, 4
        %v1491 = vor.u32 %v1490, %v1486
        %v1492 = vrot.slane %v1491, 4
        %v1494 = vshll.u32 %v1362, 16
        %v1496 = vrot.slane %v1494, 5
        %v1497 = vsel %vm1401, %v1492, %v1496
        %v1499 = vshrl.u32 %v1363, 16
        %v1501 = vrot.slane %v1499, 4
        %v1502 = vshll.u32 %v1363, 16
        %v1504 = vrot.slane %v1502, 5
        %v1505 = vor.u32 %v1501, %v1504
        %v1506 = vrot.slane %v1505, 4
        %v1508 = vshll.u32 %v1364, 16
        %v1510 = vrot.slane %v1508, 5
        %v1511 = vsel %vm1401, %v1506, %v1510
        %v1512 = vshrl.u32 %v1364, 16
        %v1514 = vrot.slane %v1512, 4
        %v1515 = vor.u32 %v1514, %v1510
        %v1516 = vrot.slane %v1515, 4
        %v1518 = vshll.u32 %v1365, 16
        %v1520 = vrot.slane %v1518, 5
        %v1521 = vsel %vm1401, %v1516, %v1520
        %v1523 = vshrl.u32 %v1366, 16
        %v1525 = vrot.slane %v1523, 4
        %v1526 = vshll.u32 %v1366, 16
        %v1528 = vrot.slane %v1526, 5
        %v1529 = vor.u32 %v1525, %v1528
        %v1530 = vrot.slane %v1529, 4
        %v1532 = vshll.u32 %v1367, 16
        %v1534 = vrot.slane %v1532, 5
        %v1535 = vsel %vm1401, %v1530, %v1534
        %v1536 = vshrl.u32 %v1367, 16
        %v1538 = vrot.slane %v1536, 4
        %v1539 = vor.u32 %v1538, %v1534
        %v1540 = vrot.slane %v1539, 4
        %v1542 = vshll.u32 %v1368, 16
        %v1544 = vrot.slane %v1542, 5
        %v1545 = vsel %vm1401, %v1540, %v1544
        %v1547 = vshrl.u32 %v1369, 16
        %v1549 = vrot.slane %v1547, 4
        %v1550 = vshll.u32 %v1369, 16
        %v1552 = vrot.slane %v1550, 5
        %v1553 = vor.u32 %v1549, %v1552
        %v1554 = vrot.slane %v1553, 4
        %v1556 = vshll.u32 %v1370, 16
        %v1558 = vrot.slane %v1556, 5
        %v1559 = vsel %vm1401, %v1554, %v1558
        %v1560 = vshrl.u32 %v1370, 16
        %v1562 = vrot.slane %v1560, 4
        %v1563 = vor.u32 %v1562, %v1558
        %v1564 = vrot.slane %v1563, 4
        %v1566 = vshll.u32 %v1371, 16
        %v1568 = vrot.slane %v1566, 5
        %v1569 = vsel %vm1401, %v1564, %v1568
        %v1571 = vshrl.u32 %v1372, 16
        %v1573 = vrot.slane %v1571, 4
        %v1574 = vshll.u32 %v1372, 16
        %v1576 = vrot.slane %v1574, 5
        %v1577 = vor.u32 %v1573, %v1576
        %v1578 = vrot.slane %v1577, 4
        %v1580 = vshll.u32 %v1373, 16
        %v1582 = vrot.slane %v1580, 5
        %v1583 = vsel %vm1401, %v1578, %v1582
        %v1584 = vshrl.u32 %v1373, 16
        %v1586 = vrot.slane %v1584, 4
        %v1587 = vor.u32 %v1586, %v1582
        %v1588 = vrot.slane %v1587, 4
        %v1590 = vshll.u32 %v1374, 16
        %v1592 = vrot.slane %v1590, 5
        %v1593 = vsel %vm1401, %v1588, %v1592
        %v1595 = vshrl.u32 %v1375, 16
        %v1597 = vrot.slane %v1595, 4
        %v1598 = vshll.u32 %v1375, 16
        %v1600 = vrot.slane %v1598, 5
        %v1601 = vor.u32 %v1597, %v1600
        %v1602 = vrot.slane %v1601, 4
        %v1604 = vshll.u32 %v1376, 16
        %v1606 = vrot.slane %v1604, 5
        %v1607 = vsel %vm1401, %v1602, %v1606
        %v1608 = vshrl.u32 %v1376, 16
        %v1610 = vrot.slane %v1608, 4
        %v1611 = vor.u32 %v1610, %v1606
        %v1612 = vrot.slane %v1611, 4
        %v1614 = vshll.u32 %v1377, 16
        %v1616 = vrot.slane %v1614, 5
        %v1617 = vsel %vm1401, %v1612, %v1616
        %v1619 = vshrl.u32 %v1378, 16
        %v1621 = vrot.slane %v1619, 4
        %v1622 = vshll.u32 %v1378, 16
        %v1624 = vrot.slane %v1622, 5
        %v1625 = vor.u32 %v1621, %v1624
        %v1626 = vrot.slane %v1625, 4
        %v1628 = vshll.u32 %v1379, 16
        %v1630 = vrot.slane %v1628, 5
        %v1631 = vsel %vm1401, %v1626, %v1630
        %v1632 = vshrl.u32 %v1379, 16
        %v1634 = vrot.slane %v1632, 4
        %v1635 = vor.u32 %v1634, %v1630
        %v1636 = vrot.slane %v1635, 4
        %v1638 = vshll.u32 %v1380, 16
        %v1640 = vrot.slane %v1638, 5
        %v1641 = vsel %vm1401, %v1636, %v1640
        %v1643 = vshrl.u32 %v1381, 16
        %v1645 = vrot.slane %v1643, 4
        %v1646 = vshll.u32 %v1381, 16
        %v1648 = vrot.slane %v1646, 5
        %v1649 = vor.u32 %v1645, %v1648
        %v1650 = vrot.slane %v1649, 4
        %v1652 = vshll.u32 %v1382, 16
        %v1654 = vrot.slane %v1652, 5
        %v1655 = vsel %vm1401, %v1650, %v1654
        %v1656 = vshrl.u32 %v1382, 16
        %v1658 = vrot.slane %v1656, 4
        %v1659 = vor.u32 %v1658, %v1654
        %v1660 = vrot.slane %v1659, 4
        %v1662 = vshll.u32 %v1383, 16
        %v1664 = vrot.slane %v1662, 5
        %v1665 = vsel %vm1401, %v1660, %v1664
        %v1667 = vshrl.u32 %v1384, 16
        %v1669 = vrot.slane %v1667, 4
        %v1670 = vshll.u32 %v1384, 16
        %v1672 = vrot.slane %v1670, 5
        %v1673 = vor.u32 %v1669, %v1672
        %v1674 = vrot.slane %v1673, 4
        %v1676 = vshll.u32 %v1385, 16
        %v1678 = vrot.slane %v1676, 5
        %v1679 = vsel %vm1401, %v1674, %v1678
        %v1680 = vshrl.u32 %v1385, 16
        %v1682 = vrot.slane %v1680, 4
        %v1683 = vor.u32 %v1682, %v1678
        %v1684 = vrot.slane %v1683, 4
        %v1686 = vshll.u32 %v1386, 16
        %v1688 = vrot.slane %v1686, 5
        %v1689 = vsel %vm1401, %v1684, %v1688
        %v1691 = vshrl.u32 %v1387, 16
        %v1693 = vrot.slane %v1691, 4
        %v1694 = vshll.u32 %v1387, 16
        %v1696 = vrot.slane %v1694, 5
        %v1697 = vor.u32 %v1693, %v1696
        %v1698 = vrot.slane %v1697, 4
        %v1700 = vshll.u32 %v1388, 16
        %v1702 = vrot.slane %v1700, 5
        %v1703 = vsel %vm1401, %v1698, %v1702
        %v1704 = vshrl.u32 %v1388, 16
        %v1706 = vrot.slane %v1704, 4
        %v1707 = vor.u32 %v1706, %v1702
        %v1708 = vrot.slane %v1707, 4
        %v1710 = vshll.u32 %v1389, 16
        %v1712 = vrot.slane %v1710, 5
        %v1713 = vsel %vm1401, %v1708, %v1712
        %v1715 = vshrl.u32 %v1390, 16
        %v1717 = vrot.slane %v1715, 4
        %v1718 = vshll.u32 %v1390, 16
        %v1720 = vrot.slane %v1718, 5
        %v1721 = vor.u32 %v1717, %v1720
        %v1722 = vrot.slane %v1721, 4
        %v1724 = vshll.u32 %v1391, 16
        %v1726 = vrot.slane %v1724, 5
        %v1727 = vsel %vm1401, %v1722, %v1726
        %v1728 = vshrl.u32 %v1391, 16
        %v1730 = vrot.slane %v1728, 4
        %v1731 = vor.u32 %v1730, %v1726
        %v1732 = vrot.slane %v1731, 4
        %v1734 = vshll.u32 %v1392, 16
        %v1736 = vrot.slane %v1734, 5
        %v1737 = vsel %vm1401, %v1732, %v1736
        %v1739 = vshrl.u32 %v1393, 16
        %v1741 = vrot.slane %v1739, 4
        %v1742 = vshll.u32 %v1393, 16
        %v1744 = vrot.slane %v1742, 5
        %v1745 = vor.u32 %v1741, %v1744
        %v1746 = vrot.slane %v1745, 4
        %v1748 = vshll.u32 %v1394, 16
        %v1750 = vrot.slane %v1748, 5
        %v1751 = vsel %vm1401, %v1746, %v1750
        %v1752 = vshrl.u32 %v1394, 16
        %v1754 = vrot.slane %v1752, 4
        %v1755 = vor.u32 %v1754, %v1750
        %v1756 = vrot.slane %v1755, 4
        %v1758 = vshll.u32 %v1395, 16
        %v1760 = vrot.slane %v1758, 5
        %v1761 = vsel %vm1401, %v1756, %v1760
        %v1763 = vshrl.u32 %v1396, 16
        %v1765 = vrot.slane %v1763, 4
        %v1766 = vshll.u32 %v1396, 16
        %v1768 = vrot.slane %v1766, 5
        %v1769 = vor.u32 %v1765, %v1768
        %v1770 = vrot.slane %v1769, 4
        %v1772 = vshll.u32 %v1397, 16
        %v1774 = vrot.slane %v1772, 5
        %v1775 = vsel %vm1401, %v1770, %v1774
        %v1776 = vshrl.u32 %v1397, 16
        %v1778 = vrot.slane %v1776, 4
        %v1779 = vor.u32 %v1778, %v1774
        %v1780 = vrot.slane %v1779, 4
        %v1782 = vshll.u32 %v1398, 16
        %v1784 = vrot.slane %v1782, 5
        %v1785 = vsel %vm1401, %v1780, %v1784
        %v1786 = vld [vmem:[%s236] sm:$0xf]
        %v1787 = vld [vmem:[%s236 + $0x4] sm:$0xf]
        %v1788 = vld [vmem:[%s236 + $0x8] sm:$0x1]
        %v1789 = vld [vmem:[%s236 + $0xc] sm:$0xf]
        %v1790 = vld [vmem:[%s236 + $0x10] sm:$0xf]
        %v1791 = vld [vmem:[%s236 + $0x14] sm:$0x1]
        %v1792 = vld [vmem:[%s236 + $0x18] sm:$0xf]
        %v1793 = vld [vmem:[%s236 + $0x1c] sm:$0xf]
        %v1794 = vld [vmem:[%s236 + $0x20] sm:$0x1]
        %v1795 = vld [vmem:[%s236 + $0x24] sm:$0xf]
        %v1796 = vld [vmem:[%s236 + $0x28] sm:$0xf]
        %v1797 = vld [vmem:[%s236 + $0x2c] sm:$0x1]
        %v1798 = vld [vmem:[%s236 + $0x30] sm:$0xf]
        %v1799 = vld [vmem:[%s236 + $0x34] sm:$0xf]
        %v1800 = vld [vmem:[%s236 + $0x38] sm:$0x1]
        %v1801 = vld [vmem:[%s236 + $0x3c] sm:$0xf]
        %v1802 = vld [vmem:[%s236 + $0x40] sm:$0xf]
        %v1803 = vld [vmem:[%s236 + $0x44] sm:$0x1]
        %v1804 = vld [vmem:[%s236 + $0x48] sm:$0xf]
        %v1805 = vld [vmem:[%s236 + $0x4c] sm:$0xf]
        %v1806 = vld [vmem:[%s236 + $0x50] sm:$0x1]
        %v1807 = vld [vmem:[%s236 + $0x54] sm:$0xf]
        %v1808 = vld [vmem:[%s236 + $0x58] sm:$0xf]
        %v1809 = vld [vmem:[%s236 + $0x5c] sm:$0x1]
        %v1810 = vld [vmem:[%s236 + $0x60] sm:$0xf]
        %v1811 = vld [vmem:[%s236 + $0x64] sm:$0xf]
        %v1812 = vld [vmem:[%s236 + $0x68] sm:$0x1]
        %v1813 = vld [vmem:[%s236 + $0x6c] sm:$0xf]
        %v1814 = vld [vmem:[%s236 + $0x70] sm:$0xf]
        %v1815 = vld [vmem:[%s236 + $0x74] sm:$0x1]
        %v1816 = vld [vmem:[%s236 + $0x78] sm:$0xf]
        %v1817 = vld [vmem:[%s236 + $0x7c] sm:$0xf]
        %v1818 = vld [vmem:[%s236 + $0x80] sm:$0x1]
        %v1819 = vld [vmem:[%s236 + $0x84] sm:$0xf]
        %v1820 = vld [vmem:[%s236 + $0x88] sm:$0xf]
        %v1821 = vld [vmem:[%s236 + $0x8c] sm:$0x1]
        %v1822 = vld [vmem:[%s236 + $0x90] sm:$0xf]
        %v1823 = vld [vmem:[%s236 + $0x94] sm:$0xf]
        %v1824 = vld [vmem:[%s236 + $0x98] sm:$0x1]
        %v1825 = vld [vmem:[%s236 + $0x9c] sm:$0xf]
        %v1826 = vld [vmem:[%s236 + $0xa0] sm:$0xf]
        %v1827 = vld [vmem:[%s236 + $0xa4] sm:$0x1]
        %v1828 = vld [vmem:[%s236 + $0xa8] sm:$0xf]
        %v1829 = vld [vmem:[%s236 + $0xac] sm:$0xf]
        %v1830 = vld [vmem:[%s236 + $0xb0] sm:$0x1]
        %v1831 = vld [vmem:[%s236 + $0xb4] sm:$0xf]
        %v1832 = vld [vmem:[%s236 + $0xb8] sm:$0xf]
        %v1833 = vld [vmem:[%s236 + $0xbc] sm:$0x1]
        %v1835 = vshrl.u32 %v1786, 16
        %v1837 = vrot.slane %v1835, 4
        %v1838 = vshll.u32 %v1786, 16
        %v1840 = vrot.slane %v1838, 5
        %v1841 = vor.u32 %v1837, %v1840
        %v1842 = vrot.slane %v1841, 4
        %v1844 = vshll.u32 %v1787, 16
        %v1846 = vrot.slane %v1844, 5
        %v1847 = vsel %vm1401, %v1842, %v1846
        %v1848 = vshrl.u32 %v1787, 16
        %v1850 = vrot.slane %v1848, 4
        %v1851 = vor.u32 %v1850, %v1846
        %v1852 = vrot.slane %v1851, 4
        %v1854 = vshll.u32 %v1788, 16
        %v1856 = vrot.slane %v1854, 5
        %v1857 = vsel %vm1401, %v1852, %v1856
        %v1859 = vshrl.u32 %v1789, 16
        %v1861 = vrot.slane %v1859, 4
        %v1862 = vshll.u32 %v1789, 16
        %v1864 = vrot.slane %v1862, 5
        %v1865 = vor.u32 %v1861, %v1864
        %v1866 = vrot.slane %v1865, 4
        %v1868 = vshll.u32 %v1790, 16
        %v1870 = vrot.slane %v1868, 5
        %v1871 = vsel %vm1401, %v1866, %v1870
        %v1872 = vshrl.u32 %v1790, 16
        %v1874 = vrot.slane %v1872, 4
        %v1875 = vor.u32 %v1874, %v1870
        %v1876 = vrot.slane %v1875, 4
        %v1878 = vshll.u32 %v1791, 16
        %v1880 = vrot.slane %v1878, 5
        %v1881 = vsel %vm1401, %v1876, %v1880
        %v1883 = vshrl.u32 %v1792, 16
        %v1885 = vrot.slane %v1883, 4
        %v1886 = vshll.u32 %v1792, 16
        %v1888 = vrot.slane %v1886, 5
        %v1889 = vor.u32 %v1885, %v1888
        %v1890 = vrot.slane %v1889, 4
        %v1892 = vshll.u32 %v1793, 16
        %v1894 = vrot.slane %v1892, 5
        %v1895 = vsel %vm1401, %v1890, %v1894
        %v1896 = vshrl.u32 %v1793, 16
        %v1898 = vrot.slane %v1896, 4
        %v1899 = vor.u32 %v1898, %v1894
        %v1900 = vrot.slane %v1899, 4
        %v1902 = vshll.u32 %v1794, 16
        %v1904 = vrot.slane %v1902, 5
        %v1905 = vsel %vm1401, %v1900, %v1904
        %v1907 = vshrl.u32 %v1795, 16
        %v1909 = vrot.slane %v1907, 4
        %v1910 = vshll.u32 %v1795, 16
        %v1912 = vrot.slane %v1910, 5
        %v1913 = vor.u32 %v1909, %v1912
        %v1914 = vrot.slane %v1913, 4
        %v1916 = vshll.u32 %v1796, 16
        %v1918 = vrot.slane %v1916, 5
        %v1919 = vsel %vm1401, %v1914, %v1918
        %v1920 = vshrl.u32 %v1796, 16
        %v1922 = vrot.slane %v1920, 4
        %v1923 = vor.u32 %v1922, %v1918
        %v1924 = vrot.slane %v1923, 4
        %v1926 = vshll.u32 %v1797, 16
        %v1928 = vrot.slane %v1926, 5
        %v1929 = vsel %vm1401, %v1924, %v1928
        %v1931 = vshrl.u32 %v1798, 16
        %v1933 = vrot.slane %v1931, 4
        %v1934 = vshll.u32 %v1798, 16
        %v1936 = vrot.slane %v1934, 5
        %v1937 = vor.u32 %v1933, %v1936
        %v1938 = vrot.slane %v1937, 4
        %v1940 = vshll.u32 %v1799, 16
        %v1942 = vrot.slane %v1940, 5
        %v1943 = vsel %vm1401, %v1938, %v1942
        %v1944 = vshrl.u32 %v1799, 16
        %v1946 = vrot.slane %v1944, 4
        %v1947 = vor.u32 %v1946, %v1942
        %v1948 = vrot.slane %v1947, 4
        %v1950 = vshll.u32 %v1800, 16
        %v1952 = vrot.slane %v1950, 5
        %v1953 = vsel %vm1401, %v1948, %v1952
        %v1955 = vshrl.u32 %v1801, 16
        %v1957 = vrot.slane %v1955, 4
        %v1958 = vshll.u32 %v1801, 16
        %v1960 = vrot.slane %v1958, 5
        %v1961 = vor.u32 %v1957, %v1960
        %v1962 = vrot.slane %v1961, 4
        %v1964 = vshll.u32 %v1802, 16
        %v1966 = vrot.slane %v1964, 5
        %v1967 = vsel %vm1401, %v1962, %v1966
        %v1968 = vshrl.u32 %v1802, 16
        %v1970 = vrot.slane %v1968, 4
        %v1971 = vor.u32 %v1970, %v1966
        %v1972 = vrot.slane %v1971, 4
        %v1974 = vshll.u32 %v1803, 16
        %v1976 = vrot.slane %v1974, 5
        %v1977 = vsel %vm1401, %v1972, %v1976
        %v1979 = vshrl.u32 %v1804, 16
        %v1981 = vrot.slane %v1979, 4
        %v1982 = vshll.u32 %v1804, 16
        %v1984 = vrot.slane %v1982, 5
        %v1985 = vor.u32 %v1981, %v1984
        %v1986 = vrot.slane %v1985, 4
        %v1988 = vshll.u32 %v1805, 16
        %v1990 = vrot.slane %v1988, 5
        %v1991 = vsel %vm1401, %v1986, %v1990
        %v1992 = vshrl.u32 %v1805, 16
        %v1994 = vrot.slane %v1992, 4
        %v1995 = vor.u32 %v1994, %v1990
        %v1996 = vrot.slane %v1995, 4
        %v1998 = vshll.u32 %v1806, 16
        %v2000 = vrot.slane %v1998, 5
        %v2001 = vsel %vm1401, %v1996, %v2000
        %v2003 = vshrl.u32 %v1807, 16
        %v2005 = vrot.slane %v2003, 4
        %v2006 = vshll.u32 %v1807, 16
        %v2008 = vrot.slane %v2006, 5
        %v2009 = vor.u32 %v2005, %v2008
        %v2010 = vrot.slane %v2009, 4
        %v2012 = vshll.u32 %v1808, 16
        %v2014 = vrot.slane %v2012, 5
        %v2015 = vsel %vm1401, %v2010, %v2014
        %v2016 = vshrl.u32 %v1808, 16
        %v2018 = vrot.slane %v2016, 4
        %v2019 = vor.u32 %v2018, %v2014
        %v2020 = vrot.slane %v2019, 4
        %v2022 = vshll.u32 %v1809, 16
        %v2024 = vrot.slane %v2022, 5
        %v2025 = vsel %vm1401, %v2020, %v2024
        %v2027 = vshrl.u32 %v1810, 16
        %v2029 = vrot.slane %v2027, 4
        %v2030 = vshll.u32 %v1810, 16
        %v2032 = vrot.slane %v2030, 5
        %v2033 = vor.u32 %v2029, %v2032
        %v2034 = vrot.slane %v2033, 4
        %v2036 = vshll.u32 %v1811, 16
        %v2038 = vrot.slane %v2036, 5
        %v2039 = vsel %vm1401, %v2034, %v2038
        %v2040 = vshrl.u32 %v1811, 16
        %v2042 = vrot.slane %v2040, 4
        %v2043 = vor.u32 %v2042, %v2038
        %v2044 = vrot.slane %v2043, 4
        %v2046 = vshll.u32 %v1812, 16
        %v2048 = vrot.slane %v2046, 5
        %v2049 = vsel %vm1401, %v2044, %v2048
        %v2051 = vshrl.u32 %v1813, 16
        %v2053 = vrot.slane %v2051, 4
        %v2054 = vshll.u32 %v1813, 16
        %v2056 = vrot.slane %v2054, 5
        %v2057 = vor.u32 %v2053, %v2056
        %v2058 = vrot.slane %v2057, 4
        %v2060 = vshll.u32 %v1814, 16
        %v2062 = vrot.slane %v2060, 5
        %v2063 = vsel %vm1401, %v2058, %v2062
        %v2064 = vshrl.u32 %v1814, 16
        %v2066 = vrot.slane %v2064, 4
        %v2067 = vor.u32 %v2066, %v2062
        %v2068 = vrot.slane %v2067, 4
        %v2070 = vshll.u32 %v1815, 16
        %v2072 = vrot.slane %v2070, 5
        %v2073 = vsel %vm1401, %v2068, %v2072
        %v2075 = vshrl.u32 %v1816, 16
        %v2077 = vrot.slane %v2075, 4
        %v2078 = vshll.u32 %v1816, 16
        %v2080 = vrot.slane %v2078, 5
        %v2081 = vor.u32 %v2077, %v2080
        %v2082 = vrot.slane %v2081, 4
        %v2084 = vshll.u32 %v1817, 16
        %v2086 = vrot.slane %v2084, 5
        %v2087 = vsel %vm1401, %v2082, %v2086
        %v2088 = vshrl.u32 %v1817, 16
        %v2090 = vrot.slane %v2088, 4
        %v2091 = vor.u32 %v2090, %v2086
        %v2092 = vrot.slane %v2091, 4
        %v2094 = vshll.u32 %v1818, 16
        %v2096 = vrot.slane %v2094, 5
        %v2097 = vsel %vm1401, %v2092, %v2096
        %v2099 = vshrl.u32 %v1819, 16
        %v2101 = vrot.slane %v2099, 4
        %v2102 = vshll.u32 %v1819, 16
        %v2104 = vrot.slane %v2102, 5
        %v2105 = vor.u32 %v2101, %v2104
        %v2106 = vrot.slane %v2105, 4
        %v2108 = vshll.u32 %v1820, 16
        %v2110 = vrot.slane %v2108, 5
        %v2111 = vsel %vm1401, %v2106, %v2110
        %v2112 = vshrl.u32 %v1820, 16
        %v2114 = vrot.slane %v2112, 4
        %v2115 = vor.u32 %v2114, %v2110
        %v2116 = vrot.slane %v2115, 4
        %v2118 = vshll.u32 %v1821, 16
        %v2120 = vrot.slane %v2118, 5
        %v2121 = vsel %vm1401, %v2116, %v2120
        %v2123 = vshrl.u32 %v1822, 16
        %v2125 = vrot.slane %v2123, 4
        %v2126 = vshll.u32 %v1822, 16
        %v2128 = vrot.slane %v2126, 5
        %v2129 = vor.u32 %v2125, %v2128
        %v2130 = vrot.slane %v2129, 4
        %v2132 = vshll.u32 %v1823, 16
        %v2134 = vrot.slane %v2132, 5
        %v2135 = vsel %vm1401, %v2130, %v2134
        %v2136 = vshrl.u32 %v1823, 16
        %v2138 = vrot.slane %v2136, 4
        %v2139 = vor.u32 %v2138, %v2134
        %v2140 = vrot.slane %v2139, 4
        %v2142 = vshll.u32 %v1824, 16
        %v2144 = vrot.slane %v2142, 5
        %v2145 = vsel %vm1401, %v2140, %v2144
        %v2147 = vshrl.u32 %v1825, 16
        %v2149 = vrot.slane %v2147, 4
        %v2150 = vshll.u32 %v1825, 16
        %v2152 = vrot.slane %v2150, 5
        %v2153 = vor.u32 %v2149, %v2152
        %v2154 = vrot.slane %v2153, 4
        %v2156 = vshll.u32 %v1826, 16
        %v2158 = vrot.slane %v2156, 5
        %v2159 = vsel %vm1401, %v2154, %v2158
        %v2160 = vshrl.u32 %v1826, 16
        %v2162 = vrot.slane %v2160, 4
        %v2163 = vor.u32 %v2162, %v2158
        %v2164 = vrot.slane %v2163, 4
        %v2166 = vshll.u32 %v1827, 16
        %v2168 = vrot.slane %v2166, 5
        %v2169 = vsel %vm1401, %v2164, %v2168
        %v2171 = vshrl.u32 %v1828, 16
        %v2173 = vrot.slane %v2171, 4
        %v2174 = vshll.u32 %v1828, 16
        %v2176 = vrot.slane %v2174, 5
        %v2177 = vor.u32 %v2173, %v2176
        %v2178 = vrot.slane %v2177, 4
        %v2180 = vshll.u32 %v1829, 16
        %v2182 = vrot.slane %v2180, 5
        %v2183 = vsel %vm1401, %v2178, %v2182
        %v2184 = vshrl.u32 %v1829, 16
        %v2186 = vrot.slane %v2184, 4
        %v2187 = vor.u32 %v2186, %v2182
        %v2188 = vrot.slane %v2187, 4
        %v2190 = vshll.u32 %v1830, 16
        %v2192 = vrot.slane %v2190, 5
        %v2193 = vsel %vm1401, %v2188, %v2192
        %v2195 = vshrl.u32 %v1831, 16
        %v2197 = vrot.slane %v2195, 4
        %v2198 = vshll.u32 %v1831, 16
        %v2200 = vrot.slane %v2198, 5
        %v2201 = vor.u32 %v2197, %v2200
        %v2202 = vrot.slane %v2201, 4
        %v2204 = vshll.u32 %v1832, 16
        %v2206 = vrot.slane %v2204, 5
        %v2207 = vsel %vm1401, %v2202, %v2206
        %v2208 = vshrl.u32 %v1832, 16
        %v2210 = vrot.slane %v2208, 4
        %v2211 = vor.u32 %v2210, %v2206
        %v2212 = vrot.slane %v2211, 4
        %v2214 = vshll.u32 %v1833, 16
        %v2216 = vrot.slane %v2214, 5
        %v2217 = vsel %vm1401, %v2212, %v2216
        %v2218 = vld [vmem:[%s269] sm:$0xf]
        %v2219 = vld [vmem:[%s269 + $0x4] sm:$0xf]
        %v2220 = vld [vmem:[%s269 + $0x8] sm:$0x1]
        %v2221 = vld [vmem:[%s269 + $0xc] sm:$0xf]
        %v2222 = vld [vmem:[%s269 + $0x10] sm:$0xf]
        %v2223 = vld [vmem:[%s269 + $0x14] sm:$0x1]
        %v2224 = vld [vmem:[%s269 + $0x18] sm:$0xf]
        %v2225 = vld [vmem:[%s269 + $0x1c] sm:$0xf]
        %v2226 = vld [vmem:[%s269 + $0x20] sm:$0x1]
        %v2227 = vld [vmem:[%s269 + $0x24] sm:$0xf]
        %v2228 = vld [vmem:[%s269 + $0x28] sm:$0xf]
        %v2229 = vld [vmem:[%s269 + $0x2c] sm:$0x1]
        %v2230 = vld [vmem:[%s269 + $0x30] sm:$0xf]
        %v2231 = vld [vmem:[%s269 + $0x34] sm:$0xf]
        %v2232 = vld [vmem:[%s269 + $0x38] sm:$0x1]
        %v2233 = vld [vmem:[%s269 + $0x3c] sm:$0xf]
        %v2234 = vld [vmem:[%s269 + $0x40] sm:$0xf]
        %v2235 = vld [vmem:[%s269 + $0x44] sm:$0x1]
        %v2236 = vld [vmem:[%s269 + $0x48] sm:$0xf]
        %v2237 = vld [vmem:[%s269 + $0x4c] sm:$0xf]
        %v2238 = vld [vmem:[%s269 + $0x50] sm:$0x1]
        %v2239 = vld [vmem:[%s269 + $0x54] sm:$0xf]
        %v2240 = vld [vmem:[%s269 + $0x58] sm:$0xf]
        %v2241 = vld [vmem:[%s269 + $0x5c] sm:$0x1]
        %v2242 = vld [vmem:[%s269 + $0x60] sm:$0xf]
        %v2243 = vld [vmem:[%s269 + $0x64] sm:$0xf]
        %v2244 = vld [vmem:[%s269 + $0x68] sm:$0x1]
        %v2245 = vld [vmem:[%s269 + $0x6c] sm:$0xf]
        %v2246 = vld [vmem:[%s269 + $0x70] sm:$0xf]
        %v2247 = vld [vmem:[%s269 + $0x74] sm:$0x1]
        %v2248 = vld [vmem:[%s269 + $0x78] sm:$0xf]
        %v2249 = vld [vmem:[%s269 + $0x7c] sm:$0xf]
        %v2250 = vld [vmem:[%s269 + $0x80] sm:$0x1]
        %v2251 = vld [vmem:[%s269 + $0x84] sm:$0xf]
        %v2252 = vld [vmem:[%s269 + $0x88] sm:$0xf]
        %v2253 = vld [vmem:[%s269 + $0x8c] sm:$0x1]
        %v2254 = vld [vmem:[%s269 + $0x90] sm:$0xf]
        %v2255 = vld [vmem:[%s269 + $0x94] sm:$0xf]
        %v2256 = vld [vmem:[%s269 + $0x98] sm:$0x1]
        %v2257 = vld [vmem:[%s269 + $0x9c] sm:$0xf]
        %v2258 = vld [vmem:[%s269 + $0xa0] sm:$0xf]
        %v2259 = vld [vmem:[%s269 + $0xa4] sm:$0x1]
        %v2260 = vld [vmem:[%s269 + $0xa8] sm:$0xf]
        %v2261 = vld [vmem:[%s269 + $0xac] sm:$0xf]
        %v2262 = vld [vmem:[%s269 + $0xb0] sm:$0x1]
        %v2263 = vld [vmem:[%s269 + $0xb4] sm:$0xf]
        %v2264 = vld [vmem:[%s269 + $0xb8] sm:$0xf]
        %v2265 = vld [vmem:[%s269 + $0xbc] sm:$0x1]
        %v2267 = vshrl.u32 %v2218, 16
        %v2269 = vrot.slane %v2267, 4
        %v2270 = vshll.u32 %v2218, 16
        %v2272 = vrot.slane %v2270, 5
        %v2273 = vor.u32 %v2269, %v2272
        %v2274 = vrot.slane %v2273, 4
        %v2276 = vshll.u32 %v2219, 16
        %v2278 = vrot.slane %v2276, 5
        %v2279 = vsel %vm1401, %v2274, %v2278
        %v2280 = vshrl.u32 %v2219, 16
        %v2282 = vrot.slane %v2280, 4
        %v2283 = vor.u32 %v2282, %v2278
        %v2284 = vrot.slane %v2283, 4
        %v2286 = vshll.u32 %v2220, 16
        %v2288 = vrot.slane %v2286, 5
        %v2289 = vsel %vm1401, %v2284, %v2288
        %v2291 = vshrl.u32 %v2221, 16
        %v2293 = vrot.slane %v2291, 4
        %v2294 = vshll.u32 %v2221, 16
        %v2296 = vrot.slane %v2294, 5
        %v2297 = vor.u32 %v2293, %v2296
        %v2298 = vrot.slane %v2297, 4
        %v2300 = vshll.u32 %v2222, 16
        %v2302 = vrot.slane %v2300, 5
        %v2303 = vsel %vm1401, %v2298, %v2302
        %v2304 = vshrl.u32 %v2222, 16
        %v2306 = vrot.slane %v2304, 4
        %v2307 = vor.u32 %v2306, %v2302
        %v2308 = vrot.slane %v2307, 4
        %v2310 = vshll.u32 %v2223, 16
        %v2312 = vrot.slane %v2310, 5
        %v2313 = vsel %vm1401, %v2308, %v2312
        %v2315 = vshrl.u32 %v2224, 16
        %v2317 = vrot.slane %v2315, 4
        %v2318 = vshll.u32 %v2224, 16
        %v2320 = vrot.slane %v2318, 5
        %v2321 = vor.u32 %v2317, %v2320
        %v2322 = vrot.slane %v2321, 4
        %v2324 = vshll.u32 %v2225, 16
        %v2326 = vrot.slane %v2324, 5
        %v2327 = vsel %vm1401, %v2322, %v2326
        %v2328 = vshrl.u32 %v2225, 16
        %v2330 = vrot.slane %v2328, 4
        %v2331 = vor.u32 %v2330, %v2326
        %v2332 = vrot.slane %v2331, 4
        %v2334 = vshll.u32 %v2226, 16
        %v2336 = vrot.slane %v2334, 5
        %v2337 = vsel %vm1401, %v2332, %v2336
        %v2339 = vshrl.u32 %v2227, 16
        %v2341 = vrot.slane %v2339, 4
        %v2342 = vshll.u32 %v2227, 16
        %v2344 = vrot.slane %v2342, 5
        %v2345 = vor.u32 %v2341, %v2344
        %v2346 = vrot.slane %v2345, 4
        %v2348 = vshll.u32 %v2228, 16
        %v2350 = vrot.slane %v2348, 5
        %v2351 = vsel %vm1401, %v2346, %v2350
        %v2352 = vshrl.u32 %v2228, 16
        %v2354 = vrot.slane %v2352, 4
        %v2355 = vor.u32 %v2354, %v2350
        %v2356 = vrot.slane %v2355, 4
        %v2358 = vshll.u32 %v2229, 16
        %v2360 = vrot.slane %v2358, 5
        %v2361 = vsel %vm1401, %v2356, %v2360
        %v2363 = vshrl.u32 %v2230, 16
        %v2365 = vrot.slane %v2363, 4
        %v2366 = vshll.u32 %v2230, 16
        %v2368 = vrot.slane %v2366, 5
        %v2369 = vor.u32 %v2365, %v2368
        %v2370 = vrot.slane %v2369, 4
        %v2372 = vshll.u32 %v2231, 16
        %v2374 = vrot.slane %v2372, 5
        %v2375 = vsel %vm1401, %v2370, %v2374
        %v2376 = vshrl.u32 %v2231, 16
        %v2378 = vrot.slane %v2376, 4
        %v2379 = vor.u32 %v2378, %v2374
        %v2380 = vrot.slane %v2379, 4
        %v2382 = vshll.u32 %v2232, 16
        %v2384 = vrot.slane %v2382, 5
        %v2385 = vsel %vm1401, %v2380, %v2384
        %v2387 = vshrl.u32 %v2233, 16
        %v2389 = vrot.slane %v2387, 4
        %v2390 = vshll.u32 %v2233, 16
        %v2392 = vrot.slane %v2390, 5
        %v2393 = vor.u32 %v2389, %v2392
        %v2394 = vrot.slane %v2393, 4
        %v2396 = vshll.u32 %v2234, 16
        %v2398 = vrot.slane %v2396, 5
        %v2399 = vsel %vm1401, %v2394, %v2398
        %v2400 = vshrl.u32 %v2234, 16
        %v2402 = vrot.slane %v2400, 4
        %v2403 = vor.u32 %v2402, %v2398
        %v2404 = vrot.slane %v2403, 4
        %v2406 = vshll.u32 %v2235, 16
        %v2408 = vrot.slane %v2406, 5
        %v2409 = vsel %vm1401, %v2404, %v2408
        %v2411 = vshrl.u32 %v2236, 16
        %v2413 = vrot.slane %v2411, 4
        %v2414 = vshll.u32 %v2236, 16
        %v2416 = vrot.slane %v2414, 5
        %v2417 = vor.u32 %v2413, %v2416
        %v2418 = vrot.slane %v2417, 4
        %v2420 = vshll.u32 %v2237, 16
        %v2422 = vrot.slane %v2420, 5
        %v2423 = vsel %vm1401, %v2418, %v2422
        %v2424 = vshrl.u32 %v2237, 16
        %v2426 = vrot.slane %v2424, 4
        %v2427 = vor.u32 %v2426, %v2422
        %v2428 = vrot.slane %v2427, 4
        %v2430 = vshll.u32 %v2238, 16
        %v2432 = vrot.slane %v2430, 5
        %v2433 = vsel %vm1401, %v2428, %v2432
        %v2435 = vshrl.u32 %v2239, 16
        %v2437 = vrot.slane %v2435, 4
        %v2438 = vshll.u32 %v2239, 16
        %v2440 = vrot.slane %v2438, 5
        %v2441 = vor.u32 %v2437, %v2440
        %v2442 = vrot.slane %v2441, 4
        %v2444 = vshll.u32 %v2240, 16
        %v2446 = vrot.slane %v2444, 5
        %v2447 = vsel %vm1401, %v2442, %v2446
        %v2448 = vshrl.u32 %v2240, 16
        %v2450 = vrot.slane %v2448, 4
        %v2451 = vor.u32 %v2450, %v2446
        %v2452 = vrot.slane %v2451, 4
        %v2454 = vshll.u32 %v2241, 16
        %v2456 = vrot.slane %v2454, 5
        %v2457 = vsel %vm1401, %v2452, %v2456
        %v2459 = vshrl.u32 %v2242, 16
        %v2461 = vrot.slane %v2459, 4
        %v2462 = vshll.u32 %v2242, 16
        %v2464 = vrot.slane %v2462, 5
        %v2465 = vor.u32 %v2461, %v2464
        %v2466 = vrot.slane %v2465, 4
        %v2468 = vshll.u32 %v2243, 16
        %v2470 = vrot.slane %v2468, 5
        %v2471 = vsel %vm1401, %v2466, %v2470
        %v2472 = vshrl.u32 %v2243, 16
        %v2474 = vrot.slane %v2472, 4
        %v2475 = vor.u32 %v2474, %v2470
        %v2476 = vrot.slane %v2475, 4
        %v2478 = vshll.u32 %v2244, 16
        %v2480 = vrot.slane %v2478, 5
        %v2481 = vsel %vm1401, %v2476, %v2480
        %v2483 = vshrl.u32 %v2245, 16
        %v2485 = vrot.slane %v2483, 4
        %v2486 = vshll.u32 %v2245, 16
        %v2488 = vrot.slane %v2486, 5
        %v2489 = vor.u32 %v2485, %v2488
        %v2490 = vrot.slane %v2489, 4
        %v2492 = vshll.u32 %v2246, 16
        %v2494 = vrot.slane %v2492, 5
        %v2495 = vsel %vm1401, %v2490, %v2494
        %v2496 = vshrl.u32 %v2246, 16
        %v2498 = vrot.slane %v2496, 4
        %v2499 = vor.u32 %v2498, %v2494
        %v2500 = vrot.slane %v2499, 4
        %v2502 = vshll.u32 %v2247, 16
        %v2504 = vrot.slane %v2502, 5
        %v2505 = vsel %vm1401, %v2500, %v2504
        %v2507 = vshrl.u32 %v2248, 16
        %v2509 = vrot.slane %v2507, 4
        %v2510 = vshll.u32 %v2248, 16
        %v2512 = vrot.slane %v2510, 5
        %v2513 = vor.u32 %v2509, %v2512
        %v2514 = vrot.slane %v2513, 4
        %v2516 = vshll.u32 %v2249, 16
        %v2518 = vrot.slane %v2516, 5
        %v2519 = vsel %vm1401, %v2514, %v2518
        %v2520 = vshrl.u32 %v2249, 16
        %v2522 = vrot.slane %v2520, 4
        %v2523 = vor.u32 %v2522, %v2518
        %v2524 = vrot.slane %v2523, 4
        %v2526 = vshll.u32 %v2250, 16
        %v2528 = vrot.slane %v2526, 5
        %v2529 = vsel %vm1401, %v2524, %v2528
        %v2531 = vshrl.u32 %v2251, 16
        %v2533 = vrot.slane %v2531, 4
        %v2534 = vshll.u32 %v2251, 16
        %v2536 = vrot.slane %v2534, 5
        %v2537 = vor.u32 %v2533, %v2536
        %v2538 = vrot.slane %v2537, 4
        %v2540 = vshll.u32 %v2252, 16
        %v2542 = vrot.slane %v2540, 5
        %v2543 = vsel %vm1401, %v2538, %v2542
        %v2544 = vshrl.u32 %v2252, 16
        %v2546 = vrot.slane %v2544, 4
        %v2547 = vor.u32 %v2546, %v2542
        %v2548 = vrot.slane %v2547, 4
        %v2550 = vshll.u32 %v2253, 16
        %v2552 = vrot.slane %v2550, 5
        %v2553 = vsel %vm1401, %v2548, %v2552
        %v2555 = vshrl.u32 %v2254, 16
        %v2557 = vrot.slane %v2555, 4
        %v2558 = vshll.u32 %v2254, 16
        %v2560 = vrot.slane %v2558, 5
        %v2561 = vor.u32 %v2557, %v2560
        %v2562 = vrot.slane %v2561, 4
        %v2564 = vshll.u32 %v2255, 16
        %v2566 = vrot.slane %v2564, 5
        %v2567 = vsel %vm1401, %v2562, %v2566
        %v2568 = vshrl.u32 %v2255, 16
        %v2570 = vrot.slane %v2568, 4
        %v2571 = vor.u32 %v2570, %v2566
        %v2572 = vrot.slane %v2571, 4
        %v2574 = vshll.u32 %v2256, 16
        %v2576 = vrot.slane %v2574, 5
        %v2577 = vsel %vm1401, %v2572, %v2576
        %v2579 = vshrl.u32 %v2257, 16
        %v2581 = vrot.slane %v2579, 4
        %v2582 = vshll.u32 %v2257, 16
        %v2584 = vrot.slane %v2582, 5
        %v2585 = vor.u32 %v2581, %v2584
        %v2586 = vrot.slane %v2585, 4
        %v2588 = vshll.u32 %v2258, 16
        %v2590 = vrot.slane %v2588, 5
        %v2591 = vsel %vm1401, %v2586, %v2590
        %v2592 = vshrl.u32 %v2258, 16
        %v2594 = vrot.slane %v2592, 4
        %v2595 = vor.u32 %v2594, %v2590
        %v2596 = vrot.slane %v2595, 4
        %v2598 = vshll.u32 %v2259, 16
        %v2600 = vrot.slane %v2598, 5
        %v2601 = vsel %vm1401, %v2596, %v2600
        %v2603 = vshrl.u32 %v2260, 16
        %v2605 = vrot.slane %v2603, 4
        %v2606 = vshll.u32 %v2260, 16
        %v2608 = vrot.slane %v2606, 5
        %v2609 = vor.u32 %v2605, %v2608
        %v2610 = vrot.slane %v2609, 4
        %v2612 = vshll.u32 %v2261, 16
        %v2614 = vrot.slane %v2612, 5
        %v2615 = vsel %vm1401, %v2610, %v2614
        %v2616 = vshrl.u32 %v2261, 16
        %v2618 = vrot.slane %v2616, 4
        %v2619 = vor.u32 %v2618, %v2614
        %v2620 = vrot.slane %v2619, 4
        %v2622 = vshll.u32 %v2262, 16
        %v2624 = vrot.slane %v2622, 5
        %v2625 = vsel %vm1401, %v2620, %v2624
        %v2627 = vshrl.u32 %v2263, 16
        %v2629 = vrot.slane %v2627, 4
        %v2630 = vshll.u32 %v2263, 16
        %v2632 = vrot.slane %v2630, 5
        %v2633 = vor.u32 %v2629, %v2632
        %v2634 = vrot.slane %v2633, 4
        %v2636 = vshll.u32 %v2264, 16
        %v2638 = vrot.slane %v2636, 5
        %v2639 = vsel %vm1401, %v2634, %v2638
        %v2640 = vshrl.u32 %v2264, 16
        %v2642 = vrot.slane %v2640, 4
        %v2643 = vor.u32 %v2642, %v2638
        %v2644 = vrot.slane %v2643, 4
        %v2646 = vshll.u32 %v2265, 16
        %v2648 = vrot.slane %v2646, 5
        %v2649 = vsel %vm1401, %v2644, %v2648
        %s2650 = scalar_lea.vmem %s1, 2
        %v2651 = vld [vmem:[%s2650] sm:$0x3]
        %v2652 = vunpack.c.l.b16 %v1415
        %v2653 = vunpack.c.l.b16 %v1425
        %v2654 = vunpack.c.l.b16 %v1439
        %v2655 = vunpack.c.l.b16 %v1449
        %v2656 = vunpack.c.l.b16 %v1463
        %v2657 = vunpack.c.l.b16 %v1473
        %v2658 = vunpack.c.l.b16 %v1487
        %v2659 = vunpack.c.l.b16 %v1497
        %v2660 = vunpack.c.l.b16 %v1511
        %v2661 = vunpack.c.l.b16 %v1521
        %v2662 = vunpack.c.l.b16 %v1535
        %v2663 = vunpack.c.l.b16 %v1545
        %v2664 = vunpack.c.l.b16 %v1559
        %v2665 = vunpack.c.l.b16 %v1569
        %v2666 = vunpack.c.l.b16 %v1583
        %v2667 = vunpack.c.l.b16 %v1593
        %v2668 = vunpack.c.l.b16 %v1607
        %v2669 = vunpack.c.l.b16 %v1617
        %v2670 = vunpack.c.l.b16 %v1631
        %v2671 = vunpack.c.l.b16 %v1641
        %v2672 = vunpack.c.l.b16 %v1655
        %v2673 = vunpack.c.l.b16 %v1665
        %v2674 = vunpack.c.l.b16 %v1679
        %v2675 = vunpack.c.l.b16 %v1689
        %v2676 = vunpack.c.l.b16 %v1703
        %v2677 = vunpack.c.l.b16 %v1713
        %v2678 = vunpack.c.l.b16 %v1727
        %v2679 = vunpack.c.l.b16 %v1737
        %v2680 = vunpack.c.l.b16 %v1751
        %v2681 = vunpack.c.l.b16 %v1761
        %v2682 = vunpack.c.l.b16 %v1775
        %v2683 = vunpack.c.l.b16 %v1785
        %v2684 = vpack.c.b16 %v2653, %v2652
        %v2685 = vpack.c.b16 %v2655, %v2654
        %v2686 = vpack.c.b16 %v2657, %v2656
        %v2687 = vpack.c.b16 %v2659, %v2658
        %v2688 = vpack.c.b16 %v2661, %v2660
        %v2689 = vpack.c.b16 %v2663, %v2662
        %v2690 = vpack.c.b16 %v2665, %v2664
        %v2691 = vpack.c.b16 %v2667, %v2666
        %v2692 = vpack.c.b16 %v2669, %v2668
        %v2693 = vpack.c.b16 %v2671, %v2670
        %v2694 = vpack.c.b16 %v2673, %v2672
        %v2695 = vpack.c.b16 %v2675, %v2674
        %v2696 = vpack.c.b16 %v2677, %v2676
        %v2697 = vpack.c.b16 %v2679, %v2678
        %v2698 = vpack.c.b16 %v2681, %v2680
        %v2699 = vpack.c.b16 %v2683, %v2682
        %v2701 = vsel %vm385, %v2684, 0
        %v2704 = vsel %vm385, %v2685, 0
        %v2707 = vsel %vm385, %v2686, 0
        %v2710 = vsel %vm385, %v2687, 0
        %v2713 = vsel %vm385, %v2688, 0
        %v2716 = vsel %vm385, %v2689, 0
        %v2719 = vsel %vm385, %v2690, 0
        %v2722 = vsel %vm385, %v2691, 0
        %v2725 = vsel %vm385, %v2692, 0
        %v2728 = vsel %vm385, %v2693, 0
        %v2731 = vsel %vm385, %v2694, 0
        %v2734 = vsel %vm385, %v2695, 0
        %v2737 = vsel %vm385, %v2696, 0
        %v2740 = vsel %vm385, %v2697, 0
        %v2743 = vsel %vm385, %v2698, 0
        %v2746 = vsel %vm385, %v2699, 0
        %v2749 = vsel %vm434, %v2651, 0
        %2751 = vmatprep.subr.bf16.mxu0 0
        %2752 = vmatpush1.bf16.msra.mxu0 %v2749
        %2753 = vmatprep.subr.bf16.mxu0 0
        %2754 = vmatpush1.bf16.msra.mxu0 0
        %2755 = vmatprep.subr.bf16.mxu0 0
        %2756 = vmatpush1.bf16.msra.mxu0 0
        %2757 = vmatprep.subr.bf16.mxu0 0
        %2758 = vmatpush1.bf16.msra.mxu0 0
        %2759 = vmatprep.subr.bf16.mxu0 0
        %2760 = vmatpush1.bf16.msra.mxu0 0
        %2761 = vmatprep.subr.bf16.mxu0 0
        %2762 = vmatpush1.bf16.msra.mxu0 0
        %2763 = vmatprep.subr.bf16.mxu0 0
        %2764 = vmatpush1.bf16.msra.mxu0 0
        %2765 = vmatprep.subr.bf16.mxu0 0
        %2766 = vmatpush1.bf16.msra.mxu0 0
        %2767 = vmatprep.subr.bf16.mxu0 0
        %2768 = vmatpush1.bf16.msra.mxu0 0
        %2769 = vmatprep.subr.bf16.mxu0 0
        %2770 = vmatpush1.bf16.msra.mxu0 0
        %2771 = vmatprep.subr.bf16.mxu0 0
        %2772 = vmatpush1.bf16.msra.mxu0 0
        %2773 = vmatprep.subr.bf16.mxu0 0
        %2774 = vmatpush1.bf16.msra.mxu0 0
        %2775 = vmatprep.subr.bf16.mxu0 0
        %2776 = vmatpush1.bf16.msra.mxu0 0
        %2777 = vmatprep.subr.bf16.mxu0 0
        %2778 = vmatpush1.bf16.msra.mxu0 0
        %2779 = vmatprep.subr.bf16.mxu0 0
        %2780 = vmatpush1.bf16.msra.mxu0 0
        %2781 = vmatprep.subr.bf16.mxu0 0
        %2782 = vmatpush1.bf16.msra.mxu0 0
        %2783 = vmatprep.mubr.bf16.mxu0 0
        %2784 = vmatmul.mubr.bf16.gmra.mrb[0].mxu0 %v2701
        %v2785 = vpop.f32.mrb[0].mxu0
        %v2786 = vadd.f32 0.0, %v2785
        %v2787 = vpop.f32.mrb[0].mxu0
        %v2788 = vpop.f32.mrb[0].mxu0
        %v2789 = vadd.f32 0.0, %v2788
        %v2790 = vpop.f32.mrb[0].mxu0
        %2791 = vmatprep.mubr.bf16.mxu0 0
        %2792 = vmatmul.mubr.bf16.gmra.mrb[0].mxu0 %v2704
        %v2793 = vpop.f32.mrb[0].mxu0
        %v2794 = vadd.f32 0.0, %v2793
        %v2795 = vpop.f32.mrb[0].mxu0
        %v2796 = vpop.f32.mrb[0].mxu0
        %v2797 = vadd.f32 0.0, %v2796
        %v2798 = vpop.f32.mrb[0].mxu0
        %2799 = vmatprep.mubr.bf16.mxu0 0
        %2800 = vmatmul.mubr.bf16.gmra.mrb[0].mxu0 %v2707
        %v2801 = vpop.f32.mrb[0].mxu0
        %v2802 = vadd.f32 0.0, %v2801
        %v2803 = vpop.f32.mrb[0].mxu0
        %v2804 = vpop.f32.mrb[0].mxu0
        %v2805 = vadd.f32 0.0, %v2804
        %v2806 = vpop.f32.mrb[0].mxu0
        %2807 = vmatprep.mubr.bf16.mxu0 0
        %2808 = vmatmul.mubr.bf16.gmra.mrb[0].mxu0 %v2710
        %v2809 = vpop.f32.mrb[0].mxu0
        %v2810 = vadd.f32 0.0, %v2809
        %v2811 = vpop.f32.mrb[0].mxu0
        %v2812 = vpop.f32.mrb[0].mxu0
        %v2813 = vadd.f32 0.0, %v2812
        %v2814 = vpop.f32.mrb[0].mxu0
        %2815 = vmatprep.mubr.bf16.mxu0 0
        %2816 = vmatmul.mubr.bf16.gmra.mrb[0].mxu0 %v2713
        %v2817 = vpop.f32.mrb[0].mxu0
        %v2818 = vadd.f32 0.0, %v2817
        %v2819 = vpop.f32.mrb[0].mxu0
        %v2820 = vpop.f32.mrb[0].mxu0
        %v2821 = vadd.f32 0.0, %v2820
        %v2822 = vpop.f32.mrb[0].mxu0
        %2823 = vmatprep.mubr.bf16.mxu0 0
        %2824 = vmatmul.mubr.bf16.gmra.mrb[0].mxu0 %v2716
        %v2825 = vpop.f32.mrb[0].mxu0
        %v2826 = vadd.f32 0.0, %v2825
        %v2827 = vpop.f32.mrb[0].mxu0
        %v2828 = vpop.f32.mrb[0].mxu0
        %v2829 = vadd.f32 0.0, %v2828
        %v2830 = vpop.f32.mrb[0].mxu0
        %2831 = vmatprep.mubr.bf16.mxu0 0
        %2832 = vmatmul.mubr.bf16.gmra.mrb[0].mxu0 %v2719
        %v2833 = vpop.f32.mrb[0].mxu0
        %v2834 = vadd.f32 0.0, %v2833
        %v2835 = vpop.f32.mrb[0].mxu0
        %v2836 = vpop.f32.mrb[0].mxu0
        %v2837 = vadd.f32 0.0, %v2836
        %v2838 = vpop.f32.mrb[0].mxu0
        %2839 = vmatprep.mubr.bf16.mxu0 0
        %2840 = vmatmul.mubr.bf16.gmra.mrb[0].mxu0 %v2722
        %v2841 = vpop.f32.mrb[0].mxu0
        %v2842 = vadd.f32 0.0, %v2841
        %v2843 = vpop.f32.mrb[0].mxu0
        %v2844 = vpop.f32.mrb[0].mxu0
        %v2845 = vadd.f32 0.0, %v2844
        %v2846 = vpop.f32.mrb[0].mxu0
        %2847 = vmatprep.mubr.bf16.mxu0 0
        %2848 = vmatmul.mubr.bf16.gmra.mrb[0].mxu0 %v2725
        %v2849 = vpop.f32.mrb[0].mxu0
        %v2850 = vadd.f32 0.0, %v2849
        %v2851 = vpop.f32.mrb[0].mxu0
        %v2852 = vpop.f32.mrb[0].mxu0
        %v2853 = vadd.f32 0.0, %v2852
        %v2854 = vpop.f32.mrb[0].mxu0
        %2855 = vmatprep.mubr.bf16.mxu0 0
        %2856 = vmatmul.mubr.bf16.gmra.mrb[0].mxu0 %v2728
        %v2857 = vpop.f32.mrb[0].mxu0
        %v2858 = vadd.f32 0.0, %v2857
        %v2859 = vpop.f32.mrb[0].mxu0
        %v2860 = vpop.f32.mrb[0].mxu0
        %v2861 = vadd.f32 0.0, %v2860
        %v2862 = vpop.f32.mrb[0].mxu0
        %2863 = vmatprep.mubr.bf16.mxu0 0
        %2864 = vmatmul.mubr.bf16.gmra.mrb[0].mxu0 %v2731
        %v2865 = vpop.f32.mrb[0].mxu0
        %v2866 = vadd.f32 0.0, %v2865
        %v2867 = vpop.f32.mrb[0].mxu0
        %v2868 = vpop.f32.mrb[0].mxu0
        %v2869 = vadd.f32 0.0, %v2868
        %v2870 = vpop.f32.mrb[0].mxu0
        %2871 = vmatprep.mubr.bf16.mxu0 0
        %2872 = vmatmul.mubr.bf16.gmra.mrb[0].mxu0 %v2734
        %v2873 = vpop.f32.mrb[0].mxu0
        %v2874 = vadd.f32 0.0, %v2873
        %v2875 = vpop.f32.mrb[0].mxu0
        %v2876 = vpop.f32.mrb[0].mxu0
        %v2877 = vadd.f32 0.0, %v2876
        %v2878 = vpop.f32.mrb[0].mxu0
        %2879 = vmatprep.mubr.bf16.mxu0 0
        %2880 = vmatmul.mubr.bf16.gmra.mrb[0].mxu0 %v2737
        %v2881 = vpop.f32.mrb[0].mxu0
        %v2882 = vadd.f32 0.0, %v2881
        %v2883 = vpop.f32.mrb[0].mxu0
        %v2884 = vpop.f32.mrb[0].mxu0
        %v2885 = vadd.f32 0.0, %v2884
        %v2886 = vpop.f32.mrb[0].mxu0
        %2887 = vmatprep.mubr.bf16.mxu0 0
        %2888 = vmatmul.mubr.bf16.gmra.mrb[0].mxu0 %v2740
        %v2889 = vpop.f32.mrb[0].mxu0
        %v2890 = vadd.f32 0.0, %v2889
        %v2891 = vpop.f32.mrb[0].mxu0
        %v2892 = vpop.f32.mrb[0].mxu0
        %v2893 = vadd.f32 0.0, %v2892
        %v2894 = vpop.f32.mrb[0].mxu0
        %2895 = vmatprep.mubr.bf16.mxu0 0
        %2896 = vmatmul.mubr.bf16.gmra.mrb[0].mxu0 %v2743
        %v2897 = vpop.f32.mrb[0].mxu0
        %v2898 = vadd.f32 0.0, %v2897
        %v2899 = vpop.f32.mrb[0].mxu0
        %v2900 = vpop.f32.mrb[0].mxu0
        %v2901 = vadd.f32 0.0, %v2900
        %v2902 = vpop.f32.mrb[0].mxu0
        %2903 = vmatprep.mubr.bf16.mxu0 0
        %2904 = vmatmul.mubr.bf16.gmra.mrb[0].mxu0 %v2746
        %v2905 = vpop.f32.mrb[0].mxu0
        %v2906 = vadd.f32 0.0, %v2905
        %v2907 = vpop.f32.mrb[0].mxu0
        %v2908 = vpop.f32.mrb[0].mxu0
        %v2909 = vadd.f32 0.0, %v2908
        %v2910 = vpop.f32.mrb[0].mxu0
        %2911 = vdwg.mxu0
        %v2912 = vadd.f32 %v765, %v2786
        %v2913 = vadd.f32 %v768, %v2789
        %v2914 = vadd.f32 %v773, %v2794
        %v2915 = vadd.f32 %v776, %v2797
        %v2916 = vadd.f32 %v781, %v2802
        %v2917 = vadd.f32 %v784, %v2805
        %v2918 = vadd.f32 %v789, %v2810
        %v2919 = vadd.f32 %v792, %v2813
        %v2920 = vadd.f32 %v797, %v2818
        %v2921 = vadd.f32 %v800, %v2821
        %v2922 = vadd.f32 %v805, %v2826
        %v2923 = vadd.f32 %v808, %v2829
        %v2924 = vadd.f32 %v813, %v2834
        %v2925 = vadd.f32 %v816, %v2837
        %v2926 = vadd.f32 %v821, %v2842
        %v2927 = vadd.f32 %v824, %v2845
        %v2928 = vadd.f32 %v829, %v2850
        %v2929 = vadd.f32 %v832, %v2853
        %v2930 = vadd.f32 %v837, %v2858
        %v2931 = vadd.f32 %v840, %v2861
        %v2932 = vadd.f32 %v845, %v2866
        %v2933 = vadd.f32 %v848, %v2869
        %v2934 = vadd.f32 %v853, %v2874
        %v2935 = vadd.f32 %v856, %v2877
        %v2936 = vadd.f32 %v861, %v2882
        %v2937 = vadd.f32 %v864, %v2885
        %v2938 = vadd.f32 %v869, %v2890
        %v2939 = vadd.f32 %v872, %v2893
        %v2940 = vadd.f32 %v877, %v2898
        %v2941 = vadd.f32 %v880, %v2901
        %v2942 = vadd.f32 %v885, %v2906
        %v2943 = vadd.f32 %v888, %v2909
        %s2944 = scalar_lea.vmem %s1, 8
        %v2945 = vld [vmem:[%s2944] sm:$0x3]
        %v2946 = vunpack.c.l.b16 %v1847
        %v2947 = vunpack.c.l.b16 %v1857
        %v2948 = vunpack.c.l.b16 %v1871
        %v2949 = vunpack.c.l.b16 %v1881
        %v2950 = vunpack.c.l.b16 %v1895
        %v2951 = vunpack.c.l.b16 %v1905
        %v2952 = vunpack.c.l.b16 %v1919
        %v2953 = vunpack.c.l.b16 %v1929
        %v2954 = vunpack.c.l.b16 %v1943
        %v2955 = vunpack.c.l.b16 %v1953
        %v2956 = vunpack.c.l.b16 %v1967
        %v2957 = vunpack.c.l.b16 %v1977
        %v2958 = vunpack.c.l.b16 %v1991
        %v2959 = vunpack.c.l.b16 %v2001
        %v2960 = vunpack.c.l.b16 %v2015
        %v2961 = vunpack.c.l.b16 %v2025
        %v2962 = vunpack.c.l.b16 %v2039
        %v2963 = vunpack.c.l.b16 %v2049
        %v2964 = vunpack.c.l.b16 %v2063
        %v2965 = vunpack.c.l.b16 %v2073
        %v2966 = vunpack.c.l.b16 %v2087
        %v2967 = vunpack.c.l.b16 %v2097
        %v2968 = vunpack.c.l.b16 %v2111
        %v2969 = vunpack.c.l.b16 %v2121
        %v2970 = vunpack.c.l.b16 %v2135
        %v2971 = vunpack.c.l.b16 %v2145
        %v2972 = vunpack.c.l.b16 %v2159
        %v2973 = vunpack.c.l.b16 %v2169
        %v2974 = vunpack.c.l.b16 %v2183
        %v2975 = vunpack.c.l.b16 %v2193
        %v2976 = vunpack.c.l.b16 %v2207
        %v2977 = vunpack.c.l.b16 %v2217
        %v2978 = vpack.c.b16 %v2947, %v2946
        %v2979 = vpack.c.b16 %v2949, %v2948
        %v2980 = vpack.c.b16 %v2951, %v2950
        %v2981 = vpack.c.b16 %v2953, %v2952
        %v2982 = vpack.c.b16 %v2955, %v2954
        %v2983 = vpack.c.b16 %v2957, %v2956
        %v2984 = vpack.c.b16 %v2959, %v2958
        %v2985 = vpack.c.b16 %v2961, %v2960
        %v2986 = vpack.c.b16 %v2963, %v2962
        %v2987 = vpack.c.b16 %v2965, %v2964
        %v2988 = vpack.c.b16 %v2967, %v2966
        %v2989 = vpack.c.b16 %v2969, %v2968
        %v2990 = vpack.c.b16 %v2971, %v2970
        %v2991 = vpack.c.b16 %v2973, %v2972
        %v2992 = vpack.c.b16 %v2975, %v2974
        %v2993 = vpack.c.b16 %v2977, %v2976
        %v2995 = vsel %vm385, %v2978, 0
        %v2998 = vsel %vm385, %v2979, 0
        %v3001 = vsel %vm385, %v2980, 0
        %v3004 = vsel %vm385, %v2981, 0
        %v3007 = vsel %vm385, %v2982, 0
        %v3010 = vsel %vm385, %v2983, 0
        %v3013 = vsel %vm385, %v2984, 0
        %v3016 = vsel %vm385, %v2985, 0
        %v3019 = vsel %vm385, %v2986, 0
        %v3022 = vsel %vm385, %v2987, 0
        %v3025 = vsel %vm385, %v2988, 0
        %v3028 = vsel %vm385, %v2989, 0
        %v3031 = vsel %vm385, %v2990, 0
        %v3034 = vsel %vm385, %v2991, 0
        %v3037 = vsel %vm385, %v2992, 0
        %v3040 = vsel %vm385, %v2993, 0
        %v3043 = vsel %vm434, %v2945, 0
        %3045 = vmatprep.subr.bf16.mxu0 0
        %3046 = vmatpush1.bf16.msra.mxu0 %v3043
        %3047 = vmatprep.subr.bf16.mxu0 0
        %3048 = vmatpush1.bf16.msra.mxu0 0
        %3049 = vmatprep.subr.bf16.mxu0 0
        %3050 = vmatpush1.bf16.msra.mxu0 0
        %3051 = vmatprep.subr.bf16.mxu0 0
        %3052 = vmatpush1.bf16.msra.mxu0 0
        %3053 = vmatprep.subr.bf16.mxu0 0
        %3054 = vmatpush1.bf16.msra.mxu0 0
        %3055 = vmatprep.subr.bf16.mxu0 0
        %3056 = vmatpush1.bf16.msra.mxu0 0
        %3057 = vmatprep.subr.bf16.mxu0 0
        %3058 = vmatpush1.bf16.msra.mxu0 0
        %3059 = vmatprep.subr.bf16.mxu0 0
        %3060 = vmatpush1.bf16.msra.mxu0 0
        %3061 = vmatprep.subr.bf16.mxu0 0
        %3062 = vmatpush1.bf16.msra.mxu0 0
        %3063 = vmatprep.subr.bf16.mxu0 0
        %3064 = vmatpush1.bf16.msra.mxu0 0
        %3065 = vmatprep.subr.bf16.mxu0 0
        %3066 = vmatpush1.bf16.msra.mxu0 0
        %3067 = vmatprep.subr.bf16.mxu0 0
        %3068 = vmatpush1.bf16.msra.mxu0 0
        %3069 = vmatprep.subr.bf16.mxu0 0
        %3070 = vmatpush1.bf16.msra.mxu0 0
        %3071 = vmatprep.subr.bf16.mxu0 0
        %3072 = vmatpush1.bf16.msra.mxu0 0
        %3073 = vmatprep.subr.bf16.mxu0 0
        %3074 = vmatpush1.bf16.msra.mxu0 0
        %3075 = vmatprep.subr.bf16.mxu0 0
        %3076 = vmatpush1.bf16.msra.mxu0 0
        %3077 = vmatprep.mubr.bf16.mxu0 0
        %3078 = vmatmul.mubr.bf16.gmra.mrb[0].mxu0 %v2995
        %v3079 = vpop.f32.mrb[0].mxu0
        %v3080 = vadd.f32 0.0, %v3079
        %v3081 = vpop.f32.mrb[0].mxu0
        %v3082 = vpop.f32.mrb[0].mxu0
        %v3083 = vadd.f32 0.0, %v3082
        %v3084 = vpop.f32.mrb[0].mxu0
        %3085 = vmatprep.mubr.bf16.mxu0 0
        %3086 = vmatmul.mubr.bf16.gmra.mrb[0].mxu0 %v2998
        %v3087 = vpop.f32.mrb[0].mxu0
        %v3088 = vadd.f32 0.0, %v3087
        %v3089 = vpop.f32.mrb[0].mxu0
        %v3090 = vpop.f32.mrb[0].mxu0
        %v3091 = vadd.f32 0.0, %v3090
        %v3092 = vpop.f32.mrb[0].mxu0
        %3093 = vmatprep.mubr.bf16.mxu0 0
        %3094 = vmatmul.mubr.bf16.gmra.mrb[0].mxu0 %v3001
        %v3095 = vpop.f32.mrb[0].mxu0
        %v3096 = vadd.f32 0.0, %v3095
        %v3097 = vpop.f32.mrb[0].mxu0
        %v3098 = vpop.f32.mrb[0].mxu0
        %v3099 = vadd.f32 0.0, %v3098
        %v3100 = vpop.f32.mrb[0].mxu0
        %3101 = vmatprep.mubr.bf16.mxu0 0
        %3102 = vmatmul.mubr.bf16.gmra.mrb[0].mxu0 %v3004
        %v3103 = vpop.f32.mrb[0].mxu0
        %v3104 = vadd.f32 0.0, %v3103
        %v3105 = vpop.f32.mrb[0].mxu0
        %v3106 = vpop.f32.mrb[0].mxu0
        %v3107 = vadd.f32 0.0, %v3106
        %v3108 = vpop.f32.mrb[0].mxu0
        %3109 = vmatprep.mubr.bf16.mxu0 0
        %3110 = vmatmul.mubr.bf16.gmra.mrb[0].mxu0 %v3007
        %v3111 = vpop.f32.mrb[0].mxu0
        %v3112 = vadd.f32 0.0, %v3111
        %v3113 = vpop.f32.mrb[0].mxu0
        %v3114 = vpop.f32.mrb[0].mxu0
        %v3115 = vadd.f32 0.0, %v3114
        %v3116 = vpop.f32.mrb[0].mxu0
        %3117 = vmatprep.mubr.bf16.mxu0 0
        %3118 = vmatmul.mubr.bf16.gmra.mrb[0].mxu0 %v3010
        %v3119 = vpop.f32.mrb[0].mxu0
        %v3120 = vadd.f32 0.0, %v3119
        %v3121 = vpop.f32.mrb[0].mxu0
        %v3122 = vpop.f32.mrb[0].mxu0
        %v3123 = vadd.f32 0.0, %v3122
        %v3124 = vpop.f32.mrb[0].mxu0
        %3125 = vmatprep.mubr.bf16.mxu0 0
        %3126 = vmatmul.mubr.bf16.gmra.mrb[0].mxu0 %v3013
        %v3127 = vpop.f32.mrb[0].mxu0
        %v3128 = vadd.f32 0.0, %v3127
        %v3129 = vpop.f32.mrb[0].mxu0
        %v3130 = vpop.f32.mrb[0].mxu0
        %v3131 = vadd.f32 0.0, %v3130
        %v3132 = vpop.f32.mrb[0].mxu0
        %3133 = vmatprep.mubr.bf16.mxu0 0
        %3134 = vmatmul.mubr.bf16.gmra.mrb[0].mxu0 %v3016
        %v3135 = vpop.f32.mrb[0].mxu0
        %v3136 = vadd.f32 0.0, %v3135
        %v3137 = vpop.f32.mrb[0].mxu0
        %v3138 = vpop.f32.mrb[0].mxu0
        %v3139 = vadd.f32 0.0, %v3138
        %v3140 = vpop.f32.mrb[0].mxu0
        %3141 = vmatprep.mubr.bf16.mxu0 0
        %3142 = vmatmul.mubr.bf16.gmra.mrb[0].mxu0 %v3019
        %v3143 = vpop.f32.mrb[0].mxu0
        %v3144 = vadd.f32 0.0, %v3143
        %v3145 = vpop.f32.mrb[0].mxu0
        %v3146 = vpop.f32.mrb[0].mxu0
        %v3147 = vadd.f32 0.0, %v3146
        %v3148 = vpop.f32.mrb[0].mxu0
        %3149 = vmatprep.mubr.bf16.mxu0 0
        %3150 = vmatmul.mubr.bf16.gmra.mrb[0].mxu0 %v3022
        %v3151 = vpop.f32.mrb[0].mxu0
        %v3152 = vadd.f32 0.0, %v3151
        %v3153 = vpop.f32.mrb[0].mxu0
        %v3154 = vpop.f32.mrb[0].mxu0
        %v3155 = vadd.f32 0.0, %v3154
        %v3156 = vpop.f32.mrb[0].mxu0
        %3157 = vmatprep.mubr.bf16.mxu0 0
        %3158 = vmatmul.mubr.bf16.gmra.mrb[0].mxu0 %v3025
        %v3159 = vpop.f32.mrb[0].mxu0
        %v3160 = vadd.f32 0.0, %v3159
        %v3161 = vpop.f32.mrb[0].mxu0
        %v3162 = vpop.f32.mrb[0].mxu0
        %v3163 = vadd.f32 0.0, %v3162
        %v3164 = vpop.f32.mrb[0].mxu0
        %3165 = vmatprep.mubr.bf16.mxu0 0
        %3166 = vmatmul.mubr.bf16.gmra.mrb[0].mxu0 %v3028
        %v3167 = vpop.f32.mrb[0].mxu0
        %v3168 = vadd.f32 0.0, %v3167
        %v3169 = vpop.f32.mrb[0].mxu0
        %v3170 = vpop.f32.mrb[0].mxu0
        %v3171 = vadd.f32 0.0, %v3170
        %v3172 = vpop.f32.mrb[0].mxu0
        %3173 = vmatprep.mubr.bf16.mxu0 0
        %3174 = vmatmul.mubr.bf16.gmra.mrb[0].mxu0 %v3031
        %v3175 = vpop.f32.mrb[0].mxu0
        %v3176 = vadd.f32 0.0, %v3175
        %v3177 = vpop.f32.mrb[0].mxu0
        %v3178 = vpop.f32.mrb[0].mxu0
        %v3179 = vadd.f32 0.0, %v3178
        %v3180 = vpop.f32.mrb[0].mxu0
        %3181 = vmatprep.mubr.bf16.mxu0 0
        %3182 = vmatmul.mubr.bf16.gmra.mrb[0].mxu0 %v3034
        %v3183 = vpop.f32.mrb[0].mxu0
        %v3184 = vadd.f32 0.0, %v3183
        %v3185 = vpop.f32.mrb[0].mxu0
        %v3186 = vpop.f32.mrb[0].mxu0
        %v3187 = vadd.f32 0.0, %v3186
        %v3188 = vpop.f32.mrb[0].mxu0
        %3189 = vmatprep.mubr.bf16.mxu0 0
        %3190 = vmatmul.mubr.bf16.gmra.mrb[0].mxu0 %v3037
        %v3191 = vpop.f32.mrb[0].mxu0
        %v3192 = vadd.f32 0.0, %v3191
        %v3193 = vpop.f32.mrb[0].mxu0
        %v3194 = vpop.f32.mrb[0].mxu0
        %v3195 = vadd.f32 0.0, %v3194
        %v3196 = vpop.f32.mrb[0].mxu0
        %3197 = vmatprep.mubr.bf16.mxu0 0
        %3198 = vmatmul.mubr.bf16.gmra.mrb[0].mxu0 %v3040
        %v3199 = vpop.f32.mrb[0].mxu0
        %v3200 = vadd.f32 0.0, %v3199
        %v3201 = vpop.f32.mrb[0].mxu0
        %v3202 = vpop.f32.mrb[0].mxu0
        %v3203 = vadd.f32 0.0, %v3202
        %v3204 = vpop.f32.mrb[0].mxu0
        %3205 = vdwg.mxu0
        %v3206 = vadd.f32 %v2912, %v3080
        %v3207 = vadd.f32 %v2913, %v3083
        %v3208 = vadd.f32 %v2914, %v3088
        %v3209 = vadd.f32 %v2915, %v3091
        %v3210 = vadd.f32 %v2916, %v3096
        %v3211 = vadd.f32 %v2917, %v3099
        %v3212 = vadd.f32 %v2918, %v3104
        %v3213 = vadd.f32 %v2919, %v3107
        %v3214 = vadd.f32 %v2920, %v3112
        %v3215 = vadd.f32 %v2921, %v3115
        %v3216 = vadd.f32 %v2922, %v3120
        %v3217 = vadd.f32 %v2923, %v3123
        %v3218 = vadd.f32 %v2924, %v3128
        %v3219 = vadd.f32 %v2925, %v3131
        %v3220 = vadd.f32 %v2926, %v3136
        %v3221 = vadd.f32 %v2927, %v3139
        %v3222 = vadd.f32 %v2928, %v3144
        %v3223 = vadd.f32 %v2929, %v3147
        %v3224 = vadd.f32 %v2930, %v3152
        %v3225 = vadd.f32 %v2931, %v3155
        %v3226 = vadd.f32 %v2932, %v3160
        %v3227 = vadd.f32 %v2933, %v3163
        %v3228 = vadd.f32 %v2934, %v3168
        %v3229 = vadd.f32 %v2935, %v3171
        %v3230 = vadd.f32 %v2936, %v3176
        %v3231 = vadd.f32 %v2937, %v3179
        %v3232 = vadd.f32 %v2938, %v3184
        %v3233 = vadd.f32 %v2939, %v3187
        %v3234 = vadd.f32 %v2940, %v3192
        %v3235 = vadd.f32 %v2941, %v3195
        %v3236 = vadd.f32 %v2942, %v3200
        %v3237 = vadd.f32 %v2943, %v3203
        %s3238 = scalar_lea.vmem %s1, 14
        %v3239 = vld [vmem:[%s3238] sm:$0x3]
        %v3241 = vsel %vm434, %v3239, 0
        %3243 = vmatprep.subr.bf16.mxu0 0
        %3244 = vmatpush1.bf16.msra.mxu0 %v3241
        %3245 = vmatprep.subr.bf16.mxu0 0
        %3246 = vmatpush1.bf16.msra.mxu0 0
        %3247 = vmatprep.subr.bf16.mxu0 0
        %3248 = vmatpush1.bf16.msra.mxu0 0
        %3249 = vmatprep.subr.bf16.mxu0 0
        %3250 = vmatpush1.bf16.msra.mxu0 0
        %3251 = vmatprep.subr.bf16.mxu0 0
        %3252 = vmatpush1.bf16.msra.mxu0 0
        %3253 = vmatprep.subr.bf16.mxu0 0
        %3254 = vmatpush1.bf16.msra.mxu0 0
        %3255 = vmatprep.subr.bf16.mxu0 0
        %3256 = vmatpush1.bf16.msra.mxu0 0
        %3257 = vmatprep.subr.bf16.mxu0 0
        %3258 = vmatpush1.bf16.msra.mxu0 0
        %3259 = vmatprep.subr.bf16.mxu0 0
        %3260 = vmatpush1.bf16.msra.mxu0 0
        %3261 = vmatprep.subr.bf16.mxu0 0
        %3262 = vmatpush1.bf16.msra.mxu0 0
        %3263 = vmatprep.subr.bf16.mxu0 0
        %3264 = vmatpush1.bf16.msra.mxu0 0
        %3265 = vmatprep.subr.bf16.mxu0 0
        %3266 = vmatpush1.bf16.msra.mxu0 0
        %3267 = vmatprep.subr.bf16.mxu0 0
        %3268 = vmatpush1.bf16.msra.mxu0 0
        %3269 = vmatprep.subr.bf16.mxu0 0
        %3270 = vmatpush1.bf16.msra.mxu0 0
        %3271 = vmatprep.subr.bf16.mxu0 0
        %3272 = vmatpush1.bf16.msra.mxu0 0
        %3273 = vmatprep.subr.bf16.mxu0 0
        %3274 = vmatpush1.bf16.msra.mxu0 0
        %3275 = vmatprep.mubr.bf16.mxu0 0
        %3276 = vmatmul.mubr.bf16.gmra.mrb[0].mxu0 %v2995
        %v3277 = vpop.f32.mrb[0].mxu0
        %v3278 = vadd.f32 0.0, %v3277
        %v3279 = vpop.f32.mrb[0].mxu0
        %v3280 = vpop.f32.mrb[0].mxu0
        %v3281 = vadd.f32 0.0, %v3280
        %v3282 = vpop.f32.mrb[0].mxu0
        %3283 = vmatprep.mubr.bf16.mxu0 0
        %3284 = vmatmul.mubr.bf16.gmra.mrb[0].mxu0 %v2998
        %v3285 = vpop.f32.mrb[0].mxu0
        %v3286 = vadd.f32 0.0, %v3285
        %v3287 = vpop.f32.mrb[0].mxu0
        %v3288 = vpop.f32.mrb[0].mxu0
        %v3289 = vadd.f32 0.0, %v3288
        %v3290 = vpop.f32.mrb[0].mxu0
        %3291 = vmatprep.mubr.bf16.mxu0 0
        %3292 = vmatmul.mubr.bf16.gmra.mrb[0].mxu0 %v3001
        %v3293 = vpop.f32.mrb[0].mxu0
        %v3294 = vadd.f32 0.0, %v3293
        %v3295 = vpop.f32.mrb[0].mxu0
        %v3296 = vpop.f32.mrb[0].mxu0
        %v3297 = vadd.f32 0.0, %v3296
        %v3298 = vpop.f32.mrb[0].mxu0
        %3299 = vmatprep.mubr.bf16.mxu0 0
        %3300 = vmatmul.mubr.bf16.gmra.mrb[0].mxu0 %v3004
        %v3301 = vpop.f32.mrb[0].mxu0
        %v3302 = vadd.f32 0.0, %v3301
        %v3303 = vpop.f32.mrb[0].mxu0
        %v3304 = vpop.f32.mrb[0].mxu0
        %v3305 = vadd.f32 0.0, %v3304
        %v3306 = vpop.f32.mrb[0].mxu0
        %3307 = vmatprep.mubr.bf16.mxu0 0
        %3308 = vmatmul.mubr.bf16.gmra.mrb[0].mxu0 %v3007
        %v3309 = vpop.f32.mrb[0].mxu0
        %v3310 = vadd.f32 0.0, %v3309
        %v3311 = vpop.f32.mrb[0].mxu0
        %v3312 = vpop.f32.mrb[0].mxu0
        %v3313 = vadd.f32 0.0, %v3312
        %v3314 = vpop.f32.mrb[0].mxu0
        %3315 = vmatprep.mubr.bf16.mxu0 0
        %3316 = vmatmul.mubr.bf16.gmra.mrb[0].mxu0 %v3010
        %v3317 = vpop.f32.mrb[0].mxu0
        %v3318 = vadd.f32 0.0, %v3317
        %v3319 = vpop.f32.mrb[0].mxu0
        %v3320 = vpop.f32.mrb[0].mxu0
        %v3321 = vadd.f32 0.0, %v3320
        %v3322 = vpop.f32.mrb[0].mxu0
        %3323 = vmatprep.mubr.bf16.mxu0 0
        %3324 = vmatmul.mubr.bf16.gmra.mrb[0].mxu0 %v3013
        %v3325 = vpop.f32.mrb[0].mxu0
        %v3326 = vadd.f32 0.0, %v3325
        %v3327 = vpop.f32.mrb[0].mxu0
        %v3328 = vpop.f32.mrb[0].mxu0
        %v3329 = vadd.f32 0.0, %v3328
        %v3330 = vpop.f32.mrb[0].mxu0
        %3331 = vmatprep.mubr.bf16.mxu0 0
        %3332 = vmatmul.mubr.bf16.gmra.mrb[0].mxu0 %v3016
        %v3333 = vpop.f32.mrb[0].mxu0
        %v3334 = vadd.f32 0.0, %v3333
        %v3335 = vpop.f32.mrb[0].mxu0
        %v3336 = vpop.f32.mrb[0].mxu0
        %v3337 = vadd.f32 0.0, %v3336
        %v3338 = vpop.f32.mrb[0].mxu0
        %3339 = vmatprep.mubr.bf16.mxu0 0
        %3340 = vmatmul.mubr.bf16.gmra.mrb[0].mxu0 %v3019
        %v3341 = vpop.f32.mrb[0].mxu0
        %v3342 = vadd.f32 0.0, %v3341
        %v3343 = vpop.f32.mrb[0].mxu0
        %v3344 = vpop.f32.mrb[0].mxu0
        %v3345 = vadd.f32 0.0, %v3344
        %v3346 = vpop.f32.mrb[0].mxu0
        %3347 = vmatprep.mubr.bf16.mxu0 0
        %3348 = vmatmul.mubr.bf16.gmra.mrb[0].mxu0 %v3022
        %v3349 = vpop.f32.mrb[0].mxu0
        %v3350 = vadd.f32 0.0, %v3349
        %v3351 = vpop.f32.mrb[0].mxu0
        %v3352 = vpop.f32.mrb[0].mxu0
        %v3353 = vadd.f32 0.0, %v3352
        %v3354 = vpop.f32.mrb[0].mxu0
        %3355 = vmatprep.mubr.bf16.mxu0 0
        %3356 = vmatmul.mubr.bf16.gmra.mrb[0].mxu0 %v3025
        %v3357 = vpop.f32.mrb[0].mxu0
        %v3358 = vadd.f32 0.0, %v3357
        %v3359 = vpop.f32.mrb[0].mxu0
        %v3360 = vpop.f32.mrb[0].mxu0
        %v3361 = vadd.f32 0.0, %v3360
        %v3362 = vpop.f32.mrb[0].mxu0
        %3363 = vmatprep.mubr.bf16.mxu0 0
        %3364 = vmatmul.mubr.bf16.gmra.mrb[0].mxu0 %v3028
        %v3365 = vpop.f32.mrb[0].mxu0
        %v3366 = vadd.f32 0.0, %v3365
        %v3367 = vpop.f32.mrb[0].mxu0
        %v3368 = vpop.f32.mrb[0].mxu0
        %v3369 = vadd.f32 0.0, %v3368
        %v3370 = vpop.f32.mrb[0].mxu0
        %3371 = vmatprep.mubr.bf16.mxu0 0
        %3372 = vmatmul.mubr.bf16.gmra.mrb[0].mxu0 %v3031
        %v3373 = vpop.f32.mrb[0].mxu0
        %v3374 = vadd.f32 0.0, %v3373
        %v3375 = vpop.f32.mrb[0].mxu0
        %v3376 = vpop.f32.mrb[0].mxu0
        %v3377 = vadd.f32 0.0, %v3376
        %v3378 = vpop.f32.mrb[0].mxu0
        %3379 = vmatprep.mubr.bf16.mxu0 0
        %3380 = vmatmul.mubr.bf16.gmra.mrb[0].mxu0 %v3034
        %v3381 = vpop.f32.mrb[0].mxu0
        %v3382 = vadd.f32 0.0, %v3381
        %v3383 = vpop.f32.mrb[0].mxu0
        %v3384 = vpop.f32.mrb[0].mxu0
        %v3385 = vadd.f32 0.0, %v3384
        %v3386 = vpop.f32.mrb[0].mxu0
        %3387 = vmatprep.mubr.bf16.mxu0 0
        %3388 = vmatmul.mubr.bf16.gmra.mrb[0].mxu0 %v3037
        %v3389 = vpop.f32.mrb[0].mxu0
        %v3390 = vadd.f32 0.0, %v3389
        %v3391 = vpop.f32.mrb[0].mxu0
        %v3392 = vpop.f32.mrb[0].mxu0
        %v3393 = vadd.f32 0.0, %v3392
        %v3394 = vpop.f32.mrb[0].mxu0
        %3395 = vmatprep.mubr.bf16.mxu0 0
        %3396 = vmatmul.mubr.bf16.gmra.mrb[0].mxu0 %v3040
        %v3397 = vpop.f32.mrb[0].mxu0
        %v3398 = vadd.f32 0.0, %v3397
        %v3399 = vpop.f32.mrb[0].mxu0
        %v3400 = vpop.f32.mrb[0].mxu0
        %v3401 = vadd.f32 0.0, %v3400
        %v3402 = vpop.f32.mrb[0].mxu0
        %3403 = vdwg.mxu0
        %v3404 = vadd.f32 %v1225, %v3278
        %v3405 = vadd.f32 %v1228, %v3281
        %v3406 = vadd.f32 %v1233, %v3286
        %v3407 = vadd.f32 %v1236, %v3289
        %v3408 = vadd.f32 %v1241, %v3294
        %v3409 = vadd.f32 %v1244, %v3297
        %v3410 = vadd.f32 %v1249, %v3302
        %v3411 = vadd.f32 %v1252, %v3305
        %v3412 = vadd.f32 %v1257, %v3310
        %v3413 = vadd.f32 %v1260, %v3313
        %v3414 = vadd.f32 %v1265, %v3318
        %v3415 = vadd.f32 %v1268, %v3321
        %v3416 = vadd.f32 %v1273, %v3326
        %v3417 = vadd.f32 %v1276, %v3329
        %v3418 = vadd.f32 %v1281, %v3334
        %v3419 = vadd.f32 %v1284, %v3337
        %v3420 = vadd.f32 %v1289, %v3342
        %v3421 = vadd.f32 %v1292, %v3345
        %v3422 = vadd.f32 %v1297, %v3350
        %v3423 = vadd.f32 %v1300, %v3353
        %v3424 = vadd.f32 %v1305, %v3358
        %v3425 = vadd.f32 %v1308, %v3361
        %v3426 = vadd.f32 %v1313, %v3366
        %v3427 = vadd.f32 %v1316, %v3369
        %v3428 = vadd.f32 %v1321, %v3374
        %v3429 = vadd.f32 %v1324, %v3377
        %v3430 = vadd.f32 %v1329, %v3382
        %v3431 = vadd.f32 %v1332, %v3385
        %v3432 = vadd.f32 %v1337, %v3390
        %v3433 = vadd.f32 %v1340, %v3393
        %v3434 = vadd.f32 %v1345, %v3398
        %v3435 = vadd.f32 %v1348, %v3401
        %s3436 = scalar_lea.vmem %s1, 20
        %v3437 = vld [vmem:[%s3436] sm:$0x3]
        %v3438 = vunpack.c.l.b16 %v2279
        %v3439 = vunpack.c.l.b16 %v2289
        %v3440 = vunpack.c.l.b16 %v2303
        %v3441 = vunpack.c.l.b16 %v2313
        %v3442 = vunpack.c.l.b16 %v2327
        %v3443 = vunpack.c.l.b16 %v2337
        %v3444 = vunpack.c.l.b16 %v2351
        %v3445 = vunpack.c.l.b16 %v2361
        %v3446 = vunpack.c.l.b16 %v2375
        %v3447 = vunpack.c.l.b16 %v2385
        %v3448 = vunpack.c.l.b16 %v2399
        %v3449 = vunpack.c.l.b16 %v2409
        %v3450 = vunpack.c.l.b16 %v2423
        %v3451 = vunpack.c.l.b16 %v2433
        %v3452 = vunpack.c.l.b16 %v2447
        %v3453 = vunpack.c.l.b16 %v2457
        %v3454 = vunpack.c.l.b16 %v2471
        %v3455 = vunpack.c.l.b16 %v2481
        %v3456 = vunpack.c.l.b16 %v2495
        %v3457 = vunpack.c.l.b16 %v2505
        %v3458 = vunpack.c.l.b16 %v2519
        %v3459 = vunpack.c.l.b16 %v2529
        %v3460 = vunpack.c.l.b16 %v2543
        %v3461 = vunpack.c.l.b16 %v2553
        %v3462 = vunpack.c.l.b16 %v2567
        %v3463 = vunpack.c.l.b16 %v2577
        %v3464 = vunpack.c.l.b16 %v2591
        %v3465 = vunpack.c.l.b16 %v2601
        %v3466 = vunpack.c.l.b16 %v2615
        %v3467 = vunpack.c.l.b16 %v2625
        %v3468 = vunpack.c.l.b16 %v2639
        %v3469 = vunpack.c.l.b16 %v2649
        %v3470 = vpack.c.b16 %v3439, %v3438
        %v3471 = vpack.c.b16 %v3441, %v3440
        %v3472 = vpack.c.b16 %v3443, %v3442
        %v3473 = vpack.c.b16 %v3445, %v3444
        %v3474 = vpack.c.b16 %v3447, %v3446
        %v3475 = vpack.c.b16 %v3449, %v3448
        %v3476 = vpack.c.b16 %v3451, %v3450
        %v3477 = vpack.c.b16 %v3453, %v3452
        %v3478 = vpack.c.b16 %v3455, %v3454
        %v3479 = vpack.c.b16 %v3457, %v3456
        %v3480 = vpack.c.b16 %v3459, %v3458
        %v3481 = vpack.c.b16 %v3461, %v3460
        %v3482 = vpack.c.b16 %v3463, %v3462
        %v3483 = vpack.c.b16 %v3465, %v3464
        %v3484 = vpack.c.b16 %v3467, %v3466
        %v3485 = vpack.c.b16 %v3469, %v3468
        %v3487 = vsel %vm385, %v3470, 0
        %v3490 = vsel %vm385, %v3471, 0
        %v3493 = vsel %vm385, %v3472, 0
        %v3496 = vsel %vm385, %v3473, 0
        %v3499 = vsel %vm385, %v3474, 0
        %v3502 = vsel %vm385, %v3475, 0
        %v3505 = vsel %vm385, %v3476, 0
        %v3508 = vsel %vm385, %v3477, 0
        %v3511 = vsel %vm385, %v3478, 0
        %v3514 = vsel %vm385, %v3479, 0
        %v3517 = vsel %vm385, %v3480, 0
        %v3520 = vsel %vm385, %v3481, 0
        %v3523 = vsel %vm385, %v3482, 0
        %v3526 = vsel %vm385, %v3483, 0
        %v3529 = vsel %vm385, %v3484, 0
        %v3532 = vsel %vm385, %v3485, 0
        %v3535 = vsel %vm434, %v3437, 0
        %3537 = vmatprep.subr.bf16.mxu0 0
        %3538 = vmatpush1.bf16.msra.mxu0 %v3535
        %3539 = vmatprep.subr.bf16.mxu0 0
        %3540 = vmatpush1.bf16.msra.mxu0 0
        %3541 = vmatprep.subr.bf16.mxu0 0
        %3542 = vmatpush1.bf16.msra.mxu0 0
        %3543 = vmatprep.subr.bf16.mxu0 0
        %3544 = vmatpush1.bf16.msra.mxu0 0
        %3545 = vmatprep.subr.bf16.mxu0 0
        %3546 = vmatpush1.bf16.msra.mxu0 0
        %3547 = vmatprep.subr.bf16.mxu0 0
        %3548 = vmatpush1.bf16.msra.mxu0 0
        %3549 = vmatprep.subr.bf16.mxu0 0
        %3550 = vmatpush1.bf16.msra.mxu0 0
        %3551 = vmatprep.subr.bf16.mxu0 0
        %3552 = vmatpush1.bf16.msra.mxu0 0
        %3553 = vmatprep.subr.bf16.mxu0 0
        %3554 = vmatpush1.bf16.msra.mxu0 0
        %3555 = vmatprep.subr.bf16.mxu0 0
        %3556 = vmatpush1.bf16.msra.mxu0 0
        %3557 = vmatprep.subr.bf16.mxu0 0
        %3558 = vmatpush1.bf16.msra.mxu0 0
        %3559 = vmatprep.subr.bf16.mxu0 0
        %3560 = vmatpush1.bf16.msra.mxu0 0
        %3561 = vmatprep.subr.bf16.mxu0 0
        %3562 = vmatpush1.bf16.msra.mxu0 0
        %3563 = vmatprep.subr.bf16.mxu0 0
        %3564 = vmatpush1.bf16.msra.mxu0 0
        %3565 = vmatprep.subr.bf16.mxu0 0
        %3566 = vmatpush1.bf16.msra.mxu0 0
        %3567 = vmatprep.subr.bf16.mxu0 0
        %3568 = vmatpush1.bf16.msra.mxu0 0
        %3569 = vmatprep.mubr.bf16.mxu0 0
        %3570 = vmatmul.mubr.bf16.gmra.mrb[0].mxu0 %v3487
        %v3571 = vpop.f32.mrb[0].mxu0
        %v3572 = vadd.f32 0.0, %v3571
        %v3573 = vpop.f32.mrb[0].mxu0
        %v3574 = vpop.f32.mrb[0].mxu0
        %v3575 = vadd.f32 0.0, %v3574
        %v3576 = vpop.f32.mrb[0].mxu0
        %3577 = vmatprep.mubr.bf16.mxu0 0
        %3578 = vmatmul.mubr.bf16.gmra.mrb[0].mxu0 %v3490
        %v3579 = vpop.f32.mrb[0].mxu0
        %v3580 = vadd.f32 0.0, %v3579
        %v3581 = vpop.f32.mrb[0].mxu0
        %v3582 = vpop.f32.mrb[0].mxu0
        %v3583 = vadd.f32 0.0, %v3582
        %v3584 = vpop.f32.mrb[0].mxu0
        %3585 = vmatprep.mubr.bf16.mxu0 0
        %3586 = vmatmul.mubr.bf16.gmra.mrb[0].mxu0 %v3493
        %v3587 = vpop.f32.mrb[0].mxu0
        %v3588 = vadd.f32 0.0, %v3587
        %v3589 = vpop.f32.mrb[0].mxu0
        %v3590 = vpop.f32.mrb[0].mxu0
        %v3591 = vadd.f32 0.0, %v3590
        %v3592 = vpop.f32.mrb[0].mxu0
        %3593 = vmatprep.mubr.bf16.mxu0 0
        %3594 = vmatmul.mubr.bf16.gmra.mrb[0].mxu0 %v3496
        %v3595 = vpop.f32.mrb[0].mxu0
        %v3596 = vadd.f32 0.0, %v3595
        %v3597 = vpop.f32.mrb[0].mxu0
        %v3598 = vpop.f32.mrb[0].mxu0
        %v3599 = vadd.f32 0.0, %v3598
        %v3600 = vpop.f32.mrb[0].mxu0
        %3601 = vmatprep.mubr.bf16.mxu0 0
        %3602 = vmatmul.mubr.bf16.gmra.mrb[0].mxu0 %v3499
        %v3603 = vpop.f32.mrb[0].mxu0
        %v3604 = vadd.f32 0.0, %v3603
        %v3605 = vpop.f32.mrb[0].mxu0
        %v3606 = vpop.f32.mrb[0].mxu0
        %v3607 = vadd.f32 0.0, %v3606
        %v3608 = vpop.f32.mrb[0].mxu0
        %3609 = vmatprep.mubr.bf16.mxu0 0
        %3610 = vmatmul.mubr.bf16.gmra.mrb[0].mxu0 %v3502
        %v3611 = vpop.f32.mrb[0].mxu0
        %v3612 = vadd.f32 0.0, %v3611
        %v3613 = vpop.f32.mrb[0].mxu0
        %v3614 = vpop.f32.mrb[0].mxu0
        %v3615 = vadd.f32 0.0, %v3614
        %v3616 = vpop.f32.mrb[0].mxu0
        %3617 = vmatprep.mubr.bf16.mxu0 0
        %3618 = vmatmul.mubr.bf16.gmra.mrb[0].mxu0 %v3505
        %v3619 = vpop.f32.mrb[0].mxu0
        %v3620 = vadd.f32 0.0, %v3619
        %v3621 = vpop.f32.mrb[0].mxu0
        %v3622 = vpop.f32.mrb[0].mxu0
        %v3623 = vadd.f32 0.0, %v3622
        %v3624 = vpop.f32.mrb[0].mxu0
        %3625 = vmatprep.mubr.bf16.mxu0 0
        %3626 = vmatmul.mubr.bf16.gmra.mrb[0].mxu0 %v3508
        %v3627 = vpop.f32.mrb[0].mxu0
        %v3628 = vadd.f32 0.0, %v3627
        %v3629 = vpop.f32.mrb[0].mxu0
        %v3630 = vpop.f32.mrb[0].mxu0
        %v3631 = vadd.f32 0.0, %v3630
        %v3632 = vpop.f32.mrb[0].mxu0
        %3633 = vmatprep.mubr.bf16.mxu0 0
        %3634 = vmatmul.mubr.bf16.gmra.mrb[0].mxu0 %v3511
        %v3635 = vpop.f32.mrb[0].mxu0
        %v3636 = vadd.f32 0.0, %v3635
        %v3637 = vpop.f32.mrb[0].mxu0
        %v3638 = vpop.f32.mrb[0].mxu0
        %v3639 = vadd.f32 0.0, %v3638
        %v3640 = vpop.f32.mrb[0].mxu0
        %3641 = vmatprep.mubr.bf16.mxu0 0
        %3642 = vmatmul.mubr.bf16.gmra.mrb[0].mxu0 %v3514
        %v3643 = vpop.f32.mrb[0].mxu0
        %v3644 = vadd.f32 0.0, %v3643
        %v3645 = vpop.f32.mrb[0].mxu0
        %v3646 = vpop.f32.mrb[0].mxu0
        %v3647 = vadd.f32 0.0, %v3646
        %v3648 = vpop.f32.mrb[0].mxu0
        %3649 = vmatprep.mubr.bf16.mxu0 0
        %3650 = vmatmul.mubr.bf16.gmra.mrb[0].mxu0 %v3517
        %v3651 = vpop.f32.mrb[0].mxu0
        %v3652 = vadd.f32 0.0, %v3651
        %v3653 = vpop.f32.mrb[0].mxu0
        %v3654 = vpop.f32.mrb[0].mxu0
        %v3655 = vadd.f32 0.0, %v3654
        %v3656 = vpop.f32.mrb[0].mxu0
        %3657 = vmatprep.mubr.bf16.mxu0 0
        %3658 = vmatmul.mubr.bf16.gmra.mrb[0].mxu0 %v3520
        %v3659 = vpop.f32.mrb[0].mxu0
        %v3660 = vadd.f32 0.0, %v3659
        %v3661 = vpop.f32.mrb[0].mxu0
        %v3662 = vpop.f32.mrb[0].mxu0
        %v3663 = vadd.f32 0.0, %v3662
        %v3664 = vpop.f32.mrb[0].mxu0
        %3665 = vmatprep.mubr.bf16.mxu0 0
        %3666 = vmatmul.mubr.bf16.gmra.mrb[0].mxu0 %v3523
        %v3667 = vpop.f32.mrb[0].mxu0
        %v3668 = vadd.f32 0.0, %v3667
        %v3669 = vpop.f32.mrb[0].mxu0
        %v3670 = vpop.f32.mrb[0].mxu0
        %v3671 = vadd.f32 0.0, %v3670
        %v3672 = vpop.f32.mrb[0].mxu0
        %3673 = vmatprep.mubr.bf16.mxu0 0
        %3674 = vmatmul.mubr.bf16.gmra.mrb[0].mxu0 %v3526
        %v3675 = vpop.f32.mrb[0].mxu0
        %v3676 = vadd.f32 0.0, %v3675
        %v3677 = vpop.f32.mrb[0].mxu0
        %v3678 = vpop.f32.mrb[0].mxu0
        %v3679 = vadd.f32 0.0, %v3678
        %v3680 = vpop.f32.mrb[0].mxu0
        %3681 = vmatprep.mubr.bf16.mxu0 0
        %3682 = vmatmul.mubr.bf16.gmra.mrb[0].mxu0 %v3529
        %v3683 = vpop.f32.mrb[0].mxu0
        %v3684 = vadd.f32 0.0, %v3683
        %v3685 = vpop.f32.mrb[0].mxu0
        %v3686 = vpop.f32.mrb[0].mxu0
        %v3687 = vadd.f32 0.0, %v3686
        %v3688 = vpop.f32.mrb[0].mxu0
        %3689 = vmatprep.mubr.bf16.mxu0 0
        %3690 = vmatmul.mubr.bf16.gmra.mrb[0].mxu0 %v3532
        %v3691 = vpop.f32.mrb[0].mxu0
        %v3692 = vadd.f32 0.0, %v3691
        %v3693 = vpop.f32.mrb[0].mxu0
        %v3694 = vpop.f32.mrb[0].mxu0
        %v3695 = vadd.f32 0.0, %v3694
        %v3696 = vpop.f32.mrb[0].mxu0
        %3697 = vdwg.mxu0
        %v3698 = vadd.f32 %v3404, %v3572
        %v3699 = vadd.f32 %v3405, %v3575
        %v3700 = vadd.f32 %v3406, %v3580
        %v3701 = vadd.f32 %v3407, %v3583
        %v3702 = vadd.f32 %v3408, %v3588
        %v3703 = vadd.f32 %v3409, %v3591
        %v3704 = vadd.f32 %v3410, %v3596
        %v3705 = vadd.f32 %v3411, %v3599
        %v3706 = vadd.f32 %v3412, %v3604
        %v3707 = vadd.f32 %v3413, %v3607
        %v3708 = vadd.f32 %v3414, %v3612
        %v3709 = vadd.f32 %v3415, %v3615
        %v3710 = vadd.f32 %v3416, %v3620
        %v3711 = vadd.f32 %v3417, %v3623
        %v3712 = vadd.f32 %v3418, %v3628
        %v3713 = vadd.f32 %v3419, %v3631
        %v3714 = vadd.f32 %v3420, %v3636
        %v3715 = vadd.f32 %v3421, %v3639
        %v3716 = vadd.f32 %v3422, %v3644
        %v3717 = vadd.f32 %v3423, %v3647
        %v3718 = vadd.f32 %v3424, %v3652
        %v3719 = vadd.f32 %v3425, %v3655
        %v3720 = vadd.f32 %v3426, %v3660
        %v3721 = vadd.f32 %v3427, %v3663
        %v3722 = vadd.f32 %v3428, %v3668
        %v3723 = vadd.f32 %v3429, %v3671
        %v3724 = vadd.f32 %v3430, %v3676
        %v3725 = vadd.f32 %v3431, %v3679
        %v3726 = vadd.f32 %v3432, %v3684
        %v3727 = vadd.f32 %v3433, %v3687
        %v3728 = vadd.f32 %v3434, %v3692
        %v3729 = vadd.f32 %v3435, %v3695
        %v3730 = vld [vmem:[%s198] sm:$0xe]
        %v3731 = vld [vmem:[%s198 + $0xc] sm:$0xe]
        %v3732 = vld [vmem:[%s198 + $0x18] sm:$0xe]
        %v3733 = vld [vmem:[%s198 + $0x24] sm:$0xe]
        %v3734 = vld [vmem:[%s198 + $0x30] sm:$0xe]
        %v3735 = vld [vmem:[%s198 + $0x3c] sm:$0xe]
        %v3736 = vld [vmem:[%s198 + $0x48] sm:$0xe]
        %v3737 = vld [vmem:[%s198 + $0x54] sm:$0xe]
        %v3738 = vld [vmem:[%s198 + $0x60] sm:$0xe]
        %v3739 = vld [vmem:[%s198 + $0x6c] sm:$0xe]
        %v3740 = vld [vmem:[%s198 + $0x78] sm:$0xe]
        %v3741 = vld [vmem:[%s198 + $0x84] sm:$0xe]
        %v3742 = vld [vmem:[%s198 + $0x90] sm:$0xe]
        %v3743 = vld [vmem:[%s198 + $0x9c] sm:$0xe]
        %v3744 = vld [vmem:[%s198 + $0xa8] sm:$0xe]
        %v3745 = vld [vmem:[%s198 + $0xb4] sm:$0xe]
        %vm3794 = vcmask 1042432
        %vm3795 = vcmask 1046532
        %vm3796 = vmor %vm3794, %vm3795
        %v3797 = vrot.slane %v3730, 5
        %v3798 = vrot.slane %v3797, 4
        %v3799 = vrot.slane %v1352, 5
        %v3800 = vsel %vm3796, %v3798, %v3799
        %v3801 = vrot.slane %v3799, 4
        %v3802 = vrot.slane %v1353, 5
        %v3803 = vsel %vm3796, %v3801, %v3802
        %v3804 = vrot.slane %v3731, 5
        %v3805 = vrot.slane %v3804, 4
        %v3806 = vrot.slane %v1355, 5
        %v3807 = vsel %vm3796, %v3805, %v3806
        %v3808 = vrot.slane %v3806, 4
        %v3809 = vrot.slane %v1356, 5
        %v3810 = vsel %vm3796, %v3808, %v3809
        %v3811 = vrot.slane %v3732, 5
        %v3812 = vrot.slane %v3811, 4
        %v3813 = vrot.slane %v1358, 5
        %v3814 = vsel %vm3796, %v3812, %v3813
        %v3815 = vrot.slane %v3813, 4
        %v3816 = vrot.slane %v1359, 5
        %v3817 = vsel %vm3796, %v3815, %v3816
        %v3818 = vrot.slane %v3733, 5
        %v3819 = vrot.slane %v3818, 4
        %v3820 = vrot.slane %v1361, 5
        %v3821 = vsel %vm3796, %v3819, %v3820
        %v3822 = vrot.slane %v3820, 4
        %v3823 = vrot.slane %v1362, 5
        %v3824 = vsel %vm3796, %v3822, %v3823
        %v3825 = vrot.slane %v3734, 5
        %v3826 = vrot.slane %v3825, 4
        %v3827 = vrot.slane %v1364, 5
        %v3828 = vsel %vm3796, %v3826, %v3827
        %v3829 = vrot.slane %v3827, 4
        %v3830 = vrot.slane %v1365, 5
        %v3831 = vsel %vm3796, %v3829, %v3830
        %v3832 = vrot.slane %v3735, 5
        %v3833 = vrot.slane %v3832, 4
        %v3834 = vrot.slane %v1367, 5
        %v3835 = vsel %vm3796, %v3833, %v3834
        %v3836 = vrot.slane %v3834, 4
        %v3837 = vrot.slane %v1368, 5
        %v3838 = vsel %vm3796, %v3836, %v3837
        %v3839 = vrot.slane %v3736, 5
        %v3840 = vrot.slane %v3839, 4
        %v3841 = vrot.slane %v1370, 5
        %v3842 = vsel %vm3796, %v3840, %v3841
        %v3843 = vrot.slane %v3841, 4
        %v3844 = vrot.slane %v1371, 5
        %v3845 = vsel %vm3796, %v3843, %v3844
        %v3846 = vrot.slane %v3737, 5
        %v3847 = vrot.slane %v3846, 4
        %v3848 = vrot.slane %v1373, 5
        %v3849 = vsel %vm3796, %v3847, %v3848
        %v3850 = vrot.slane %v3848, 4
        %v3851 = vrot.slane %v1374, 5
        %v3852 = vsel %vm3796, %v3850, %v3851
        %v3853 = vrot.slane %v3738, 5
        %v3854 = vrot.slane %v3853, 4
        %v3855 = vrot.slane %v1376, 5
        %v3856 = vsel %vm3796, %v3854, %v3855
        %v3857 = vrot.slane %v3855, 4
        %v3858 = vrot.slane %v1377, 5
        %v3859 = vsel %vm3796, %v3857, %v3858
        %v3860 = vrot.slane %v3739, 5
        %v3861 = vrot.slane %v3860, 4
        %v3862 = vrot.slane %v1379, 5
        %v3863 = vsel %vm3796, %v3861, %v3862
        %v3864 = vrot.slane %v3862, 4
        %v3865 = vrot.slane %v1380, 5
        %v3866 = vsel %vm3796, %v3864, %v3865
        %v3867 = vrot.slane %v3740, 5
        %v3868 = vrot.slane %v3867, 4
        %v3869 = vrot.slane %v1382, 5
        %v3870 = vsel %vm3796, %v3868, %v3869
        %v3871 = vrot.slane %v3869, 4
        %v3872 = vrot.slane %v1383, 5
        %v3873 = vsel %vm3796, %v3871, %v3872
        %v3874 = vrot.slane %v3741, 5
        %v3875 = vrot.slane %v3874, 4
        %v3876 = vrot.slane %v1385, 5
        %v3877 = vsel %vm3796, %v3875, %v3876
        %v3878 = vrot.slane %v3876, 4
        %v3879 = vrot.slane %v1386, 5
        %v3880 = vsel %vm3796, %v3878, %v3879
        %v3881 = vrot.slane %v3742, 5
        %v3882 = vrot.slane %v3881, 4
        %v3883 = vrot.slane %v1388, 5
        %v3884 = vsel %vm3796, %v3882, %v3883
        %v3885 = vrot.slane %v3883, 4
        %v3886 = vrot.slane %v1389, 5
        %v3887 = vsel %vm3796, %v3885, %v3886
        %v3888 = vrot.slane %v3743, 5
        %v3889 = vrot.slane %v3888, 4
        %v3890 = vrot.slane %v1391, 5
        %v3891 = vsel %vm3796, %v3889, %v3890
        %v3892 = vrot.slane %v3890, 4
        %v3893 = vrot.slane %v1392, 5
        %v3894 = vsel %vm3796, %v3892, %v3893
        %v3895 = vrot.slane %v3744, 5
        %v3896 = vrot.slane %v3895, 4
        %v3897 = vrot.slane %v1394, 5
        %v3898 = vsel %vm3796, %v3896, %v3897
        %v3899 = vrot.slane %v3897, 4
        %v3900 = vrot.slane %v1395, 5
        %v3901 = vsel %vm3796, %v3899, %v3900
        %v3902 = vrot.slane %v3745, 5
        %v3903 = vrot.slane %v3902, 4
        %v3904 = vrot.slane %v1397, 5
        %v3905 = vsel %vm3796, %v3903, %v3904
        %v3906 = vrot.slane %v3904, 4
        %v3907 = vrot.slane %v1398, 5
        %v3908 = vsel %vm3796, %v3906, %v3907
        %v3909 = vld [vmem:[%s236] sm:$0xe]
        %v3910 = vld [vmem:[%s236 + $0xc] sm:$0xe]
        %v3911 = vld [vmem:[%s236 + $0x18] sm:$0xe]
        %v3912 = vld [vmem:[%s236 + $0x24] sm:$0xe]
        %v3913 = vld [vmem:[%s236 + $0x30] sm:$0xe]
        %v3914 = vld [vmem:[%s236 + $0x3c] sm:$0xe]
        %v3915 = vld [vmem:[%s236 + $0x48] sm:$0xe]
        %v3916 = vld [vmem:[%s236 + $0x54] sm:$0xe]
        %v3917 = vld [vmem:[%s236 + $0x60] sm:$0xe]
        %v3918 = vld [vmem:[%s236 + $0x6c] sm:$0xe]
        %v3919 = vld [vmem:[%s236 + $0x78] sm:$0xe]
        %v3920 = vld [vmem:[%s236 + $0x84] sm:$0xe]
        %v3921 = vld [vmem:[%s236 + $0x90] sm:$0xe]
        %v3922 = vld [vmem:[%s236 + $0x9c] sm:$0xe]
        %v3923 = vld [vmem:[%s236 + $0xa8] sm:$0xe]
        %v3924 = vld [vmem:[%s236 + $0xb4] sm:$0xe]
        %v3973 = vrot.slane %v3909, 5
        %v3974 = vrot.slane %v3973, 4
        %v3975 = vrot.slane %v1787, 5
        %v3976 = vsel %vm3796, %v3974, %v3975
        %v3977 = vrot.slane %v3975, 4
        %v3978 = vrot.slane %v1788, 5
        %v3979 = vsel %vm3796, %v3977, %v3978
        %v3980 = vrot.slane %v3910, 5
        %v3981 = vrot.slane %v3980, 4
        %v3982 = vrot.slane %v1790, 5
        %v3983 = vsel %vm3796, %v3981, %v3982
        %v3984 = vrot.slane %v3982, 4
        %v3985 = vrot.slane %v1791, 5
        %v3986 = vsel %vm3796, %v3984, %v3985
        %v3987 = vrot.slane %v3911, 5
        %v3988 = vrot.slane %v3987, 4
        %v3989 = vrot.slane %v1793, 5
        %v3990 = vsel %vm3796, %v3988, %v3989
        %v3991 = vrot.slane %v3989, 4
        %v3992 = vrot.slane %v1794, 5
        %v3993 = vsel %vm3796, %v3991, %v3992
        %v3994 = vrot.slane %v3912, 5
        %v3995 = vrot.slane %v3994, 4
        %v3996 = vrot.slane %v1796, 5
        %v3997 = vsel %vm3796, %v3995, %v3996
        %v3998 = vrot.slane %v3996, 4
        %v3999 = vrot.slane %v1797, 5
        %v4000 = vsel %vm3796, %v3998, %v3999
        %v4001 = vrot.slane %v3913, 5
        %v4002 = vrot.slane %v4001, 4
        %v4003 = vrot.slane %v1799, 5
        %v4004 = vsel %vm3796, %v4002, %v4003
        %v4005 = vrot.slane %v4003, 4
        %v4006 = vrot.slane %v1800, 5
        %v4007 = vsel %vm3796, %v4005, %v4006
        %v4008 = vrot.slane %v3914, 5
        %v4009 = vrot.slane %v4008, 4
        %v4010 = vrot.slane %v1802, 5
        %v4011 = vsel %vm3796, %v4009, %v4010
        %v4012 = vrot.slane %v4010, 4
        %v4013 = vrot.slane %v1803, 5
        %v4014 = vsel %vm3796, %v4012, %v4013
        %v4015 = vrot.slane %v3915, 5
        %v4016 = vrot.slane %v4015, 4
        %v4017 = vrot.slane %v1805, 5
        %v4018 = vsel %vm3796, %v4016, %v4017
        %v4019 = vrot.slane %v4017, 4
        %v4020 = vrot.slane %v1806, 5
        %v4021 = vsel %vm3796, %v4019, %v4020
        %v4022 = vrot.slane %v3916, 5
        %v4023 = vrot.slane %v4022, 4
        %v4024 = vrot.slane %v1808, 5
        %v4025 = vsel %vm3796, %v4023, %v4024
        %v4026 = vrot.slane %v4024, 4
        %v4027 = vrot.slane %v1809, 5
        %v4028 = vsel %vm3796, %v4026, %v4027
        %v4029 = vrot.slane %v3917, 5
        %v4030 = vrot.slane %v4029, 4
        %v4031 = vrot.slane %v1811, 5
        %v4032 = vsel %vm3796, %v4030, %v4031
        %v4033 = vrot.slane %v4031, 4
        %v4034 = vrot.slane %v1812, 5
        %v4035 = vsel %vm3796, %v4033, %v4034
        %v4036 = vrot.slane %v3918, 5
        %v4037 = vrot.slane %v4036, 4
        %v4038 = vrot.slane %v1814, 5
        %v4039 = vsel %vm3796, %v4037, %v4038
        %v4040 = vrot.slane %v4038, 4
        %v4041 = vrot.slane %v1815, 5
        %v4042 = vsel %vm3796, %v4040, %v4041
        %v4043 = vrot.slane %v3919, 5
        %v4044 = vrot.slane %v4043, 4
        %v4045 = vrot.slane %v1817, 5
        %v4046 = vsel %vm3796, %v4044, %v4045
        %v4047 = vrot.slane %v4045, 4
        %v4048 = vrot.slane %v1818, 5
        %v4049 = vsel %vm3796, %v4047, %v4048
        %v4050 = vrot.slane %v3920, 5
        %v4051 = vrot.slane %v4050, 4
        %v4052 = vrot.slane %v1820, 5
        %v4053 = vsel %vm3796, %v4051, %v4052
        %v4054 = vrot.slane %v4052, 4
        %v4055 = vrot.slane %v1821, 5
        %v4056 = vsel %vm3796, %v4054, %v4055
        %v4057 = vrot.slane %v3921, 5
        %v4058 = vrot.slane %v4057, 4
        %v4059 = vrot.slane %v1823, 5
        %v4060 = vsel %vm3796, %v4058, %v4059
        %v4061 = vrot.slane %v4059, 4
        %v4062 = vrot.slane %v1824, 5
        %v4063 = vsel %vm3796, %v4061, %v4062
        %v4064 = vrot.slane %v3922, 5
        %v4065 = vrot.slane %v4064, 4
        %v4066 = vrot.slane %v1826, 5
        %v4067 = vsel %vm3796, %v4065, %v4066
        %v4068 = vrot.slane %v4066, 4
        %v4069 = vrot.slane %v1827, 5
        %v4070 = vsel %vm3796, %v4068, %v4069
        %v4071 = vrot.slane %v3923, 5
        %v4072 = vrot.slane %v4071, 4
        %v4073 = vrot.slane %v1829, 5
        %v4074 = vsel %vm3796, %v4072, %v4073
        %v4075 = vrot.slane %v4073, 4
        %v4076 = vrot.slane %v1830, 5
        %v4077 = vsel %vm3796, %v4075, %v4076
        %v4078 = vrot.slane %v3924, 5
        %v4079 = vrot.slane %v4078, 4
        %v4080 = vrot.slane %v1832, 5
        %v4081 = vsel %vm3796, %v4079, %v4080
        %v4082 = vrot.slane %v4080, 4
        %v4083 = vrot.slane %v1833, 5
        %v4084 = vsel %vm3796, %v4082, %v4083
        %v4085 = vld [vmem:[%s269] sm:$0xe]
        %v4086 = vld [vmem:[%s269 + $0xc] sm:$0xe]
        %v4087 = vld [vmem:[%s269 + $0x18] sm:$0xe]
        %v4088 = vld [vmem:[%s269 + $0x24] sm:$0xe]
        %v4089 = vld [vmem:[%s269 + $0x30] sm:$0xe]
        %v4090 = vld [vmem:[%s269 + $0x3c] sm:$0xe]
        %v4091 = vld [vmem:[%s269 + $0x48] sm:$0xe]
        %v4092 = vld [vmem:[%s269 + $0x54] sm:$0xe]
        %v4093 = vld [vmem:[%s269 + $0x60] sm:$0xe]
        %v4094 = vld [vmem:[%s269 + $0x6c] sm:$0xe]
        %v4095 = vld [vmem:[%s269 + $0x78] sm:$0xe]
        %v4096 = vld [vmem:[%s269 + $0x84] sm:$0xe]
        %v4097 = vld [vmem:[%s269 + $0x90] sm:$0xe]
        %v4098 = vld [vmem:[%s269 + $0x9c] sm:$0xe]
        %v4099 = vld [vmem:[%s269 + $0xa8] sm:$0xe]
        %v4100 = vld [vmem:[%s269 + $0xb4] sm:$0xe]
        %v4149 = vrot.slane %v4085, 5
        %v4150 = vrot.slane %v4149, 4
        %v4151 = vrot.slane %v2219, 5
        %v4152 = vsel %vm3796, %v4150, %v4151
        %v4153 = vrot.slane %v4151, 4
        %v4154 = vrot.slane %v2220, 5
        %v4155 = vsel %vm3796, %v4153, %v4154
        %v4156 = vrot.slane %v4086, 5
        %v4157 = vrot.slane %v4156, 4
        %v4158 = vrot.slane %v2222, 5
        %v4159 = vsel %vm3796, %v4157, %v4158
        %v4160 = vrot.slane %v4158, 4
        %v4161 = vrot.slane %v2223, 5
        %v4162 = vsel %vm3796, %v4160, %v4161
        %v4163 = vrot.slane %v4087, 5
        %v4164 = vrot.slane %v4163, 4
        %v4165 = vrot.slane %v2225, 5
        %v4166 = vsel %vm3796, %v4164, %v4165
        %v4167 = vrot.slane %v4165, 4
        %v4168 = vrot.slane %v2226, 5
        %v4169 = vsel %vm3796, %v4167, %v4168
        %v4170 = vrot.slane %v4088, 5
        %v4171 = vrot.slane %v4170, 4
        %v4172 = vrot.slane %v2228, 5
        %v4173 = vsel %vm3796, %v4171, %v4172
        %v4174 = vrot.slane %v4172, 4
        %v4175 = vrot.slane %v2229, 5
        %v4176 = vsel %vm3796, %v4174, %v4175
        %v4177 = vrot.slane %v4089, 5
        %v4178 = vrot.slane %v4177, 4
        %v4179 = vrot.slane %v2231, 5
        %v4180 = vsel %vm3796, %v4178, %v4179
        %v4181 = vrot.slane %v4179, 4
        %v4182 = vrot.slane %v2232, 5
        %v4183 = vsel %vm3796, %v4181, %v4182
        %v4184 = vrot.slane %v4090, 5
        %v4185 = vrot.slane %v4184, 4
        %v4186 = vrot.slane %v2234, 5
        %v4187 = vsel %vm3796, %v4185, %v4186
        %v4188 = vrot.slane %v4186, 4
        %v4189 = vrot.slane %v2235, 5
        %v4190 = vsel %vm3796, %v4188, %v4189
        %v4191 = vrot.slane %v4091, 5
        %v4192 = vrot.slane %v4191, 4
        %v4193 = vrot.slane %v2237, 5
        %v4194 = vsel %vm3796, %v4192, %v4193
        %v4195 = vrot.slane %v4193, 4
        %v4196 = vrot.slane %v2238, 5
        %v4197 = vsel %vm3796, %v4195, %v4196
        %v4198 = vrot.slane %v4092, 5
        %v4199 = vrot.slane %v4198, 4
        %v4200 = vrot.slane %v2240, 5
        %v4201 = vsel %vm3796, %v4199, %v4200
        %v4202 = vrot.slane %v4200, 4
        %v4203 = vrot.slane %v2241, 5
        %v4204 = vsel %vm3796, %v4202, %v4203
        %v4205 = vrot.slane %v4093, 5
        %v4206 = vrot.slane %v4205, 4
        %v4207 = vrot.slane %v2243, 5
        %v4208 = vsel %vm3796, %v4206, %v4207
        %v4209 = vrot.slane %v4207, 4
        %v4210 = vrot.slane %v2244, 5
        %v4211 = vsel %vm3796, %v4209, %v4210
        %v4212 = vrot.slane %v4094, 5
        %v4213 = vrot.slane %v4212, 4
        %v4214 = vrot.slane %v2246, 5
        %v4215 = vsel %vm3796, %v4213, %v4214
        %v4216 = vrot.slane %v4214, 4
        %v4217 = vrot.slane %v2247, 5
        %v4218 = vsel %vm3796, %v4216, %v4217
        %v4219 = vrot.slane %v4095, 5
        %v4220 = vrot.slane %v4219, 4
        %v4221 = vrot.slane %v2249, 5
        %v4222 = vsel %vm3796, %v4220, %v4221
        %v4223 = vrot.slane %v4221, 4
        %v4224 = vrot.slane %v2250, 5
        %v4225 = vsel %vm3796, %v4223, %v4224
        %v4226 = vrot.slane %v4096, 5
        %v4227 = vrot.slane %v4226, 4
        %v4228 = vrot.slane %v2252, 5
        %v4229 = vsel %vm3796, %v4227, %v4228
        %v4230 = vrot.slane %v4228, 4
        %v4231 = vrot.slane %v2253, 5
        %v4232 = vsel %vm3796, %v4230, %v4231
        %v4233 = vrot.slane %v4097, 5
        %v4234 = vrot.slane %v4233, 4
        %v4235 = vrot.slane %v2255, 5
        %v4236 = vsel %vm3796, %v4234, %v4235
        %v4237 = vrot.slane %v4235, 4
        %v4238 = vrot.slane %v2256, 5
        %v4239 = vsel %vm3796, %v4237, %v4238
        %v4240 = vrot.slane %v4098, 5
        %v4241 = vrot.slane %v4240, 4
        %v4242 = vrot.slane %v2258, 5
        %v4243 = vsel %vm3796, %v4241, %v4242
        %v4244 = vrot.slane %v4242, 4
        %v4245 = vrot.slane %v2259, 5
        %v4246 = vsel %vm3796, %v4244, %v4245
        %v4247 = vrot.slane %v4099, 5
        %v4248 = vrot.slane %v4247, 4
        %v4249 = vrot.slane %v2261, 5
        %v4250 = vsel %vm3796, %v4248, %v4249
        %v4251 = vrot.slane %v4249, 4
        %v4252 = vrot.slane %v2262, 5
        %v4253 = vsel %vm3796, %v4251, %v4252
        %v4254 = vrot.slane %v4100, 5
        %v4255 = vrot.slane %v4254, 4
        %v4256 = vrot.slane %v2264, 5
        %v4257 = vsel %vm3796, %v4255, %v4256
        %v4258 = vrot.slane %v4256, 4
        %v4259 = vrot.slane %v2265, 5
        %v4260 = vsel %vm3796, %v4258, %v4259
        %s4261 = scalar_lea.vmem %s1, 4
        %v4262 = vld [vmem:[%s4261] sm:$0x3]
        %v4263 = vunpack.c.l.b16 %v3800
        %v4264 = vunpack.c.l.b16 %v3803
        %v4265 = vunpack.c.l.b16 %v3807
        %v4266 = vunpack.c.l.b16 %v3810
        %v4267 = vunpack.c.l.b16 %v3814
        %v4268 = vunpack.c.l.b16 %v3817
        %v4269 = vunpack.c.l.b16 %v3821
        %v4270 = vunpack.c.l.b16 %v3824
        %v4271 = vunpack.c.l.b16 %v3828
        %v4272 = vunpack.c.l.b16 %v3831
        %v4273 = vunpack.c.l.b16 %v3835
        %v4274 = vunpack.c.l.b16 %v3838
        %v4275 = vunpack.c.l.b16 %v3842
        %v4276 = vunpack.c.l.b16 %v3845
        %v4277 = vunpack.c.l.b16 %v3849
        %v4278 = vunpack.c.l.b16 %v3852
        %v4279 = vunpack.c.l.b16 %v3856
        %v4280 = vunpack.c.l.b16 %v3859
        %v4281 = vunpack.c.l.b16 %v3863
        %v4282 = vunpack.c.l.b16 %v3866
        %v4283 = vunpack.c.l.b16 %v3870
        %v4284 = vunpack.c.l.b16 %v3873
        %v4285 = vunpack.c.l.b16 %v3877
        %v4286 = vunpack.c.l.b16 %v3880
        %v4287 = vunpack.c.l.b16 %v3884
        %v4288 = vunpack.c.l.b16 %v3887
        %v4289 = vunpack.c.l.b16 %v3891
        %v4290 = vunpack.c.l.b16 %v3894
        %v4291 = vunpack.c.l.b16 %v3898
        %v4292 = vunpack.c.l.b16 %v3901
        %v4293 = vunpack.c.l.b16 %v3905
        %v4294 = vunpack.c.l.b16 %v3908
        %v4295 = vpack.c.b16 %v4264, %v4263
        %v4296 = vpack.c.b16 %v4266, %v4265
        %v4297 = vpack.c.b16 %v4268, %v4267
        %v4298 = vpack.c.b16 %v4270, %v4269
        %v4299 = vpack.c.b16 %v4272, %v4271
        %v4300 = vpack.c.b16 %v4274, %v4273
        %v4301 = vpack.c.b16 %v4276, %v4275
        %v4302 = vpack.c.b16 %v4278, %v4277
        %v4303 = vpack.c.b16 %v4280, %v4279
        %v4304 = vpack.c.b16 %v4282, %v4281
        %v4305 = vpack.c.b16 %v4284, %v4283
        %v4306 = vpack.c.b16 %v4286, %v4285
        %v4307 = vpack.c.b16 %v4288, %v4287
        %v4308 = vpack.c.b16 %v4290, %v4289
        %v4309 = vpack.c.b16 %v4292, %v4291
        %v4310 = vpack.c.b16 %v4294, %v4293
        %v4312 = vsel %vm385, %v4295, 0
        %v4315 = vsel %vm385, %v4296, 0
        %v4318 = vsel %vm385, %v4297, 0
        %v4321 = vsel %vm385, %v4298, 0
        %v4324 = vsel %vm385, %v4299, 0
        %v4327 = vsel %vm385, %v4300, 0
        %v4330 = vsel %vm385, %v4301, 0
        %v4333 = vsel %vm385, %v4302, 0
        %v4336 = vsel %vm385, %v4303, 0
        %v4339 = vsel %vm385, %v4304, 0
        %v4342 = vsel %vm385, %v4305, 0
        %v4345 = vsel %vm385, %v4306, 0
        %v4348 = vsel %vm385, %v4307, 0
        %v4351 = vsel %vm385, %v4308, 0
        %v4354 = vsel %vm385, %v4309, 0
        %v4357 = vsel %vm385, %v4310, 0
        %v4360 = vsel %vm434, %v4262, 0
        %4362 = vmatprep.subr.bf16.mxu0 0
        %4363 = vmatpush1.bf16.msra.mxu0 %v4360
        %4364 = vmatprep.subr.bf16.mxu0 0
        %4365 = vmatpush1.bf16.msra.mxu0 0
        %4366 = vmatprep.subr.bf16.mxu0 0
        %4367 = vmatpush1.bf16.msra.mxu0 0
        %4368 = vmatprep.subr.bf16.mxu0 0
        %4369 = vmatpush1.bf16.msra.mxu0 0
        %4370 = vmatprep.subr.bf16.mxu0 0
        %4371 = vmatpush1.bf16.msra.mxu0 0
        %4372 = vmatprep.subr.bf16.mxu0 0
        %4373 = vmatpush1.bf16.msra.mxu0 0
        %4374 = vmatprep.subr.bf16.mxu0 0
        %4375 = vmatpush1.bf16.msra.mxu0 0
        %4376 = vmatprep.subr.bf16.mxu0 0
        %4377 = vmatpush1.bf16.msra.mxu0 0
        %4378 = vmatprep.subr.bf16.mxu0 0
        %4379 = vmatpush1.bf16.msra.mxu0 0
        %4380 = vmatprep.subr.bf16.mxu0 0
        %4381 = vmatpush1.bf16.msra.mxu0 0
        %4382 = vmatprep.subr.bf16.mxu0 0
        %4383 = vmatpush1.bf16.msra.mxu0 0
        %4384 = vmatprep.subr.bf16.mxu0 0
        %4385 = vmatpush1.bf16.msra.mxu0 0
        %4386 = vmatprep.subr.bf16.mxu0 0
        %4387 = vmatpush1.bf16.msra.mxu0 0
        %4388 = vmatprep.subr.bf16.mxu0 0
        %4389 = vmatpush1.bf16.msra.mxu0 0
        %4390 = vmatprep.subr.bf16.mxu0 0
        %4391 = vmatpush1.bf16.msra.mxu0 0
        %4392 = vmatprep.subr.bf16.mxu0 0
        %4393 = vmatpush1.bf16.msra.mxu0 0
        %4394 = vmatprep.mubr.bf16.mxu0 0
        %4395 = vmatmul.mubr.bf16.gmra.mrb[0].mxu0 %v4312
        %v4396 = vpop.f32.mrb[0].mxu0
        %v4397 = vadd.f32 0.0, %v4396
        %v4398 = vpop.f32.mrb[0].mxu0
        %v4399 = vpop.f32.mrb[0].mxu0
        %v4400 = vadd.f32 0.0, %v4399
        %v4401 = vpop.f32.mrb[0].mxu0
        %4402 = vmatprep.mubr.bf16.mxu0 0
        %4403 = vmatmul.mubr.bf16.gmra.mrb[0].mxu0 %v4315
        %v4404 = vpop.f32.mrb[0].mxu0
        %v4405 = vadd.f32 0.0, %v4404
        %v4406 = vpop.f32.mrb[0].mxu0
        %v4407 = vpop.f32.mrb[0].mxu0
        %v4408 = vadd.f32 0.0, %v4407
        %v4409 = vpop.f32.mrb[0].mxu0
        %4410 = vmatprep.mubr.bf16.mxu0 0
        %4411 = vmatmul.mubr.bf16.gmra.mrb[0].mxu0 %v4318
        %v4412 = vpop.f32.mrb[0].mxu0
        %v4413 = vadd.f32 0.0, %v4412
        %v4414 = vpop.f32.mrb[0].mxu0
        %v4415 = vpop.f32.mrb[0].mxu0
        %v4416 = vadd.f32 0.0, %v4415
        %v4417 = vpop.f32.mrb[0].mxu0
        %4418 = vmatprep.mubr.bf16.mxu0 0
        %4419 = vmatmul.mubr.bf16.gmra.mrb[0].mxu0 %v4321
        %v4420 = vpop.f32.mrb[0].mxu0
        %v4421 = vadd.f32 0.0, %v4420
        %v4422 = vpop.f32.mrb[0].mxu0
        %v4423 = vpop.f32.mrb[0].mxu0
        %v4424 = vadd.f32 0.0, %v4423
        %v4425 = vpop.f32.mrb[0].mxu0
        %4426 = vmatprep.mubr.bf16.mxu0 0
        %4427 = vmatmul.mubr.bf16.gmra.mrb[0].mxu0 %v4324
        %v4428 = vpop.f32.mrb[0].mxu0
        %v4429 = vadd.f32 0.0, %v4428
        %v4430 = vpop.f32.mrb[0].mxu0
        %v4431 = vpop.f32.mrb[0].mxu0
        %v4432 = vadd.f32 0.0, %v4431
        %v4433 = vpop.f32.mrb[0].mxu0
        %4434 = vmatprep.mubr.bf16.mxu0 0
        %4435 = vmatmul.mubr.bf16.gmra.mrb[0].mxu0 %v4327
        %v4436 = vpop.f32.mrb[0].mxu0
        %v4437 = vadd.f32 0.0, %v4436
        %v4438 = vpop.f32.mrb[0].mxu0
        %v4439 = vpop.f32.mrb[0].mxu0
        %v4440 = vadd.f32 0.0, %v4439
        %v4441 = vpop.f32.mrb[0].mxu0
        %4442 = vmatprep.mubr.bf16.mxu0 0
        %4443 = vmatmul.mubr.bf16.gmra.mrb[0].mxu0 %v4330
        %v4444 = vpop.f32.mrb[0].mxu0
        %v4445 = vadd.f32 0.0, %v4444
        %v4446 = vpop.f32.mrb[0].mxu0
        %v4447 = vpop.f32.mrb[0].mxu0
        %v4448 = vadd.f32 0.0, %v4447
        %v4449 = vpop.f32.mrb[0].mxu0
        %4450 = vmatprep.mubr.bf16.mxu0 0
        %4451 = vmatmul.mubr.bf16.gmra.mrb[0].mxu0 %v4333
        %v4452 = vpop.f32.mrb[0].mxu0
        %v4453 = vadd.f32 0.0, %v4452
        %v4454 = vpop.f32.mrb[0].mxu0
        %v4455 = vpop.f32.mrb[0].mxu0
        %v4456 = vadd.f32 0.0, %v4455
        %v4457 = vpop.f32.mrb[0].mxu0
        %4458 = vmatprep.mubr.bf16.mxu0 0
        %4459 = vmatmul.mubr.bf16.gmra.mrb[0].mxu0 %v4336
        %v4460 = vpop.f32.mrb[0].mxu0
        %v4461 = vadd.f32 0.0, %v4460
        %v4462 = vpop.f32.mrb[0].mxu0
        %v4463 = vpop.f32.mrb[0].mxu0
        %v4464 = vadd.f32 0.0, %v4463
        %v4465 = vpop.f32.mrb[0].mxu0
        %4466 = vmatprep.mubr.bf16.mxu0 0
        %4467 = vmatmul.mubr.bf16.gmra.mrb[0].mxu0 %v4339
        %v4468 = vpop.f32.mrb[0].mxu0
        %v4469 = vadd.f32 0.0, %v4468
        %v4470 = vpop.f32.mrb[0].mxu0
        %v4471 = vpop.f32.mrb[0].mxu0
        %v4472 = vadd.f32 0.0, %v4471
        %v4473 = vpop.f32.mrb[0].mxu0
        %4474 = vmatprep.mubr.bf16.mxu0 0
        %4475 = vmatmul.mubr.bf16.gmra.mrb[0].mxu0 %v4342
        %v4476 = vpop.f32.mrb[0].mxu0
        %v4477 = vadd.f32 0.0, %v4476
        %v4478 = vpop.f32.mrb[0].mxu0
        %v4479 = vpop.f32.mrb[0].mxu0
        %v4480 = vadd.f32 0.0, %v4479
        %v4481 = vpop.f32.mrb[0].mxu0
        %4482 = vmatprep.mubr.bf16.mxu0 0
        %4483 = vmatmul.mubr.bf16.gmra.mrb[0].mxu0 %v4345
        %v4484 = vpop.f32.mrb[0].mxu0
        %v4485 = vadd.f32 0.0, %v4484
        %v4486 = vpop.f32.mrb[0].mxu0
        %v4487 = vpop.f32.mrb[0].mxu0
        %v4488 = vadd.f32 0.0, %v4487
        %v4489 = vpop.f32.mrb[0].mxu0
        %4490 = vmatprep.mubr.bf16.mxu0 0
        %4491 = vmatmul.mubr.bf16.gmra.mrb[0].mxu0 %v4348
        %v4492 = vpop.f32.mrb[0].mxu0
        %v4493 = vadd.f32 0.0, %v4492
        %v4494 = vpop.f32.mrb[0].mxu0
        %v4495 = vpop.f32.mrb[0].mxu0
        %v4496 = vadd.f32 0.0, %v4495
        %v4497 = vpop.f32.mrb[0].mxu0
        %4498 = vmatprep.mubr.bf16.mxu0 0
        %4499 = vmatmul.mubr.bf16.gmra.mrb[0].mxu0 %v4351
        %v4500 = vpop.f32.mrb[0].mxu0
        %v4501 = vadd.f32 0.0, %v4500
        %v4502 = vpop.f32.mrb[0].mxu0
        %v4503 = vpop.f32.mrb[0].mxu0
        %v4504 = vadd.f32 0.0, %v4503
        %v4505 = vpop.f32.mrb[0].mxu0
        %4506 = vmatprep.mubr.bf16.mxu0 0
        %4507 = vmatmul.mubr.bf16.gmra.mrb[0].mxu0 %v4354
        %v4508 = vpop.f32.mrb[0].mxu0
        %v4509 = vadd.f32 0.0, %v4508
        %v4510 = vpop.f32.mrb[0].mxu0
        %v4511 = vpop.f32.mrb[0].mxu0
        %v4512 = vadd.f32 0.0, %v4511
        %v4513 = vpop.f32.mrb[0].mxu0
        %4514 = vmatprep.mubr.bf16.mxu0 0
        %4515 = vmatmul.mubr.bf16.gmra.mrb[0].mxu0 %v4357
        %v4516 = vpop.f32.mrb[0].mxu0
        %v4517 = vadd.f32 0.0, %v4516
        %v4518 = vpop.f32.mrb[0].mxu0
        %v4519 = vpop.f32.mrb[0].mxu0
        %v4520 = vadd.f32 0.0, %v4519
        %v4521 = vpop.f32.mrb[0].mxu0
        %4522 = vdwg.mxu0
        %v4523 = vadd.f32 %v3206, %v4397
        %v4524 = vadd.f32 %v3207, %v4400
        %v4525 = vadd.f32 %v3208, %v4405
        %v4526 = vadd.f32 %v3209, %v4408
        %v4527 = vadd.f32 %v3210, %v4413
        %v4528 = vadd.f32 %v3211, %v4416
        %v4529 = vadd.f32 %v3212, %v4421
        %v4530 = vadd.f32 %v3213, %v4424
        %v4531 = vadd.f32 %v3214, %v4429
        %v4532 = vadd.f32 %v3215, %v4432
        %v4533 = vadd.f32 %v3216, %v4437
        %v4534 = vadd.f32 %v3217, %v4440
        %v4535 = vadd.f32 %v3218, %v4445
        %v4536 = vadd.f32 %v3219, %v4448
        %v4537 = vadd.f32 %v3220, %v4453
        %v4538 = vadd.f32 %v3221, %v4456
        %v4539 = vadd.f32 %v3222, %v4461
        %v4540 = vadd.f32 %v3223, %v4464
        %v4541 = vadd.f32 %v3224, %v4469
        %v4542 = vadd.f32 %v3225, %v4472
        %v4543 = vadd.f32 %v3226, %v4477
        %v4544 = vadd.f32 %v3227, %v4480
        %v4545 = vadd.f32 %v3228, %v4485
        %v4546 = vadd.f32 %v3229, %v4488
        %v4547 = vadd.f32 %v3230, %v4493
        %v4548 = vadd.f32 %v3231, %v4496
        %v4549 = vadd.f32 %v3232, %v4501
        %v4550 = vadd.f32 %v3233, %v4504
        %v4551 = vadd.f32 %v3234, %v4509
        %v4552 = vadd.f32 %v3235, %v4512
        %v4553 = vadd.f32 %v3236, %v4517
        %v4554 = vadd.f32 %v3237, %v4520
        %s4555 = scalar_lea.vmem %s1, 10
        %v4556 = vld [vmem:[%s4555] sm:$0x3]
        %v4557 = vunpack.c.l.b16 %v3976
        %v4558 = vunpack.c.l.b16 %v3979
        %v4559 = vunpack.c.l.b16 %v3983
        %v4560 = vunpack.c.l.b16 %v3986
        %v4561 = vunpack.c.l.b16 %v3990
        %v4562 = vunpack.c.l.b16 %v3993
        %v4563 = vunpack.c.l.b16 %v3997
        %v4564 = vunpack.c.l.b16 %v4000
        %v4565 = vunpack.c.l.b16 %v4004
        %v4566 = vunpack.c.l.b16 %v4007
        %v4567 = vunpack.c.l.b16 %v4011
        %v4568 = vunpack.c.l.b16 %v4014
        %v4569 = vunpack.c.l.b16 %v4018
        %v4570 = vunpack.c.l.b16 %v4021
        %v4571 = vunpack.c.l.b16 %v4025
        %v4572 = vunpack.c.l.b16 %v4028
        %v4573 = vunpack.c.l.b16 %v4032
        %v4574 = vunpack.c.l.b16 %v4035
        %v4575 = vunpack.c.l.b16 %v4039
        %v4576 = vunpack.c.l.b16 %v4042
        %v4577 = vunpack.c.l.b16 %v4046
        %v4578 = vunpack.c.l.b16 %v4049
        %v4579 = vunpack.c.l.b16 %v4053
        %v4580 = vunpack.c.l.b16 %v4056
        %v4581 = vunpack.c.l.b16 %v4060
        %v4582 = vunpack.c.l.b16 %v4063
        %v4583 = vunpack.c.l.b16 %v4067
        %v4584 = vunpack.c.l.b16 %v4070
        %v4585 = vunpack.c.l.b16 %v4074
        %v4586 = vunpack.c.l.b16 %v4077
        %v4587 = vunpack.c.l.b16 %v4081
        %v4588 = vunpack.c.l.b16 %v4084
        %v4589 = vpack.c.b16 %v4558, %v4557
        %v4590 = vpack.c.b16 %v4560, %v4559
        %v4591 = vpack.c.b16 %v4562, %v4561
        %v4592 = vpack.c.b16 %v4564, %v4563
        %v4593 = vpack.c.b16 %v4566, %v4565
        %v4594 = vpack.c.b16 %v4568, %v4567
        %v4595 = vpack.c.b16 %v4570, %v4569
        %v4596 = vpack.c.b16 %v4572, %v4571
        %v4597 = vpack.c.b16 %v4574, %v4573
        %v4598 = vpack.c.b16 %v4576, %v4575
        %v4599 = vpack.c.b16 %v4578, %v4577
        %v4600 = vpack.c.b16 %v4580, %v4579
        %v4601 = vpack.c.b16 %v4582, %v4581
        %v4602 = vpack.c.b16 %v4584, %v4583
        %v4603 = vpack.c.b16 %v4586, %v4585
        %v4604 = vpack.c.b16 %v4588, %v4587
        %v4606 = vsel %vm385, %v4589, 0
        %v4609 = vsel %vm385, %v4590, 0
        %v4612 = vsel %vm385, %v4591, 0
        %v4615 = vsel %vm385, %v4592, 0
        %v4618 = vsel %vm385, %v4593, 0
        %v4621 = vsel %vm385, %v4594, 0
        %v4624 = vsel %vm385, %v4595, 0
        %v4627 = vsel %vm385, %v4596, 0
        %v4630 = vsel %vm385, %v4597, 0
        %v4633 = vsel %vm385, %v4598, 0
        %v4636 = vsel %vm385, %v4599, 0
        %v4639 = vsel %vm385, %v4600, 0
        %v4642 = vsel %vm385, %v4601, 0
        %v4645 = vsel %vm385, %v4602, 0
        %v4648 = vsel %vm385, %v4603, 0
        %v4651 = vsel %vm385, %v4604, 0
        %v4654 = vsel %vm434, %v4556, 0
        %4656 = vmatprep.subr.bf16.mxu0 0
        %4657 = vmatpush1.bf16.msra.mxu0 %v4654
        %4658 = vmatprep.subr.bf16.mxu0 0
        %4659 = vmatpush1.bf16.msra.mxu0 0
        %4660 = vmatprep.subr.bf16.mxu0 0
        %4661 = vmatpush1.bf16.msra.mxu0 0
        %4662 = vmatprep.subr.bf16.mxu0 0
        %4663 = vmatpush1.bf16.msra.mxu0 0
        %4664 = vmatprep.subr.bf16.mxu0 0
        %4665 = vmatpush1.bf16.msra.mxu0 0
        %4666 = vmatprep.subr.bf16.mxu0 0
        %4667 = vmatpush1.bf16.msra.mxu0 0
        %4668 = vmatprep.subr.bf16.mxu0 0
        %4669 = vmatpush1.bf16.msra.mxu0 0
        %4670 = vmatprep.subr.bf16.mxu0 0
        %4671 = vmatpush1.bf16.msra.mxu0 0
        %4672 = vmatprep.subr.bf16.mxu0 0
        %4673 = vmatpush1.bf16.msra.mxu0 0
        %4674 = vmatprep.subr.bf16.mxu0 0
        %4675 = vmatpush1.bf16.msra.mxu0 0
        %4676 = vmatprep.subr.bf16.mxu0 0
        %4677 = vmatpush1.bf16.msra.mxu0 0
        %4678 = vmatprep.subr.bf16.mxu0 0
        %4679 = vmatpush1.bf16.msra.mxu0 0
        %4680 = vmatprep.subr.bf16.mxu0 0
        %4681 = vmatpush1.bf16.msra.mxu0 0
        %4682 = vmatprep.subr.bf16.mxu0 0
        %4683 = vmatpush1.bf16.msra.mxu0 0
        %4684 = vmatprep.subr.bf16.mxu0 0
        %4685 = vmatpush1.bf16.msra.mxu0 0
        %4686 = vmatprep.subr.bf16.mxu0 0
        %4687 = vmatpush1.bf16.msra.mxu0 0
        %4688 = vmatprep.mubr.bf16.mxu0 0
        %4689 = vmatmul.mubr.bf16.gmra.mrb[0].mxu0 %v4606
        %v4690 = vpop.f32.mrb[0].mxu0
        %v4691 = vadd.f32 0.0, %v4690
        %v4692 = vpop.f32.mrb[0].mxu0
        %v4693 = vpop.f32.mrb[0].mxu0
        %v4694 = vadd.f32 0.0, %v4693
        %v4695 = vpop.f32.mrb[0].mxu0
        %4696 = vmatprep.mubr.bf16.mxu0 0
        %4697 = vmatmul.mubr.bf16.gmra.mrb[0].mxu0 %v4609
        %v4698 = vpop.f32.mrb[0].mxu0
        %v4699 = vadd.f32 0.0, %v4698
        %v4700 = vpop.f32.mrb[0].mxu0
        %v4701 = vpop.f32.mrb[0].mxu0
        %v4702 = vadd.f32 0.0, %v4701
        %v4703 = vpop.f32.mrb[0].mxu0
        %4704 = vmatprep.mubr.bf16.mxu0 0
        %4705 = vmatmul.mubr.bf16.gmra.mrb[0].mxu0 %v4612
        %v4706 = vpop.f32.mrb[0].mxu0
        %v4707 = vadd.f32 0.0, %v4706
        %v4708 = vpop.f32.mrb[0].mxu0
        %v4709 = vpop.f32.mrb[0].mxu0
        %v4710 = vadd.f32 0.0, %v4709
        %v4711 = vpop.f32.mrb[0].mxu0
        %4712 = vmatprep.mubr.bf16.mxu0 0
        %4713 = vmatmul.mubr.bf16.gmra.mrb[0].mxu0 %v4615
        %v4714 = vpop.f32.mrb[0].mxu0
        %v4715 = vadd.f32 0.0, %v4714
        %v4716 = vpop.f32.mrb[0].mxu0
        %v4717 = vpop.f32.mrb[0].mxu0
        %v4718 = vadd.f32 0.0, %v4717
        %v4719 = vpop.f32.mrb[0].mxu0
        %4720 = vmatprep.mubr.bf16.mxu0 0
        %4721 = vmatmul.mubr.bf16.gmra.mrb[0].mxu0 %v4618
        %v4722 = vpop.f32.mrb[0].mxu0
        %v4723 = vadd.f32 0.0, %v4722
        %v4724 = vpop.f32.mrb[0].mxu0
        %v4725 = vpop.f32.mrb[0].mxu0
        %v4726 = vadd.f32 0.0, %v4725
        %v4727 = vpop.f32.mrb[0].mxu0
        %4728 = vmatprep.mubr.bf16.mxu0 0
        %4729 = vmatmul.mubr.bf16.gmra.mrb[0].mxu0 %v4621
        %v4730 = vpop.f32.mrb[0].mxu0
        %v4731 = vadd.f32 0.0, %v4730
        %v4732 = vpop.f32.mrb[0].mxu0
        %v4733 = vpop.f32.mrb[0].mxu0
        %v4734 = vadd.f32 0.0, %v4733
        %v4735 = vpop.f32.mrb[0].mxu0
        %4736 = vmatprep.mubr.bf16.mxu0 0
        %4737 = vmatmul.mubr.bf16.gmra.mrb[0].mxu0 %v4624
        %v4738 = vpop.f32.mrb[0].mxu0
        %v4739 = vadd.f32 0.0, %v4738
        %v4740 = vpop.f32.mrb[0].mxu0
        %v4741 = vpop.f32.mrb[0].mxu0
        %v4742 = vadd.f32 0.0, %v4741
        %v4743 = vpop.f32.mrb[0].mxu0
        %4744 = vmatprep.mubr.bf16.mxu0 0
        %4745 = vmatmul.mubr.bf16.gmra.mrb[0].mxu0 %v4627
        %v4746 = vpop.f32.mrb[0].mxu0
        %v4747 = vadd.f32 0.0, %v4746
        %v4748 = vpop.f32.mrb[0].mxu0
        %v4749 = vpop.f32.mrb[0].mxu0
        %v4750 = vadd.f32 0.0, %v4749
        %v4751 = vpop.f32.mrb[0].mxu0
        %4752 = vmatprep.mubr.bf16.mxu0 0
        %4753 = vmatmul.mubr.bf16.gmra.mrb[0].mxu0 %v4630
        %v4754 = vpop.f32.mrb[0].mxu0
        %v4755 = vadd.f32 0.0, %v4754
        %v4756 = vpop.f32.mrb[0].mxu0
        %v4757 = vpop.f32.mrb[0].mxu0
        %v4758 = vadd.f32 0.0, %v4757
        %v4759 = vpop.f32.mrb[0].mxu0
        %4760 = vmatprep.mubr.bf16.mxu0 0
        %4761 = vmatmul.mubr.bf16.gmra.mrb[0].mxu0 %v4633
        %v4762 = vpop.f32.mrb[0].mxu0
        %v4763 = vadd.f32 0.0, %v4762
        %v4764 = vpop.f32.mrb[0].mxu0
        %v4765 = vpop.f32.mrb[0].mxu0
        %v4766 = vadd.f32 0.0, %v4765
        %v4767 = vpop.f32.mrb[0].mxu0
        %4768 = vmatprep.mubr.bf16.mxu0 0
        %4769 = vmatmul.mubr.bf16.gmra.mrb[0].mxu0 %v4636
        %v4770 = vpop.f32.mrb[0].mxu0
        %v4771 = vadd.f32 0.0, %v4770
        %v4772 = vpop.f32.mrb[0].mxu0
        %v4773 = vpop.f32.mrb[0].mxu0
        %v4774 = vadd.f32 0.0, %v4773
        %v4775 = vpop.f32.mrb[0].mxu0
        %4776 = vmatprep.mubr.bf16.mxu0 0
        %4777 = vmatmul.mubr.bf16.gmra.mrb[0].mxu0 %v4639
        %v4778 = vpop.f32.mrb[0].mxu0
        %v4779 = vadd.f32 0.0, %v4778
        %v4780 = vpop.f32.mrb[0].mxu0
        %v4781 = vpop.f32.mrb[0].mxu0
        %v4782 = vadd.f32 0.0, %v4781
        %v4783 = vpop.f32.mrb[0].mxu0
        %4784 = vmatprep.mubr.bf16.mxu0 0
        %4785 = vmatmul.mubr.bf16.gmra.mrb[0].mxu0 %v4642
        %v4786 = vpop.f32.mrb[0].mxu0
        %v4787 = vadd.f32 0.0, %v4786
        %v4788 = vpop.f32.mrb[0].mxu0
        %v4789 = vpop.f32.mrb[0].mxu0
        %v4790 = vadd.f32 0.0, %v4789
        %v4791 = vpop.f32.mrb[0].mxu0
        %4792 = vmatprep.mubr.bf16.mxu0 0
        %4793 = vmatmul.mubr.bf16.gmra.mrb[0].mxu0 %v4645
        %v4794 = vpop.f32.mrb[0].mxu0
        %v4795 = vadd.f32 0.0, %v4794
        %v4796 = vpop.f32.mrb[0].mxu0
        %v4797 = vpop.f32.mrb[0].mxu0
        %v4798 = vadd.f32 0.0, %v4797
        %v4799 = vpop.f32.mrb[0].mxu0
        %4800 = vmatprep.mubr.bf16.mxu0 0
        %4801 = vmatmul.mubr.bf16.gmra.mrb[0].mxu0 %v4648
        %v4802 = vpop.f32.mrb[0].mxu0
        %v4803 = vadd.f32 0.0, %v4802
        %v4804 = vpop.f32.mrb[0].mxu0
        %v4805 = vpop.f32.mrb[0].mxu0
        %v4806 = vadd.f32 0.0, %v4805
        %v4807 = vpop.f32.mrb[0].mxu0
        %4808 = vmatprep.mubr.bf16.mxu0 0
        %4809 = vmatmul.mubr.bf16.gmra.mrb[0].mxu0 %v4651
        %v4810 = vpop.f32.mrb[0].mxu0
        %v4811 = vadd.f32 0.0, %v4810
        %v4812 = vpop.f32.mrb[0].mxu0
        %v4813 = vpop.f32.mrb[0].mxu0
        %v4814 = vadd.f32 0.0, %v4813
        %v4815 = vpop.f32.mrb[0].mxu0
        %4816 = vdwg.mxu0
        %v4817 = vadd.f32 %v4523, %v4691
        %v4818 = vadd.f32 %v4524, %v4694
        %v4819 = vadd.f32 %v4525, %v4699
        %v4820 = vadd.f32 %v4526, %v4702
        %v4821 = vadd.f32 %v4527, %v4707
        %v4822 = vadd.f32 %v4528, %v4710
        %v4823 = vadd.f32 %v4529, %v4715
        %v4824 = vadd.f32 %v4530, %v4718
        %v4825 = vadd.f32 %v4531, %v4723
        %v4826 = vadd.f32 %v4532, %v4726
        %v4827 = vadd.f32 %v4533, %v4731
        %v4828 = vadd.f32 %v4534, %v4734
        %v4829 = vadd.f32 %v4535, %v4739
        %v4830 = vadd.f32 %v4536, %v4742
        %v4831 = vadd.f32 %v4537, %v4747
        %v4832 = vadd.f32 %v4538, %v4750
        %v4833 = vadd.f32 %v4539, %v4755
        %v4834 = vadd.f32 %v4540, %v4758
        %v4835 = vadd.f32 %v4541, %v4763
        %v4836 = vadd.f32 %v4542, %v4766
        %v4837 = vadd.f32 %v4543, %v4771
        %v4838 = vadd.f32 %v4544, %v4774
        %v4839 = vadd.f32 %v4545, %v4779
        %v4840 = vadd.f32 %v4546, %v4782
        %v4841 = vadd.f32 %v4547, %v4787
        %v4842 = vadd.f32 %v4548, %v4790
        %v4843 = vadd.f32 %v4549, %v4795
        %v4844 = vadd.f32 %v4550, %v4798
        %v4845 = vadd.f32 %v4551, %v4803
        %v4846 = vadd.f32 %v4552, %v4806
        %v4847 = vadd.f32 %v4553, %v4811
        %v4848 = vadd.f32 %v4554, %v4814
        %s4849 = scalar_lea.vmem %s1, 16
        %v4850 = vld [vmem:[%s4849] sm:$0x3]
        %v4852 = vsel %vm434, %v4850, 0
        %4854 = vmatprep.subr.bf16.mxu0 0
        %4855 = vmatpush1.bf16.msra.mxu0 %v4852
        %4856 = vmatprep.subr.bf16.mxu0 0
        %4857 = vmatpush1.bf16.msra.mxu0 0
        %4858 = vmatprep.subr.bf16.mxu0 0
        %4859 = vmatpush1.bf16.msra.mxu0 0
        %4860 = vmatprep.subr.bf16.mxu0 0
        %4861 = vmatpush1.bf16.msra.mxu0 0
        %4862 = vmatprep.subr.bf16.mxu0 0
        %4863 = vmatpush1.bf16.msra.mxu0 0
        %4864 = vmatprep.subr.bf16.mxu0 0
        %4865 = vmatpush1.bf16.msra.mxu0 0
        %4866 = vmatprep.subr.bf16.mxu0 0
        %4867 = vmatpush1.bf16.msra.mxu0 0
        %4868 = vmatprep.subr.bf16.mxu0 0
        %4869 = vmatpush1.bf16.msra.mxu0 0
        %4870 = vmatprep.subr.bf16.mxu0 0
        %4871 = vmatpush1.bf16.msra.mxu0 0
        %4872 = vmatprep.subr.bf16.mxu0 0
        %4873 = vmatpush1.bf16.msra.mxu0 0
        %4874 = vmatprep.subr.bf16.mxu0 0
        %4875 = vmatpush1.bf16.msra.mxu0 0
        %4876 = vmatprep.subr.bf16.mxu0 0
        %4877 = vmatpush1.bf16.msra.mxu0 0
        %4878 = vmatprep.subr.bf16.mxu0 0
        %4879 = vmatpush1.bf16.msra.mxu0 0
        %4880 = vmatprep.subr.bf16.mxu0 0
        %4881 = vmatpush1.bf16.msra.mxu0 0
        %4882 = vmatprep.subr.bf16.mxu0 0
        %4883 = vmatpush1.bf16.msra.mxu0 0
        %4884 = vmatprep.subr.bf16.mxu0 0
        %4885 = vmatpush1.bf16.msra.mxu0 0
        %4886 = vmatprep.mubr.bf16.mxu0 0
        %4887 = vmatmul.mubr.bf16.gmra.mrb[0].mxu0 %v4606
        %v4888 = vpop.f32.mrb[0].mxu0
        %v4889 = vadd.f32 0.0, %v4888
        %v4890 = vpop.f32.mrb[0].mxu0
        %v4891 = vpop.f32.mrb[0].mxu0
        %v4892 = vadd.f32 0.0, %v4891
        %v4893 = vpop.f32.mrb[0].mxu0
        %4894 = vmatprep.mubr.bf16.mxu0 0
        %4895 = vmatmul.mubr.bf16.gmra.mrb[0].mxu0 %v4609
        %v4896 = vpop.f32.mrb[0].mxu0
        %v4897 = vadd.f32 0.0, %v4896
        %v4898 = vpop.f32.mrb[0].mxu0
        %v4899 = vpop.f32.mrb[0].mxu0
        %v4900 = vadd.f32 0.0, %v4899
        %v4901 = vpop.f32.mrb[0].mxu0
        %4902 = vmatprep.mubr.bf16.mxu0 0
        %4903 = vmatmul.mubr.bf16.gmra.mrb[0].mxu0 %v4612
        %v4904 = vpop.f32.mrb[0].mxu0
        %v4905 = vadd.f32 0.0, %v4904
        %v4906 = vpop.f32.mrb[0].mxu0
        %v4907 = vpop.f32.mrb[0].mxu0
        %v4908 = vadd.f32 0.0, %v4907
        %v4909 = vpop.f32.mrb[0].mxu0
        %4910 = vmatprep.mubr.bf16.mxu0 0
        %4911 = vmatmul.mubr.bf16.gmra.mrb[0].mxu0 %v4615
        %v4912 = vpop.f32.mrb[0].mxu0
        %v4913 = vadd.f32 0.0, %v4912
        %v4914 = vpop.f32.mrb[0].mxu0
        %v4915 = vpop.f32.mrb[0].mxu0
        %v4916 = vadd.f32 0.0, %v4915
        %v4917 = vpop.f32.mrb[0].mxu0
        %4918 = vmatprep.mubr.bf16.mxu0 0
        %4919 = vmatmul.mubr.bf16.gmra.mrb[0].mxu0 %v4618
        %v4920 = vpop.f32.mrb[0].mxu0
        %v4921 = vadd.f32 0.0, %v4920
        %v4922 = vpop.f32.mrb[0].mxu0
        %v4923 = vpop.f32.mrb[0].mxu0
        %v4924 = vadd.f32 0.0, %v4923
        %v4925 = vpop.f32.mrb[0].mxu0
        %4926 = vmatprep.mubr.bf16.mxu0 0
        %4927 = vmatmul.mubr.bf16.gmra.mrb[0].mxu0 %v4621
        %v4928 = vpop.f32.mrb[0].mxu0
        %v4929 = vadd.f32 0.0, %v4928
        %v4930 = vpop.f32.mrb[0].mxu0
        %v4931 = vpop.f32.mrb[0].mxu0
        %v4932 = vadd.f32 0.0, %v4931
        %v4933 = vpop.f32.mrb[0].mxu0
        %4934 = vmatprep.mubr.bf16.mxu0 0
        %4935 = vmatmul.mubr.bf16.gmra.mrb[0].mxu0 %v4624
        %v4936 = vpop.f32.mrb[0].mxu0
        %v4937 = vadd.f32 0.0, %v4936
        %v4938 = vpop.f32.mrb[0].mxu0
        %v4939 = vpop.f32.mrb[0].mxu0
        %v4940 = vadd.f32 0.0, %v4939
        %v4941 = vpop.f32.mrb[0].mxu0
        %4942 = vmatprep.mubr.bf16.mxu0 0
        %4943 = vmatmul.mubr.bf16.gmra.mrb[0].mxu0 %v4627
        %v4944 = vpop.f32.mrb[0].mxu0
        %v4945 = vadd.f32 0.0, %v4944
        %v4946 = vpop.f32.mrb[0].mxu0
        %v4947 = vpop.f32.mrb[0].mxu0
        %v4948 = vadd.f32 0.0, %v4947
        %v4949 = vpop.f32.mrb[0].mxu0
        %4950 = vmatprep.mubr.bf16.mxu0 0
        %4951 = vmatmul.mubr.bf16.gmra.mrb[0].mxu0 %v4630
        %v4952 = vpop.f32.mrb[0].mxu0
        %v4953 = vadd.f32 0.0, %v4952
        %v4954 = vpop.f32.mrb[0].mxu0
        %v4955 = vpop.f32.mrb[0].mxu0
        %v4956 = vadd.f32 0.0, %v4955
        %v4957 = vpop.f32.mrb[0].mxu0
        %4958 = vmatprep.mubr.bf16.mxu0 0
        %4959 = vmatmul.mubr.bf16.gmra.mrb[0].mxu0 %v4633
        %v4960 = vpop.f32.mrb[0].mxu0
        %v4961 = vadd.f32 0.0, %v4960
        %v4962 = vpop.f32.mrb[0].mxu0
        %v4963 = vpop.f32.mrb[0].mxu0
        %v4964 = vadd.f32 0.0, %v4963
        %v4965 = vpop.f32.mrb[0].mxu0
        %4966 = vmatprep.mubr.bf16.mxu0 0
        %4967 = vmatmul.mubr.bf16.gmra.mrb[0].mxu0 %v4636
        %v4968 = vpop.f32.mrb[0].mxu0
        %v4969 = vadd.f32 0.0, %v4968
        %v4970 = vpop.f32.mrb[0].mxu0
        %v4971 = vpop.f32.mrb[0].mxu0
        %v4972 = vadd.f32 0.0, %v4971
        %v4973 = vpop.f32.mrb[0].mxu0
        %4974 = vmatprep.mubr.bf16.mxu0 0
        %4975 = vmatmul.mubr.bf16.gmra.mrb[0].mxu0 %v4639
        %v4976 = vpop.f32.mrb[0].mxu0
        %v4977 = vadd.f32 0.0, %v4976
        %v4978 = vpop.f32.mrb[0].mxu0
        %v4979 = vpop.f32.mrb[0].mxu0
        %v4980 = vadd.f32 0.0, %v4979
        %v4981 = vpop.f32.mrb[0].mxu0
        %4982 = vmatprep.mubr.bf16.mxu0 0
        %4983 = vmatmul.mubr.bf16.gmra.mrb[0].mxu0 %v4642
        %v4984 = vpop.f32.mrb[0].mxu0
        %v4985 = vadd.f32 0.0, %v4984
        %v4986 = vpop.f32.mrb[0].mxu0
        %v4987 = vpop.f32.mrb[0].mxu0
        %v4988 = vadd.f32 0.0, %v4987
        %v4989 = vpop.f32.mrb[0].mxu0
        %4990 = vmatprep.mubr.bf16.mxu0 0
        %4991 = vmatmul.mubr.bf16.gmra.mrb[0].mxu0 %v4645
        %v4992 = vpop.f32.mrb[0].mxu0
        %v4993 = vadd.f32 0.0, %v4992
        %v4994 = vpop.f32.mrb[0].mxu0
        %v4995 = vpop.f32.mrb[0].mxu0
        %v4996 = vadd.f32 0.0, %v4995
        %v4997 = vpop.f32.mrb[0].mxu0
        %4998 = vmatprep.mubr.bf16.mxu0 0
        %4999 = vmatmul.mubr.bf16.gmra.mrb[0].mxu0 %v4648
        %v5000 = vpop.f32.mrb[0].mxu0
        %v5001 = vadd.f32 0.0, %v5000
        %v5002 = vpop.f32.mrb[0].mxu0
        %v5003 = vpop.f32.mrb[0].mxu0
        %v5004 = vadd.f32 0.0, %v5003
        %v5005 = vpop.f32.mrb[0].mxu0
        %5006 = vmatprep.mubr.bf16.mxu0 0
        %5007 = vmatmul.mubr.bf16.gmra.mrb[0].mxu0 %v4651
        %v5008 = vpop.f32.mrb[0].mxu0
        %v5009 = vadd.f32 0.0, %v5008
        %v5010 = vpop.f32.mrb[0].mxu0
        %v5011 = vpop.f32.mrb[0].mxu0
        %v5012 = vadd.f32 0.0, %v5011
        %v5013 = vpop.f32.mrb[0].mxu0
        %5014 = vdwg.mxu0
        %v5015 = vadd.f32 %v3698, %v4889
        %v5016 = vadd.f32 %v3699, %v4892
        %v5017 = vadd.f32 %v3700, %v4897
        %v5018 = vadd.f32 %v3701, %v4900
        %v5019 = vadd.f32 %v3702, %v4905
        %v5020 = vadd.f32 %v3703, %v4908
        %v5021 = vadd.f32 %v3704, %v4913
        %v5022 = vadd.f32 %v3705, %v4916
        %v5023 = vadd.f32 %v3706, %v4921
        %v5024 = vadd.f32 %v3707, %v4924
        %v5025 = vadd.f32 %v3708, %v4929
        %v5026 = vadd.f32 %v3709, %v4932
        %v5027 = vadd.f32 %v3710, %v4937
        %v5028 = vadd.f32 %v3711, %v4940
        %v5029 = vadd.f32 %v3712, %v4945
        %v5030 = vadd.f32 %v3713, %v4948
        %v5031 = vadd.f32 %v3714, %v4953
        %v5032 = vadd.f32 %v3715, %v4956
        %v5033 = vadd.f32 %v3716, %v4961
        %v5034 = vadd.f32 %v3717, %v4964
        %v5035 = vadd.f32 %v3718, %v4969
        %v5036 = vadd.f32 %v3719, %v4972
        %v5037 = vadd.f32 %v3720, %v4977
        %v5038 = vadd.f32 %v3721, %v4980
        %v5039 = vadd.f32 %v3722, %v4985
        %v5040 = vadd.f32 %v3723, %v4988
        %v5041 = vadd.f32 %v3724, %v4993
        %v5042 = vadd.f32 %v3725, %v4996
        %v5043 = vadd.f32 %v3726, %v5001
        %v5044 = vadd.f32 %v3727, %v5004
        %v5045 = vadd.f32 %v3728, %v5009
        %v5046 = vadd.f32 %v3729, %v5012
        %s5047 = scalar_lea.vmem %s1, 22
        %v5048 = vld [vmem:[%s5047] sm:$0x3]
        %v5049 = vunpack.c.l.b16 %v4152
        %v5050 = vunpack.c.l.b16 %v4155
        %v5051 = vunpack.c.l.b16 %v4159
        %v5052 = vunpack.c.l.b16 %v4162
        %v5053 = vunpack.c.l.b16 %v4166
        %v5054 = vunpack.c.l.b16 %v4169
        %v5055 = vunpack.c.l.b16 %v4173
        %v5056 = vunpack.c.l.b16 %v4176
        %v5057 = vunpack.c.l.b16 %v4180
        %v5058 = vunpack.c.l.b16 %v4183
        %v5059 = vunpack.c.l.b16 %v4187
        %v5060 = vunpack.c.l.b16 %v4190
        %v5061 = vunpack.c.l.b16 %v4194
        %v5062 = vunpack.c.l.b16 %v4197
        %v5063 = vunpack.c.l.b16 %v4201
        %v5064 = vunpack.c.l.b16 %v4204
        %v5065 = vunpack.c.l.b16 %v4208
        %v5066 = vunpack.c.l.b16 %v4211
        %v5067 = vunpack.c.l.b16 %v4215
        %v5068 = vunpack.c.l.b16 %v4218
        %v5069 = vunpack.c.l.b16 %v4222
        %v5070 = vunpack.c.l.b16 %v4225
        %v5071 = vunpack.c.l.b16 %v4229
        %v5072 = vunpack.c.l.b16 %v4232
        %v5073 = vunpack.c.l.b16 %v4236
        %v5074 = vunpack.c.l.b16 %v4239
        %v5075 = vunpack.c.l.b16 %v4243
        %v5076 = vunpack.c.l.b16 %v4246
        %v5077 = vunpack.c.l.b16 %v4250
        %v5078 = vunpack.c.l.b16 %v4253
        %v5079 = vunpack.c.l.b16 %v4257
        %v5080 = vunpack.c.l.b16 %v4260
        %v5081 = vpack.c.b16 %v5050, %v5049
        %v5082 = vpack.c.b16 %v5052, %v5051
        %v5083 = vpack.c.b16 %v5054, %v5053
        %v5084 = vpack.c.b16 %v5056, %v5055
        %v5085 = vpack.c.b16 %v5058, %v5057
        %v5086 = vpack.c.b16 %v5060, %v5059
        %v5087 = vpack.c.b16 %v5062, %v5061
        %v5088 = vpack.c.b16 %v5064, %v5063
        %v5089 = vpack.c.b16 %v5066, %v5065
        %v5090 = vpack.c.b16 %v5068, %v5067
        %v5091 = vpack.c.b16 %v5070, %v5069
        %v5092 = vpack.c.b16 %v5072, %v5071
        %v5093 = vpack.c.b16 %v5074, %v5073
        %v5094 = vpack.c.b16 %v5076, %v5075
        %v5095 = vpack.c.b16 %v5078, %v5077
        %v5096 = vpack.c.b16 %v5080, %v5079
        %v5098 = vsel %vm385, %v5081, 0
        %v5101 = vsel %vm385, %v5082, 0
        %v5104 = vsel %vm385, %v5083, 0
        %v5107 = vsel %vm385, %v5084, 0
        %v5110 = vsel %vm385, %v5085, 0
        %v5113 = vsel %vm385, %v5086, 0
        %v5116 = vsel %vm385, %v5087, 0
        %v5119 = vsel %vm385, %v5088, 0
        %v5122 = vsel %vm385, %v5089, 0
        %v5125 = vsel %vm385, %v5090, 0
        %v5128 = vsel %vm385, %v5091, 0
        %v5131 = vsel %vm385, %v5092, 0
        %v5134 = vsel %vm385, %v5093, 0
        %v5137 = vsel %vm385, %v5094, 0
        %v5140 = vsel %vm385, %v5095, 0
        %v5143 = vsel %vm385, %v5096, 0
        %v5146 = vsel %vm434, %v5048, 0
        %5148 = vmatprep.subr.bf16.mxu0 0
        %5149 = vmatpush1.bf16.msra.mxu0 %v5146
        %5150 = vmatprep.subr.bf16.mxu0 0
        %5151 = vmatpush1.bf16.msra.mxu0 0
        %5152 = vmatprep.subr.bf16.mxu0 0
        %5153 = vmatpush1.bf16.msra.mxu0 0
        %5154 = vmatprep.subr.bf16.mxu0 0
        %5155 = vmatpush1.bf16.msra.mxu0 0
        %5156 = vmatprep.subr.bf16.mxu0 0
        %5157 = vmatpush1.bf16.msra.mxu0 0
        %5158 = vmatprep.subr.bf16.mxu0 0
        %5159 = vmatpush1.bf16.msra.mxu0 0
        %5160 = vmatprep.subr.bf16.mxu0 0
        %5161 = vmatpush1.bf16.msra.mxu0 0
        %5162 = vmatprep.subr.bf16.mxu0 0
        %5163 = vmatpush1.bf16.msra.mxu0 0
        %5164 = vmatprep.subr.bf16.mxu0 0
        %5165 = vmatpush1.bf16.msra.mxu0 0
        %5166 = vmatprep.subr.bf16.mxu0 0
        %5167 = vmatpush1.bf16.msra.mxu0 0
        %5168 = vmatprep.subr.bf16.mxu0 0
        %5169 = vmatpush1.bf16.msra.mxu0 0
        %5170 = vmatprep.subr.bf16.mxu0 0
        %5171 = vmatpush1.bf16.msra.mxu0 0
        %5172 = vmatprep.subr.bf16.mxu0 0
        %5173 = vmatpush1.bf16.msra.mxu0 0
        %5174 = vmatprep.subr.bf16.mxu0 0
        %5175 = vmatpush1.bf16.msra.mxu0 0
        %5176 = vmatprep.subr.bf16.mxu0 0
        %5177 = vmatpush1.bf16.msra.mxu0 0
        %5178 = vmatprep.subr.bf16.mxu0 0
        %5179 = vmatpush1.bf16.msra.mxu0 0
        %5180 = vmatprep.mubr.bf16.mxu0 0
        %5181 = vmatmul.mubr.bf16.gmra.mrb[0].mxu0 %v5098
        %v5182 = vpop.f32.mrb[0].mxu0
        %v5183 = vadd.f32 0.0, %v5182
        %v5184 = vpop.f32.mrb[0].mxu0
        %v5185 = vpop.f32.mrb[0].mxu0
        %v5186 = vadd.f32 0.0, %v5185
        %v5187 = vpop.f32.mrb[0].mxu0
        %5188 = vmatprep.mubr.bf16.mxu0 0
        %5189 = vmatmul.mubr.bf16.gmra.mrb[0].mxu0 %v5101
        %v5190 = vpop.f32.mrb[0].mxu0
        %v5191 = vadd.f32 0.0, %v5190
        %v5192 = vpop.f32.mrb[0].mxu0
        %v5193 = vpop.f32.mrb[0].mxu0
        %v5194 = vadd.f32 0.0, %v5193
        %v5195 = vpop.f32.mrb[0].mxu0
        %5196 = vmatprep.mubr.bf16.mxu0 0
        %5197 = vmatmul.mubr.bf16.gmra.mrb[0].mxu0 %v5104
        %v5198 = vpop.f32.mrb[0].mxu0
        %v5199 = vadd.f32 0.0, %v5198
        %v5200 = vpop.f32.mrb[0].mxu0
        %v5201 = vpop.f32.mrb[0].mxu0
        %v5202 = vadd.f32 0.0, %v5201
        %v5203 = vpop.f32.mrb[0].mxu0
        %5204 = vmatprep.mubr.bf16.mxu0 0
        %5205 = vmatmul.mubr.bf16.gmra.mrb[0].mxu0 %v5107
        %v5206 = vpop.f32.mrb[0].mxu0
        %v5207 = vadd.f32 0.0, %v5206
        %v5208 = vpop.f32.mrb[0].mxu0
        %v5209 = vpop.f32.mrb[0].mxu0
        %v5210 = vadd.f32 0.0, %v5209
        %v5211 = vpop.f32.mrb[0].mxu0
        %5212 = vmatprep.mubr.bf16.mxu0 0
        %5213 = vmatmul.mubr.bf16.gmra.mrb[0].mxu0 %v5110
        %v5214 = vpop.f32.mrb[0].mxu0
        %v5215 = vadd.f32 0.0, %v5214
        %v5216 = vpop.f32.mrb[0].mxu0
        %v5217 = vpop.f32.mrb[0].mxu0
        %v5218 = vadd.f32 0.0, %v5217
        %v5219 = vpop.f32.mrb[0].mxu0
        %5220 = vmatprep.mubr.bf16.mxu0 0
        %5221 = vmatmul.mubr.bf16.gmra.mrb[0].mxu0 %v5113
        %v5222 = vpop.f32.mrb[0].mxu0
        %v5223 = vadd.f32 0.0, %v5222
        %v5224 = vpop.f32.mrb[0].mxu0
        %v5225 = vpop.f32.mrb[0].mxu0
        %v5226 = vadd.f32 0.0, %v5225
        %v5227 = vpop.f32.mrb[0].mxu0
        %5228 = vmatprep.mubr.bf16.mxu0 0
        %5229 = vmatmul.mubr.bf16.gmra.mrb[0].mxu0 %v5116
        %v5230 = vpop.f32.mrb[0].mxu0
        %v5231 = vadd.f32 0.0, %v5230
        %v5232 = vpop.f32.mrb[0].mxu0
        %v5233 = vpop.f32.mrb[0].mxu0
        %v5234 = vadd.f32 0.0, %v5233
        %v5235 = vpop.f32.mrb[0].mxu0
        %5236 = vmatprep.mubr.bf16.mxu0 0
        %5237 = vmatmul.mubr.bf16.gmra.mrb[0].mxu0 %v5119
        %v5238 = vpop.f32.mrb[0].mxu0
        %v5239 = vadd.f32 0.0, %v5238
        %v5240 = vpop.f32.mrb[0].mxu0
        %v5241 = vpop.f32.mrb[0].mxu0
        %v5242 = vadd.f32 0.0, %v5241
        %v5243 = vpop.f32.mrb[0].mxu0
        %5244 = vmatprep.mubr.bf16.mxu0 0
        %5245 = vmatmul.mubr.bf16.gmra.mrb[0].mxu0 %v5122
        %v5246 = vpop.f32.mrb[0].mxu0
        %v5247 = vadd.f32 0.0, %v5246
        %v5248 = vpop.f32.mrb[0].mxu0
        %v5249 = vpop.f32.mrb[0].mxu0
        %v5250 = vadd.f32 0.0, %v5249
        %v5251 = vpop.f32.mrb[0].mxu0
        %5252 = vmatprep.mubr.bf16.mxu0 0
        %5253 = vmatmul.mubr.bf16.gmra.mrb[0].mxu0 %v5125
        %v5254 = vpop.f32.mrb[0].mxu0
        %v5255 = vadd.f32 0.0, %v5254
        %v5256 = vpop.f32.mrb[0].mxu0
        %v5257 = vpop.f32.mrb[0].mxu0
        %v5258 = vadd.f32 0.0, %v5257
        %v5259 = vpop.f32.mrb[0].mxu0
        %5260 = vmatprep.mubr.bf16.mxu0 0
        %5261 = vmatmul.mubr.bf16.gmra.mrb[0].mxu0 %v5128
        %v5262 = vpop.f32.mrb[0].mxu0
        %v5263 = vadd.f32 0.0, %v5262
        %v5264 = vpop.f32.mrb[0].mxu0
        %v5265 = vpop.f32.mrb[0].mxu0
        %v5266 = vadd.f32 0.0, %v5265
        %v5267 = vpop.f32.mrb[0].mxu0
        %5268 = vmatprep.mubr.bf16.mxu0 0
        %5269 = vmatmul.mubr.bf16.gmra.mrb[0].mxu0 %v5131
        %v5270 = vpop.f32.mrb[0].mxu0
        %v5271 = vadd.f32 0.0, %v5270
        %v5272 = vpop.f32.mrb[0].mxu0
        %v5273 = vpop.f32.mrb[0].mxu0
        %v5274 = vadd.f32 0.0, %v5273
        %v5275 = vpop.f32.mrb[0].mxu0
        %5276 = vmatprep.mubr.bf16.mxu0 0
        %5277 = vmatmul.mubr.bf16.gmra.mrb[0].mxu0 %v5134
        %v5278 = vpop.f32.mrb[0].mxu0
        %v5279 = vadd.f32 0.0, %v5278
        %v5280 = vpop.f32.mrb[0].mxu0
        %v5281 = vpop.f32.mrb[0].mxu0
        %v5282 = vadd.f32 0.0, %v5281
        %v5283 = vpop.f32.mrb[0].mxu0
        %5284 = vmatprep.mubr.bf16.mxu0 0
        %5285 = vmatmul.mubr.bf16.gmra.mrb[0].mxu0 %v5137
        %v5286 = vpop.f32.mrb[0].mxu0
        %v5287 = vadd.f32 0.0, %v5286
        %v5288 = vpop.f32.mrb[0].mxu0
        %v5289 = vpop.f32.mrb[0].mxu0
        %v5290 = vadd.f32 0.0, %v5289
        %v5291 = vpop.f32.mrb[0].mxu0
        %5292 = vmatprep.mubr.bf16.mxu0 0
        %5293 = vmatmul.mubr.bf16.gmra.mrb[0].mxu0 %v5140
        %v5294 = vpop.f32.mrb[0].mxu0
        %v5295 = vadd.f32 0.0, %v5294
        %v5296 = vpop.f32.mrb[0].mxu0
        %v5297 = vpop.f32.mrb[0].mxu0
        %v5298 = vadd.f32 0.0, %v5297
        %v5299 = vpop.f32.mrb[0].mxu0
        %5300 = vmatprep.mubr.bf16.mxu0 0
        %5301 = vmatmul.mubr.bf16.gmra.mrb[0].mxu0 %v5143
        %v5302 = vpop.f32.mrb[0].mxu0
        %v5303 = vadd.f32 0.0, %v5302
        %v5304 = vpop.f32.mrb[0].mxu0
        %v5305 = vpop.f32.mrb[0].mxu0
        %v5306 = vadd.f32 0.0, %v5305
        %v5307 = vpop.f32.mrb[0].mxu0
        %5308 = vdwg.mxu0
        %v5309 = vadd.f32 %v5015, %v5183
        %v5310 = vadd.f32 %v5016, %v5186
        %v5311 = vadd.f32 %v5017, %v5191
        %v5312 = vadd.f32 %v5018, %v5194
        %v5313 = vadd.f32 %v5019, %v5199
        %v5314 = vadd.f32 %v5020, %v5202
        %v5315 = vadd.f32 %v5021, %v5207
        %v5316 = vadd.f32 %v5022, %v5210
        %v5317 = vadd.f32 %v5023, %v5215
        %v5318 = vadd.f32 %v5024, %v5218
        %v5319 = vadd.f32 %v5025, %v5223
        %v5320 = vadd.f32 %v5026, %v5226
        %v5321 = vadd.f32 %v5027, %v5231
        %v5322 = vadd.f32 %v5028, %v5234
        %v5323 = vadd.f32 %v5029, %v5239
        %v5324 = vadd.f32 %v5030, %v5242
        %v5325 = vadd.f32 %v5031, %v5247
        %v5326 = vadd.f32 %v5032, %v5250
        %v5327 = vadd.f32 %v5033, %v5255
        %v5328 = vadd.f32 %v5034, %v5258
        %v5329 = vadd.f32 %v5035, %v5263
        %v5330 = vadd.f32 %v5036, %v5266
        %v5331 = vadd.f32 %v5037, %v5271
        %v5332 = vadd.f32 %v5038, %v5274
        %v5333 = vadd.f32 %v5039, %v5279
        %v5334 = vadd.f32 %v5040, %v5282
        %v5335 = vadd.f32 %v5041, %v5287
        %v5336 = vadd.f32 %v5042, %v5290
        %v5337 = vadd.f32 %v5043, %v5295
        %v5338 = vadd.f32 %v5044, %v5298
        %v5339 = vadd.f32 %v5045, %v5303
        %v5340 = vadd.f32 %v5046, %v5306
        %v5341 = vadd.f32 %v4817, %v4818
        %v5342 = vadd.f32 %v5341, %v4819
        %v5343 = vadd.f32 %v5342, %v4820
        %v5344 = vadd.f32 %v5343, %v4821
        %v5345 = vadd.f32 %v5344, %v4822
        %v5346 = vadd.f32 %v5345, %v4823
        %v5347 = vadd.f32 %v5346, %v4824
        %v5348 = vadd.f32 %v5347, %v4825
        %v5349 = vadd.f32 %v5348, %v4826
        %v5350 = vadd.f32 %v5349, %v4827
        %v5351 = vadd.f32 %v5350, %v4828
        %v5352 = vadd.f32 %v5351, %v4829
        %v5353 = vadd.f32 %v5352, %v4830
        %v5354 = vadd.f32 %v5353, %v4831
        %v5355 = vadd.f32 %v5354, %v4832
        %v5356 = vadd.f32 %v5355, %v4833
        %v5357 = vadd.f32 %v5356, %v4834
        %v5358 = vadd.f32 %v5357, %v4835
        %v5359 = vadd.f32 %v5358, %v4836
        %v5360 = vadd.f32 %v5359, %v4837
        %v5361 = vadd.f32 %v5360, %v4838
        %v5362 = vadd.f32 %v5361, %v4839
        %v5363 = vadd.f32 %v5362, %v4840
        %v5364 = vadd.f32 %v5363, %v4841
        %v5365 = vadd.f32 %v5364, %v4842
        %v5366 = vadd.f32 %v5365, %v4843
        %v5367 = vadd.f32 %v5366, %v4844
        %v5368 = vadd.f32 %v5367, %v4845
        %v5369 = vadd.f32 %v5368, %v4846
        %v5370 = vadd.f32 %v5369, %v4847
        %v5371 = vadd.f32 %v5370, %v4848
        %v5372 = vrot.slane %v5371, 4
        %v5373 = vadd.f32 %v5371, %v5372
        %v5374 = vrot.slane %v5373, 2
        %v5375 = vadd.f32 %v5373, %v5374
        %v5376 = vrot.slane %v5375, 1
        %v5377 = vadd.f32 %v5375, %v5376
        %v5378 = vadd.f32 %v5309, %v5310
        %v5379 = vadd.f32 %v5378, %v5311
        %v5380 = vadd.f32 %v5379, %v5312
        %v5381 = vadd.f32 %v5380, %v5313
        %v5382 = vadd.f32 %v5381, %v5314
        %v5383 = vadd.f32 %v5382, %v5315
        %v5384 = vadd.f32 %v5383, %v5316
        %v5385 = vadd.f32 %v5384, %v5317
        %v5386 = vadd.f32 %v5385, %v5318
        %v5387 = vadd.f32 %v5386, %v5319
        %v5388 = vadd.f32 %v5387, %v5320
        %v5389 = vadd.f32 %v5388, %v5321
        %v5390 = vadd.f32 %v5389, %v5322
        %v5391 = vadd.f32 %v5390, %v5323
        %v5392 = vadd.f32 %v5391, %v5324
        %v5393 = vadd.f32 %v5392, %v5325
        %v5394 = vadd.f32 %v5393, %v5326
        %v5395 = vadd.f32 %v5394, %v5327
        %v5396 = vadd.f32 %v5395, %v5328
        %v5397 = vadd.f32 %v5396, %v5329
        %v5398 = vadd.f32 %v5397, %v5330
        %v5399 = vadd.f32 %v5398, %v5331
        %v5400 = vadd.f32 %v5399, %v5332
        %v5401 = vadd.f32 %v5400, %v5333
        %v5402 = vadd.f32 %v5401, %v5334
        %v5403 = vadd.f32 %v5402, %v5335
        %v5404 = vadd.f32 %v5403, %v5336
        %v5405 = vadd.f32 %v5404, %v5337
        %v5406 = vadd.f32 %v5405, %v5338
        %v5407 = vadd.f32 %v5406, %v5339
        %v5408 = vadd.f32 %v5407, %v5340
        %v5409 = vrot.slane %v5408, 4
        %v5410 = vadd.f32 %v5408, %v5409
        %v5411 = vrot.slane %v5410, 2
        %v5412 = vadd.f32 %v5410, %v5411
        %v5413 = vrot.slane %v5412, 1
        %v5414 = vadd.f32 %v5412, %v5413
        %v5415 = vadd.f32 %v5377, %v5414
        %v5416 = vmul.f32 %v4817, %v4817
        %v5417 = vmul.f32 %v4818, %v4818
        %v5418 = vmul.f32 %v4819, %v4819
        %v5419 = vmul.f32 %v4820, %v4820
        %v5420 = vmul.f32 %v4821, %v4821
        %v5421 = vmul.f32 %v4822, %v4822
        %v5422 = vmul.f32 %v4823, %v4823
        %v5423 = vmul.f32 %v4824, %v4824
        %v5424 = vmul.f32 %v4825, %v4825
        %v5425 = vmul.f32 %v4826, %v4826
        %v5426 = vmul.f32 %v4827, %v4827
        %v5427 = vmul.f32 %v4828, %v4828
        %v5428 = vmul.f32 %v4829, %v4829
        %v5429 = vmul.f32 %v4830, %v4830
        %v5430 = vmul.f32 %v4831, %v4831
        %v5431 = vmul.f32 %v4832, %v4832
        %v5432 = vmul.f32 %v4833, %v4833
        %v5433 = vmul.f32 %v4834, %v4834
        %v5434 = vmul.f32 %v4835, %v4835
        %v5435 = vmul.f32 %v4836, %v4836
        %v5436 = vmul.f32 %v4837, %v4837
        %v5437 = vmul.f32 %v4838, %v4838
        %v5438 = vmul.f32 %v4839, %v4839
        %v5439 = vmul.f32 %v4840, %v4840
        %v5440 = vmul.f32 %v4841, %v4841
        %v5441 = vmul.f32 %v4842, %v4842
        %v5442 = vmul.f32 %v4843, %v4843
        %v5443 = vmul.f32 %v4844, %v4844
        %v5444 = vmul.f32 %v4845, %v4845
        %v5445 = vmul.f32 %v4846, %v4846
        %v5446 = vmul.f32 %v4847, %v4847
        %v5447 = vmul.f32 %v4848, %v4848
        %v5448 = vadd.f32 %v5416, %v5417
        %v5449 = vadd.f32 %v5448, %v5418
        %v5450 = vadd.f32 %v5449, %v5419
        %v5451 = vadd.f32 %v5450, %v5420
        %v5452 = vadd.f32 %v5451, %v5421
        %v5453 = vadd.f32 %v5452, %v5422
        %v5454 = vadd.f32 %v5453, %v5423
        %v5455 = vadd.f32 %v5454, %v5424
        %v5456 = vadd.f32 %v5455, %v5425
        %v5457 = vadd.f32 %v5456, %v5426
        %v5458 = vadd.f32 %v5457, %v5427
        %v5459 = vadd.f32 %v5458, %v5428
        %v5460 = vadd.f32 %v5459, %v5429
        %v5461 = vadd.f32 %v5460, %v5430
        %v5462 = vadd.f32 %v5461, %v5431
        %v5463 = vadd.f32 %v5462, %v5432
        %v5464 = vadd.f32 %v5463, %v5433
        %v5465 = vadd.f32 %v5464, %v5434
        %v5466 = vadd.f32 %v5465, %v5435
        %v5467 = vadd.f32 %v5466, %v5436
        %v5468 = vadd.f32 %v5467, %v5437
        %v5469 = vadd.f32 %v5468, %v5438
        %v5470 = vadd.f32 %v5469, %v5439
        %v5471 = vadd.f32 %v5470, %v5440
        %v5472 = vadd.f32 %v5471, %v5441
        %v5473 = vadd.f32 %v5472, %v5442
        %v5474 = vadd.f32 %v5473, %v5443
        %v5475 = vadd.f32 %v5474, %v5444
        %v5476 = vadd.f32 %v5475, %v5445
        %v5477 = vadd.f32 %v5476, %v5446
        %v5478 = vadd.f32 %v5477, %v5447
        %v5479 = vrot.slane %v5478, 4
        %v5480 = vadd.f32 %v5478, %v5479
        %v5481 = vrot.slane %v5480, 2
        %v5482 = vadd.f32 %v5480, %v5481
        %v5483 = vrot.slane %v5482, 1
        %v5484 = vadd.f32 %v5482, %v5483
        %v5485 = vmul.f32 %v5309, %v5309
        %v5486 = vmul.f32 %v5310, %v5310
        %v5487 = vmul.f32 %v5311, %v5311
        %v5488 = vmul.f32 %v5312, %v5312
        %v5489 = vmul.f32 %v5313, %v5313
        %v5490 = vmul.f32 %v5314, %v5314
        %v5491 = vmul.f32 %v5315, %v5315
        %v5492 = vmul.f32 %v5316, %v5316
        %v5493 = vmul.f32 %v5317, %v5317
        %v5494 = vmul.f32 %v5318, %v5318
        %v5495 = vmul.f32 %v5319, %v5319
        %v5496 = vmul.f32 %v5320, %v5320
        %v5497 = vmul.f32 %v5321, %v5321
        %v5498 = vmul.f32 %v5322, %v5322
        %v5499 = vmul.f32 %v5323, %v5323
        %v5500 = vmul.f32 %v5324, %v5324
        %v5501 = vmul.f32 %v5325, %v5325
        %v5502 = vmul.f32 %v5326, %v5326
        %v5503 = vmul.f32 %v5327, %v5327
        %v5504 = vmul.f32 %v5328, %v5328
        %v5505 = vmul.f32 %v5329, %v5329
        %v5506 = vmul.f32 %v5330, %v5330
        %v5507 = vmul.f32 %v5331, %v5331
        %v5508 = vmul.f32 %v5332, %v5332
        %v5509 = vmul.f32 %v5333, %v5333
        %v5510 = vmul.f32 %v5334, %v5334
        %v5511 = vmul.f32 %v5335, %v5335
        %v5512 = vmul.f32 %v5336, %v5336
        %v5513 = vmul.f32 %v5337, %v5337
        %v5514 = vmul.f32 %v5338, %v5338
        %v5515 = vmul.f32 %v5339, %v5339
        %v5516 = vmul.f32 %v5340, %v5340
        %v5517 = vadd.f32 %v5485, %v5486
        %v5518 = vadd.f32 %v5517, %v5487
        %v5519 = vadd.f32 %v5518, %v5488
        %v5520 = vadd.f32 %v5519, %v5489
        %v5521 = vadd.f32 %v5520, %v5490
        %v5522 = vadd.f32 %v5521, %v5491
        %v5523 = vadd.f32 %v5522, %v5492
        %v5524 = vadd.f32 %v5523, %v5493
        %v5525 = vadd.f32 %v5524, %v5494
        %v5526 = vadd.f32 %v5525, %v5495
        %v5527 = vadd.f32 %v5526, %v5496
        %v5528 = vadd.f32 %v5527, %v5497
        %v5529 = vadd.f32 %v5528, %v5498
        %v5530 = vadd.f32 %v5529, %v5499
        %v5531 = vadd.f32 %v5530, %v5500
        %v5532 = vadd.f32 %v5531, %v5501
        %v5533 = vadd.f32 %v5532, %v5502
        %v5534 = vadd.f32 %v5533, %v5503
        %v5535 = vadd.f32 %v5534, %v5504
        %v5536 = vadd.f32 %v5535, %v5505
        %v5537 = vadd.f32 %v5536, %v5506
        %v5538 = vadd.f32 %v5537, %v5507
        %v5539 = vadd.f32 %v5538, %v5508
        %v5540 = vadd.f32 %v5539, %v5509
        %v5541 = vadd.f32 %v5540, %v5510
        %v5542 = vadd.f32 %v5541, %v5511
        %v5543 = vadd.f32 %v5542, %v5512
        %v5544 = vadd.f32 %v5543, %v5513
        %v5545 = vadd.f32 %v5544, %v5514
        %v5546 = vadd.f32 %v5545, %v5515
        %v5547 = vadd.f32 %v5546, %v5516
        %v5548 = vrot.slane %v5547, 4
        %v5549 = vadd.f32 %v5547, %v5548
        %v5550 = vrot.slane %v5549, 2
        %v5551 = vadd.f32 %v5549, %v5550
        %v5552 = vrot.slane %v5551, 1
        %v5553 = vadd.f32 %v5551, %v5552
        %v5554 = vadd.f32 %v5484, %v5553
        %5555 = vst [vmem:[%s202] sm:$0x1] %v5415
        %5556 = vst [vmem:[%s202 + $0x1] sm:$0x1] %v5554
        %5557 = vst [vmem:[%s187] sm:$0xff] %v4817
        %5558 = vst [vmem:[%s187 + $0x8] sm:$0xff] %v4818
        %5559 = vst [vmem:[%s187 + $0x10] sm:$0xff] %v4819
        %5560 = vst [vmem:[%s187 + $0x18] sm:$0xff] %v4820
        %5561 = vst [vmem:[%s187 + $0x20] sm:$0xff] %v4821
        %5562 = vst [vmem:[%s187 + $0x28] sm:$0xff] %v4822
        %5563 = vst [vmem:[%s187 + $0x30] sm:$0xff] %v4823
        %5564 = vst [vmem:[%s187 + $0x38] sm:$0xff] %v4824
        %5565 = vst [vmem:[%s187 + $0x40] sm:$0xff] %v4825
        %5566 = vst [vmem:[%s187 + $0x48] sm:$0xff] %v4826
        %5567 = vst [vmem:[%s187 + $0x50] sm:$0xff] %v4827
        %5568 = vst [vmem:[%s187 + $0x58] sm:$0xff] %v4828
        %5569 = vst [vmem:[%s187 + $0x60] sm:$0xff] %v4829
        %5570 = vst [vmem:[%s187 + $0x68] sm:$0xff] %v4830
        %5571 = vst [vmem:[%s187 + $0x70] sm:$0xff] %v4831
        %5572 = vst [vmem:[%s187 + $0x78] sm:$0xff] %v4832
        %5573 = vst [vmem:[%s187 + $0x80] sm:$0xff] %v4833
        %5574 = vst [vmem:[%s187 + $0x88] sm:$0xff] %v4834
        %5575 = vst [vmem:[%s187 + $0x90] sm:$0xff] %v4835
        %5576 = vst [vmem:[%s187 + $0x98] sm:$0xff] %v4836
        %5577 = vst [vmem:[%s187 + $0xa0] sm:$0xff] %v4837
        %5578 = vst [vmem:[%s187 + $0xa8] sm:$0xff] %v4838
        %5579 = vst [vmem:[%s187 + $0xb0] sm:$0xff] %v4839
        %5580 = vst [vmem:[%s187 + $0xb8] sm:$0xff] %v4840
        %5581 = vst [vmem:[%s187 + $0xc0] sm:$0xff] %v4841
        %5582 = vst [vmem:[%s187 + $0xc8] sm:$0xff] %v4842
        %5583 = vst [vmem:[%s187 + $0xd0] sm:$0xff] %v4843
        %5584 = vst [vmem:[%s187 + $0xd8] sm:$0xff] %v4844
        %5585 = vst [vmem:[%s187 + $0xe0] sm:$0xff] %v4845
        %5586 = vst [vmem:[%s187 + $0xe8] sm:$0xff] %v4846
        %5587 = vst [vmem:[%s187 + $0xf0] sm:$0xff] %v4847
        %5588 = vst [vmem:[%s187 + $0xf8] sm:$0xff] %v4848
        %s5589 = scalar_lea.vmem %s187, 256 [#allocation2]
        %5590 = vst [vmem:[%s5589] sm:$0xff] %v5309
        %5591 = vst [vmem:[%s5589 + $0x8] sm:$0xff] %v5310
        %5592 = vst [vmem:[%s5589 + $0x10] sm:$0xff] %v5311
        %5593 = vst [vmem:[%s5589 + $0x18] sm:$0xff] %v5312
        %5594 = vst [vmem:[%s5589 + $0x20] sm:$0xff] %v5313
        %5595 = vst [vmem:[%s5589 + $0x28] sm:$0xff] %v5314
        %5596 = vst [vmem:[%s5589 + $0x30] sm:$0xff] %v5315
        %5597 = vst [vmem:[%s5589 + $0x38] sm:$0xff] %v5316
        %5598 = vst [vmem:[%s5589 + $0x40] sm:$0xff] %v5317
        %5599 = vst [vmem:[%s5589 + $0x48] sm:$0xff] %v5318
        %5600 = vst [vmem:[%s5589 + $0x50] sm:$0xff] %v5319
        %5601 = vst [vmem:[%s5589 + $0x58] sm:$0xff] %v5320
        %5602 = vst [vmem:[%s5589 + $0x60] sm:$0xff] %v5321
        %5603 = vst [vmem:[%s5589 + $0x68] sm:$0xff] %v5322
        %5604 = vst [vmem:[%s5589 + $0x70] sm:$0xff] %v5323
        %5605 = vst [vmem:[%s5589 + $0x78] sm:$0xff] %v5324
        %5606 = vst [vmem:[%s5589 + $0x80] sm:$0xff] %v5325
        %5607 = vst [vmem:[%s5589 + $0x88] sm:$0xff] %v5326
        %5608 = vst [vmem:[%s5589 + $0x90] sm:$0xff] %v5327
        %5609 = vst [vmem:[%s5589 + $0x98] sm:$0xff] %v5328
        %5610 = vst [vmem:[%s5589 + $0xa0] sm:$0xff] %v5329
        %5611 = vst [vmem:[%s5589 + $0xa8] sm:$0xff] %v5330
        %5612 = vst [vmem:[%s5589 + $0xb0] sm:$0xff] %v5331
        %5613 = vst [vmem:[%s5589 + $0xb8] sm:$0xff] %v5332
        %5614 = vst [vmem:[%s5589 + $0xc0] sm:$0xff] %v5333
        %5615 = vst [vmem:[%s5589 + $0xc8] sm:$0xff] %v5334
        %5616 = vst [vmem:[%s5589 + $0xd0] sm:$0xff] %v5335
        %5617 = vst [vmem:[%s5589 + $0xd8] sm:$0xff] %v5336
        %5618 = vst [vmem:[%s5589 + $0xe0] sm:$0xff] %v5337
        %5619 = vst [vmem:[%s5589 + $0xe8] sm:$0xff] %v5338
        %5620 = vst [vmem:[%s5589 + $0xf0] sm:$0xff] %v5339
        %5621 = vst [vmem:[%s5589 + $0xf8] sm:$0xff] %v5340
        %s5622 = sand.u32 %s92, 1
        %s5623 = sand.u32 %s92, 1
        %s5624 = smul.addr %s5623, 512
        %s5625 = scalar_lea.vmem [#allocation2], %s5624
        %p5626 = scmp.lt.s32.totalorder %s16, 1
        %s5627 = scalar_select %p5626, %s16, 1
        %s5628 = smul.addr %s5627, 2
        %s5629 = scalar_lea.vmem %s4, %s5628
        // Predicated region
        $region33: #{up_conv_pallas.2} parent=31 // pred_check
          %p5630 = pneg %p102
        $region34: #{up_conv_pallas.2} parent=31 // pred_check_branch
          %5632 = sbr.rel (%p5630) target = $region36
        $region35: #{up_conv_pallas.2} parent=31 // pred_region
          %s5633 = smul.addr %s16, 32
          %s5634 = smul.addr %s5633, 8
          %s5635 = scalar_lea.vmem %s3, %s5634
          // Predicated region
          $region37: #{up_conv_pallas.2} parent=35 // pred_check
            _
          $region38: #{up_conv_pallas.2} parent=35 // pred_check_branch
            %5637 = sbr.rel (0) target = $region40
          $region39: #{up_conv_pallas.2} parent=35 // pred_region
            // Predicated region
            $region41: #{up_conv_pallas.2} parent=39 // pred_check
              _
            $region42: #{up_conv_pallas.2} parent=39 // pred_check_branch
              %5639 = sbr.rel (0) target = $region44
            $region43: #{up_conv_pallas.2} parent=39 // pred_region
              // Predicated region
              $region56: #{up_conv_pallas.2} parent=43 // pred_check
                _
              $region57: #{up_conv_pallas.2} parent=43 // pred_check_branch
                %5780 = sbr.rel (0) target = $region59
              $region58: #{up_conv_pallas.2} parent=43 // pred_region
                loop: start=0, step=1, limit=1
                $region60: #{up_conv_pallas.2} parent=58 // loop_pre_header
                  _
                $region61: #{up_conv_pallas.2} parent=58 // loop_header
                  %s5782 = sphi 0, %s5786
                  %p5783 = scmp.ge.s32.totalorder %s5782, 1
                  %s5787 = sphi %s5625, %s5625
                  %s5788 = sphi %s5635, %s5635
                $region62: #{up_conv_pallas.2} parent=58 // loop_header_branch
                  %5785 = sbr.rel (%p5783) target = $region66
                $region63: #{up_conv_pallas.2} parent=58 // loop_body
                  %v5789 = vld [vmem:[%s5787] sm:$0xff]
                  %5790 = vst [vmem:[%s5788] sm:$0xff] %v5789
                  %v5791 = vld [vmem:[%s5787 + $0x8] sm:$0xff]
                  %5792 = vst [vmem:[%s5788 + $0x8] sm:$0xff] %v5791
                  %v5793 = vld [vmem:[%s5787 + $0x10] sm:$0xff]
                  %5794 = vst [vmem:[%s5788 + $0x10] sm:$0xff] %v5793
                  %v5795 = vld [vmem:[%s5787 + $0x18] sm:$0xff]
                  %5796 = vst [vmem:[%s5788 + $0x18] sm:$0xff] %v5795
                  %v5797 = vld [vmem:[%s5787 + $0x20] sm:$0xff]
                  %5798 = vst [vmem:[%s5788 + $0x20] sm:$0xff] %v5797
                  %v5799 = vld [vmem:[%s5787 + $0x28] sm:$0xff]
                  %5800 = vst [vmem:[%s5788 + $0x28] sm:$0xff] %v5799
                  %v5801 = vld [vmem:[%s5787 + $0x30] sm:$0xff]
                  %5802 = vst [vmem:[%s5788 + $0x30] sm:$0xff] %v5801
                  %v5803 = vld [vmem:[%s5787 + $0x38] sm:$0xff]
                  %5804 = vst [vmem:[%s5788 + $0x38] sm:$0xff] %v5803
                  %v5805 = vld [vmem:[%s5787 + $0x40] sm:$0xff]
                  %5806 = vst [vmem:[%s5788 + $0x40] sm:$0xff] %v5805
                  %v5807 = vld [vmem:[%s5787 + $0x48] sm:$0xff]
                  %5808 = vst [vmem:[%s5788 + $0x48] sm:$0xff] %v5807
                  %v5809 = vld [vmem:[%s5787 + $0x50] sm:$0xff]
                  %5810 = vst [vmem:[%s5788 + $0x50] sm:$0xff] %v5809
                  %v5811 = vld [vmem:[%s5787 + $0x58] sm:$0xff]
                  %5812 = vst [vmem:[%s5788 + $0x58] sm:$0xff] %v5811
                  %v5813 = vld [vmem:[%s5787 + $0x60] sm:$0xff]
                  %5814 = vst [vmem:[%s5788 + $0x60] sm:$0xff] %v5813
                  %v5815 = vld [vmem:[%s5787 + $0x68] sm:$0xff]
                  %5816 = vst [vmem:[%s5788 + $0x68] sm:$0xff] %v5815
                  %v5817 = vld [vmem:[%s5787 + $0x70] sm:$0xff]
                  %5818 = vst [vmem:[%s5788 + $0x70] sm:$0xff] %v5817
                  %v5819 = vld [vmem:[%s5787 + $0x78] sm:$0xff]
                  %5820 = vst [vmem:[%s5788 + $0x78] sm:$0xff] %v5819
                  %v5821 = vld [vmem:[%s5787 + $0x80] sm:$0xff]
                  %5822 = vst [vmem:[%s5788 + $0x80] sm:$0xff] %v5821
                  %v5823 = vld [vmem:[%s5787 + $0x88] sm:$0xff]
                  %5824 = vst [vmem:[%s5788 + $0x88] sm:$0xff] %v5823
                  %v5825 = vld [vmem:[%s5787 + $0x90] sm:$0xff]
                  %5826 = vst [vmem:[%s5788 + $0x90] sm:$0xff] %v5825
                  %v5827 = vld [vmem:[%s5787 + $0x98] sm:$0xff]
                  %5828 = vst [vmem:[%s5788 + $0x98] sm:$0xff] %v5827
                  %v5829 = vld [vmem:[%s5787 + $0xa0] sm:$0xff]
                  %5830 = vst [vmem:[%s5788 + $0xa0] sm:$0xff] %v5829
                  %v5831 = vld [vmem:[%s5787 + $0xa8] sm:$0xff]
                  %5832 = vst [vmem:[%s5788 + $0xa8] sm:$0xff] %v5831
                  %v5833 = vld [vmem:[%s5787 + $0xb0] sm:$0xff]
                  %5834 = vst [vmem:[%s5788 + $0xb0] sm:$0xff] %v5833
                  %v5835 = vld [vmem:[%s5787 + $0xb8] sm:$0xff]
                  %5836 = vst [vmem:[%s5788 + $0xb8] sm:$0xff] %v5835
                  %v5837 = vld [vmem:[%s5787 + $0xc0] sm:$0xff]
                  %5838 = vst [vmem:[%s5788 + $0xc0] sm:$0xff] %v5837
                  %v5839 = vld [vmem:[%s5787 + $0xc8] sm:$0xff]
                  %5840 = vst [vmem:[%s5788 + $0xc8] sm:$0xff] %v5839
                  %v5841 = vld [vmem:[%s5787 + $0xd0] sm:$0xff]
                  %5842 = vst [vmem:[%s5788 + $0xd0] sm:$0xff] %v5841
                  %v5843 = vld [vmem:[%s5787 + $0xd8] sm:$0xff]
                  %5844 = vst [vmem:[%s5788 + $0xd8] sm:$0xff] %v5843
                  %v5845 = vld [vmem:[%s5787 + $0xe0] sm:$0xff]
                  %5846 = vst [vmem:[%s5788 + $0xe0] sm:$0xff] %v5845
                  %v5847 = vld [vmem:[%s5787 + $0xe8] sm:$0xff]
                  %5848 = vst [vmem:[%s5788 + $0xe8] sm:$0xff] %v5847
                  %v5849 = vld [vmem:[%s5787 + $0xf0] sm:$0xff]
                  %5850 = vst [vmem:[%s5788 + $0xf0] sm:$0xff] %v5849
                  %v5851 = vld [vmem:[%s5787 + $0xf8] sm:$0xff]
                  %5852 = vst [vmem:[%s5788 + $0xf8] sm:$0xff] %v5851
                  %v5853 = vld [vmem:[%s5787 + $0x100] sm:$0xff]
                  %5854 = vst [vmem:[%s5788 + $0x200] sm:$0xff] %v5853
                  %v5855 = vld [vmem:[%s5787 + $0x108] sm:$0xff]
                  %5856 = vst [vmem:[%s5788 + $0x208] sm:$0xff] %v5855
                  %v5857 = vld [vmem:[%s5787 + $0x110] sm:$0xff]
                  %5858 = vst [vmem:[%s5788 + $0x210] sm:$0xff] %v5857
                  %v5859 = vld [vmem:[%s5787 + $0x118] sm:$0xff]
                  %5860 = vst [vmem:[%s5788 + $0x218] sm:$0xff] %v5859
                  %v5861 = vld [vmem:[%s5787 + $0x120] sm:$0xff]
                  %5862 = vst [vmem:[%s5788 + $0x220] sm:$0xff] %v5861
                  %v5863 = vld [vmem:[%s5787 + $0x128] sm:$0xff]
                  %5864 = vst [vmem:[%s5788 + $0x228] sm:$0xff] %v5863
                  %v5865 = vld [vmem:[%s5787 + $0x130] sm:$0xff]
                  %5866 = vst [vmem:[%s5788 + $0x230] sm:$0xff] %v5865
                  %v5867 = vld [vmem:[%s5787 + $0x138] sm:$0xff]
                  %5868 = vst [vmem:[%s5788 + $0x238] sm:$0xff] %v5867
                  %v5869 = vld [vmem:[%s5787 + $0x140] sm:$0xff]
                  %5870 = vst [vmem:[%s5788 + $0x240] sm:$0xff] %v5869
                  %v5871 = vld [vmem:[%s5787 + $0x148] sm:$0xff]
                  %5872 = vst [vmem:[%s5788 + $0x248] sm:$0xff] %v5871
                  %v5873 = vld [vmem:[%s5787 + $0x150] sm:$0xff]
                  %5874 = vst [vmem:[%s5788 + $0x250] sm:$0xff] %v5873
                  %v5875 = vld [vmem:[%s5787 + $0x158] sm:$0xff]
                  %5876 = vst [vmem:[%s5788 + $0x258] sm:$0xff] %v5875
                  %v5877 = vld [vmem:[%s5787 + $0x160] sm:$0xff]
                  %5878 = vst [vmem:[%s5788 + $0x260] sm:$0xff] %v5877
                  %v5879 = vld [vmem:[%s5787 + $0x168] sm:$0xff]
                  %5880 = vst [vmem:[%s5788 + $0x268] sm:$0xff] %v5879
                  %v5881 = vld [vmem:[%s5787 + $0x170] sm:$0xff]
                  %5882 = vst [vmem:[%s5788 + $0x270] sm:$0xff] %v5881
                  %v5883 = vld [vmem:[%s5787 + $0x178] sm:$0xff]
                  %5884 = vst [vmem:[%s5788 + $0x278] sm:$0xff] %v5883
                  %v5885 = vld [vmem:[%s5787 + $0x180] sm:$0xff]
                  %5886 = vst [vmem:[%s5788 + $0x280] sm:$0xff] %v5885
                  %v5887 = vld [vmem:[%s5787 + $0x188] sm:$0xff]
                  %5888 = vst [vmem:[%s5788 + $0x288] sm:$0xff] %v5887
                  %v5889 = vld [vmem:[%s5787 + $0x190] sm:$0xff]
                  %5890 = vst [vmem:[%s5788 + $0x290] sm:$0xff] %v5889
                  %v5891 = vld [vmem:[%s5787 + $0x198] sm:$0xff]
                  %5892 = vst [vmem:[%s5788 + $0x298] sm:$0xff] %v5891
                  %v5893 = vld [vmem:[%s5787 + $0x1a0] sm:$0xff]
                  %5894 = vst [vmem:[%s5788 + $0x2a0] sm:$0xff] %v5893
                  %v5895 = vld [vmem:[%s5787 + $0x1a8] sm:$0xff]
                  %5896 = vst [vmem:[%s5788 + $0x2a8] sm:$0xff] %v5895
                  %v5897 = vld [vmem:[%s5787 + $0x1b0] sm:$0xff]
                  %5898 = vst [vmem:[%s5788 + $0x2b0] sm:$0xff] %v5897
                  %v5899 = vld [vmem:[%s5787 + $0x1b8] sm:$0xff]
                  %5900 = vst [vmem:[%s5788 + $0x2b8] sm:$0xff] %v5899
                  %v5901 = vld [vmem:[%s5787 + $0x1c0] sm:$0xff]
                  %5902 = vst [vmem:[%s5788 + $0x2c0] sm:$0xff] %v5901
                  %v5903 = vld [vmem:[%s5787 + $0x1c8] sm:$0xff]
                  %5904 = vst [vmem:[%s5788 + $0x2c8] sm:$0xff] %v5903
                  %v5905 = vld [vmem:[%s5787 + $0x1d0] sm:$0xff]
                  %5906 = vst [vmem:[%s5788 + $0x2d0] sm:$0xff] %v5905
                  %v5907 = vld [vmem:[%s5787 + $0x1d8] sm:$0xff]
                  %5908 = vst [vmem:[%s5788 + $0x2d8] sm:$0xff] %v5907
                  %v5909 = vld [vmem:[%s5787 + $0x1e0] sm:$0xff]
                  %5910 = vst [vmem:[%s5788 + $0x2e0] sm:$0xff] %v5909
                  %v5911 = vld [vmem:[%s5787 + $0x1e8] sm:$0xff]
                  %5912 = vst [vmem:[%s5788 + $0x2e8] sm:$0xff] %v5911
                  %v5913 = vld [vmem:[%s5787 + $0x1f0] sm:$0xff]
                  %5914 = vst [vmem:[%s5788 + $0x2f0] sm:$0xff] %v5913
                  %v5915 = vld [vmem:[%s5787 + $0x1f8] sm:$0xff]
                  %5916 = vst [vmem:[%s5788 + $0x2f8] sm:$0xff] %v5915
                $region64: #{up_conv_pallas.2} parent=58 // loop_footer
                  %s5786 = sadd.s32 1, %s5782
                $region65: #{up_conv_pallas.2} parent=58 // loop_footer_branch
                  %5781 = sbr.rel target = $region61
                $region66: #{up_conv_pallas.2} parent=58 // loop_exit
                  _
              $region59: #{up_conv_pallas.2} parent=43 // pred_fallthru
                _
              // Predicated region
              $region67: #{up_conv_pallas.2} parent=43 // pred_check
                _
              $region68: #{up_conv_pallas.2} parent=43 // pred_check_branch
                %5918 = sbr.rel target = $region70
              $region69: #{up_conv_pallas.2} parent=43 // pred_region
                _
              $region70: #{up_conv_pallas.2} parent=43 // pred_fallthru
                _
            $region44: #{up_conv_pallas.2} parent=39 // pred_fallthru
              _
            // Predicated region
            $region45: #{up_conv_pallas.2} parent=39 // pred_check
              _
            $region46: #{up_conv_pallas.2} parent=39 // pred_check_branch
              %5641 = sbr.rel target = $region48
            $region47: #{up_conv_pallas.2} parent=39 // pred_region
              loop: start=0, step=1, limit=1
              $region49: #{up_conv_pallas.2} parent=47 // loop_pre_header
                _
              $region50: #{up_conv_pallas.2} parent=47 // loop_header
                %s5644 = sphi 0, %s5648
                %p5645 = scmp.ge.s32.totalorder %s5644, 1
                %s5649 = sphi %s5625, %s5625
                %s5650 = sphi %s5635, %s5635
              $region51: #{up_conv_pallas.2} parent=47 // loop_header_branch
                %5647 = sbr.rel (%p5645) target = $region55
              $region52: #{up_conv_pallas.2} parent=47 // loop_body
                %v5651 = vld [vmem:[%s5649] sm:$0xff]
                %5652 = vst [vmem:[%s5650] sm:$0xff] %v5651
                %v5653 = vld [vmem:[%s5649 + $0x8] sm:$0xff]
                %5654 = vst [vmem:[%s5650 + $0x8] sm:$0xff] %v5653
                %v5655 = vld [vmem:[%s5649 + $0x10] sm:$0xff]
                %5656 = vst [vmem:[%s5650 + $0x10] sm:$0xff] %v5655
                %v5657 = vld [vmem:[%s5649 + $0x18] sm:$0xff]
                %5658 = vst [vmem:[%s5650 + $0x18] sm:$0xff] %v5657
                %v5659 = vld [vmem:[%s5649 + $0x20] sm:$0xff]
                %5660 = vst [vmem:[%s5650 + $0x20] sm:$0xff] %v5659
                %v5661 = vld [vmem:[%s5649 + $0x28] sm:$0xff]
                %5662 = vst [vmem:[%s5650 + $0x28] sm:$0xff] %v5661
                %v5663 = vld [vmem:[%s5649 + $0x30] sm:$0xff]
                %5664 = vst [vmem:[%s5650 + $0x30] sm:$0xff] %v5663
                %v5665 = vld [vmem:[%s5649 + $0x38] sm:$0xff]
                %5666 = vst [vmem:[%s5650 + $0x38] sm:$0xff] %v5665
                %v5667 = vld [vmem:[%s5649 + $0x40] sm:$0xff]
                %5668 = vst [vmem:[%s5650 + $0x40] sm:$0xff] %v5667
                %v5669 = vld [vmem:[%s5649 + $0x48] sm:$0xff]
                %5670 = vst [vmem:[%s5650 + $0x48] sm:$0xff] %v5669
                %v5671 = vld [vmem:[%s5649 + $0x50] sm:$0xff]
                %5672 = vst [vmem:[%s5650 + $0x50] sm:$0xff] %v5671
                %v5673 = vld [vmem:[%s5649 + $0x58] sm:$0xff]
                %5674 = vst [vmem:[%s5650 + $0x58] sm:$0xff] %v5673
                %v5675 = vld [vmem:[%s5649 + $0x60] sm:$0xff]
                %5676 = vst [vmem:[%s5650 + $0x60] sm:$0xff] %v5675
                %v5677 = vld [vmem:[%s5649 + $0x68] sm:$0xff]
                %5678 = vst [vmem:[%s5650 + $0x68] sm:$0xff] %v5677
                %v5679 = vld [vmem:[%s5649 + $0x70] sm:$0xff]
                %5680 = vst [vmem:[%s5650 + $0x70] sm:$0xff] %v5679
                %v5681 = vld [vmem:[%s5649 + $0x78] sm:$0xff]
                %5682 = vst [vmem:[%s5650 + $0x78] sm:$0xff] %v5681
                %v5683 = vld [vmem:[%s5649 + $0x80] sm:$0xff]
                %5684 = vst [vmem:[%s5650 + $0x80] sm:$0xff] %v5683
                %v5685 = vld [vmem:[%s5649 + $0x88] sm:$0xff]
                %5686 = vst [vmem:[%s5650 + $0x88] sm:$0xff] %v5685
                %v5687 = vld [vmem:[%s5649 + $0x90] sm:$0xff]
                %5688 = vst [vmem:[%s5650 + $0x90] sm:$0xff] %v5687
                %v5689 = vld [vmem:[%s5649 + $0x98] sm:$0xff]
                %5690 = vst [vmem:[%s5650 + $0x98] sm:$0xff] %v5689
                %v5691 = vld [vmem:[%s5649 + $0xa0] sm:$0xff]
                %5692 = vst [vmem:[%s5650 + $0xa0] sm:$0xff] %v5691
                %v5693 = vld [vmem:[%s5649 + $0xa8] sm:$0xff]
                %5694 = vst [vmem:[%s5650 + $0xa8] sm:$0xff] %v5693
                %v5695 = vld [vmem:[%s5649 + $0xb0] sm:$0xff]
                %5696 = vst [vmem:[%s5650 + $0xb0] sm:$0xff] %v5695
                %v5697 = vld [vmem:[%s5649 + $0xb8] sm:$0xff]
                %5698 = vst [vmem:[%s5650 + $0xb8] sm:$0xff] %v5697
                %v5699 = vld [vmem:[%s5649 + $0xc0] sm:$0xff]
                %5700 = vst [vmem:[%s5650 + $0xc0] sm:$0xff] %v5699
                %v5701 = vld [vmem:[%s5649 + $0xc8] sm:$0xff]
                %5702 = vst [vmem:[%s5650 + $0xc8] sm:$0xff] %v5701
                %v5703 = vld [vmem:[%s5649 + $0xd0] sm:$0xff]
                %5704 = vst [vmem:[%s5650 + $0xd0] sm:$0xff] %v5703
                %v5705 = vld [vmem:[%s5649 + $0xd8] sm:$0xff]
                %5706 = vst [vmem:[%s5650 + $0xd8] sm:$0xff] %v5705
                %v5707 = vld [vmem:[%s5649 + $0xe0] sm:$0xff]
                %5708 = vst [vmem:[%s5650 + $0xe0] sm:$0xff] %v5707
                %v5709 = vld [vmem:[%s5649 + $0xe8] sm:$0xff]
                %5710 = vst [vmem:[%s5650 + $0xe8] sm:$0xff] %v5709
                %v5711 = vld [vmem:[%s5649 + $0xf0] sm:$0xff]
                %5712 = vst [vmem:[%s5650 + $0xf0] sm:$0xff] %v5711
                %v5713 = vld [vmem:[%s5649 + $0xf8] sm:$0xff]
                %5714 = vst [vmem:[%s5650 + $0xf8] sm:$0xff] %v5713
                %v5715 = vld [vmem:[%s5649 + $0x100] sm:$0xff]
                %5716 = vst [vmem:[%s5650 + $0x200] sm:$0xff] %v5715
                %v5717 = vld [vmem:[%s5649 + $0x108] sm:$0xff]
                %5718 = vst [vmem:[%s5650 + $0x208] sm:$0xff] %v5717
                %v5719 = vld [vmem:[%s5649 + $0x110] sm:$0xff]
                %5720 = vst [vmem:[%s5650 + $0x210] sm:$0xff] %v5719
                %v5721 = vld [vmem:[%s5649 + $0x118] sm:$0xff]
                %5722 = vst [vmem:[%s5650 + $0x218] sm:$0xff] %v5721
                %v5723 = vld [vmem:[%s5649 + $0x120] sm:$0xff]
                %5724 = vst [vmem:[%s5650 + $0x220] sm:$0xff] %v5723
                %v5725 = vld [vmem:[%s5649 + $0x128] sm:$0xff]
                %5726 = vst [vmem:[%s5650 + $0x228] sm:$0xff] %v5725
                %v5727 = vld [vmem:[%s5649 + $0x130] sm:$0xff]
                %5728 = vst [vmem:[%s5650 + $0x230] sm:$0xff] %v5727
                %v5729 = vld [vmem:[%s5649 + $0x138] sm:$0xff]
                %5730 = vst [vmem:[%s5650 + $0x238] sm:$0xff] %v5729
                %v5731 = vld [vmem:[%s5649 + $0x140] sm:$0xff]
                %5732 = vst [vmem:[%s5650 + $0x240] sm:$0xff] %v5731
                %v5733 = vld [vmem:[%s5649 + $0x148] sm:$0xff]
                %5734 = vst [vmem:[%s5650 + $0x248] sm:$0xff] %v5733
                %v5735 = vld [vmem:[%s5649 + $0x150] sm:$0xff]
                %5736 = vst [vmem:[%s5650 + $0x250] sm:$0xff] %v5735
                %v5737 = vld [vmem:[%s5649 + $0x158] sm:$0xff]
                %5738 = vst [vmem:[%s5650 + $0x258] sm:$0xff] %v5737
                %v5739 = vld [vmem:[%s5649 + $0x160] sm:$0xff]
                %5740 = vst [vmem:[%s5650 + $0x260] sm:$0xff] %v5739
                %v5741 = vld [vmem:[%s5649 + $0x168] sm:$0xff]
                %5742 = vst [vmem:[%s5650 + $0x268] sm:$0xff] %v5741
                %v5743 = vld [vmem:[%s5649 + $0x170] sm:$0xff]
                %5744 = vst [vmem:[%s5650 + $0x270] sm:$0xff] %v5743
                %v5745 = vld [vmem:[%s5649 + $0x178] sm:$0xff]
                %5746 = vst [vmem:[%s5650 + $0x278] sm:$0xff] %v5745
                %v5747 = vld [vmem:[%s5649 + $0x180] sm:$0xff]
                %5748 = vst [vmem:[%s5650 + $0x280] sm:$0xff] %v5747
                %v5749 = vld [vmem:[%s5649 + $0x188] sm:$0xff]
                %5750 = vst [vmem:[%s5650 + $0x288] sm:$0xff] %v5749
                %v5751 = vld [vmem:[%s5649 + $0x190] sm:$0xff]
                %5752 = vst [vmem:[%s5650 + $0x290] sm:$0xff] %v5751
                %v5753 = vld [vmem:[%s5649 + $0x198] sm:$0xff]
                %5754 = vst [vmem:[%s5650 + $0x298] sm:$0xff] %v5753
                %v5755 = vld [vmem:[%s5649 + $0x1a0] sm:$0xff]
                %5756 = vst [vmem:[%s5650 + $0x2a0] sm:$0xff] %v5755
                %v5757 = vld [vmem:[%s5649 + $0x1a8] sm:$0xff]
                %5758 = vst [vmem:[%s5650 + $0x2a8] sm:$0xff] %v5757
                %v5759 = vld [vmem:[%s5649 + $0x1b0] sm:$0xff]
                %5760 = vst [vmem:[%s5650 + $0x2b0] sm:$0xff] %v5759
                %v5761 = vld [vmem:[%s5649 + $0x1b8] sm:$0xff]
                %5762 = vst [vmem:[%s5650 + $0x2b8] sm:$0xff] %v5761
                %v5763 = vld [vmem:[%s5649 + $0x1c0] sm:$0xff]
                %5764 = vst [vmem:[%s5650 + $0x2c0] sm:$0xff] %v5763
                %v5765 = vld [vmem:[%s5649 + $0x1c8] sm:$0xff]
                %5766 = vst [vmem:[%s5650 + $0x2c8] sm:$0xff] %v5765
                %v5767 = vld [vmem:[%s5649 + $0x1d0] sm:$0xff]
                %5768 = vst [vmem:[%s5650 + $0x2d0] sm:$0xff] %v5767
                %v5769 = vld [vmem:[%s5649 + $0x1d8] sm:$0xff]
                %5770 = vst [vmem:[%s5650 + $0x2d8] sm:$0xff] %v5769
                %v5771 = vld [vmem:[%s5649 + $0x1e0] sm:$0xff]
                %5772 = vst [vmem:[%s5650 + $0x2e0] sm:$0xff] %v5771
                %v5773 = vld [vmem:[%s5649 + $0x1e8] sm:$0xff]
                %5774 = vst [vmem:[%s5650 + $0x2e8] sm:$0xff] %v5773
                %v5775 = vld [vmem:[%s5649 + $0x1f0] sm:$0xff]
                %5776 = vst [vmem:[%s5650 + $0x2f0] sm:$0xff] %v5775
                %v5777 = vld [vmem:[%s5649 + $0x1f8] sm:$0xff]
                %5778 = vst [vmem:[%s5650 + $0x2f8] sm:$0xff] %v5777
              $region53: #{up_conv_pallas.2} parent=47 // loop_footer
                %s5648 = sadd.s32 1, %s5644
              $region54: #{up_conv_pallas.2} parent=47 // loop_footer_branch
                %5643 = sbr.rel target = $region50
              $region55: #{up_conv_pallas.2} parent=47 // loop_exit
                _
            $region48: #{up_conv_pallas.2} parent=39 // pred_fallthru
              _
          $region40: #{up_conv_pallas.2} parent=35 // pred_fallthru
            _
          %5919 = vnop
        $region36: #{up_conv_pallas.2} parent=31 // pred_fallthru
          _
        // Predicated region
        $region71: #{up_conv_pallas.2} parent=31 // pred_check
          %p5920 = pneg %p128
        $region72: #{up_conv_pallas.2} parent=31 // pred_check_branch
          %5922 = sbr.rel (%p5920) target = $region74
        $region73: #{up_conv_pallas.2} parent=31 // pred_region
          _
        $region74: #{up_conv_pallas.2} parent=31 // pred_fallthru
          _
      $region32: #{up_conv_pallas.2} parent=5 // pred_fallthru
        _
      %p5923 = scmp.le.s32.totalorder 2, %s11
      // Predicated region
      $region75: #{up_conv_pallas.2} parent=5 // pred_check
        %p5924 = pneg %p5923
      $region76: #{up_conv_pallas.2} parent=5 // pred_check_branch
        %5926 = sbr.rel (%p5924) target = $region78
      $region77: #{up_conv_pallas.2} parent=5 // pred_region
        %s5927 = ssub.s32 %s11, 2
        // Predicated region
        $region79: #{up_conv_pallas.2} parent=77 // pred_check
          %p5928 = pneg %p108
        $region80: #{up_conv_pallas.2} parent=77 // pred_check_branch
          %5930 = sbr.rel (%p5928) target = $region82
        $region81: #{up_conv_pallas.2} parent=77 // pred_region
          %s5931 = sand.u32 %s93, 1
          %s5932 = sand.u32 %s93, 1
          %s5933 = smul.addr %s5932, 512
          %s5934 = scalar_lea.vmem [#allocation2], %s5933
        $region82: #{up_conv_pallas.2} parent=77 // pred_fallthru
          _
        // Predicated region
        $region83: #{up_conv_pallas.2} parent=77 // pred_check
          %p5935 = pneg %p134
        $region84: #{up_conv_pallas.2} parent=77 // pred_check_branch
          %5937 = sbr.rel (%p5935) target = $region86
        $region85: #{up_conv_pallas.2} parent=77 // pred_region
          %p5938 = scmp.lt.s32.totalorder %s17, 1
          %s5939 = scalar_select %p5938, %s17, 1
          %s5940 = smul.addr %s5939, 2
          %s5941 = scalar_lea.vmem %s4, %s5940
        $region86: #{up_conv_pallas.2} parent=77 // pred_fallthru
          _
      $region78: #{up_conv_pallas.2} parent=5 // pred_fallthru
        _
    $region6: #{up_conv_pallas.2} parent=1 // loop_footer
      %s15 = sadd.s32 1, %s11
    $region7: #{up_conv_pallas.2} parent=1 // loop_footer_branch
      %10 = sbr.rel target = $region3
    $region8: #{up_conv_pallas.2} parent=1 // loop_exit
      _

</llo_original>
